<compile_context>
chip_gen: v7x
topology: tpu7x:2x2x1
jax: 0.10.0
libtpu: 0.0.40
codegen_flags: <defaults>
</compile_context>

<pallas_src>
import numpy as np

import jax
import jax.numpy as jnp
from jax.experimental import pallas as pl
from jax.experimental.pallas import tpu as pltpu

# ----------------------------- model config ---------------------------------
HID = 32
NODE_IN = 7
EDGE_IN = 5
GLOB_IN = 6
N_HISTORY = 1
SCALE = 10.0

_VMEM = pl.BlockSpec(memory_space=pltpu.MemorySpace.VMEM)


def pad8(n):
    return -(-int(n) // 8) * 8


def pad128(n):
    return -(-int(n) // 128) * 128


# ----------------------------- parameters ------------------------------------
def lin_init(key, out_dim, in_dim):
    """Torch-style Linear init, stored pre-transposed: (wT (in,out), b (1,out))."""
    kw, kb = jax.random.split(key)
    bound = 1.0 / np.sqrt(in_dim)
    w = jax.random.uniform(kw, (out_dim, in_dim), jnp.float32, -bound, bound)
    b = jax.random.uniform(kb, (out_dim,), jnp.float32, -bound, bound)
    return jnp.transpose(w), b.reshape(1, out_dim)


def make_params(key):
    keys = iter(jax.random.split(key, 32))
    hid = HID
    div = 2 + N_HISTORY

    def gn(node_in, edge_in, glob_in):
        return {
            "edge_mlp":   lin_init(next(keys), hid, node_in + edge_in),
            "node_mlp":   lin_init(next(keys), hid, node_in + hid),
            "node_mlp_2": lin_init(next(keys), hid, hid + glob_in),
            "global_mlp": lin_init(next(keys), hid, glob_in + hid),
        }

    return {
        "gn1": gn(NODE_IN, EDGE_IN, GLOB_IN),
        "gn2": gn(hid, hid, hid),
        "actions": {
            "glob_mlp":  lin_init(next(keys), hid, hid + GLOB_IN // div),
            "node_mlp":  lin_init(next(keys), hid, hid + (NODE_IN - 1) // div),
            "edge_mlp2": lin_init(next(keys), hid, 2 * hid),
            "edge_mlp1": lin_init(next(keys), hid, 2 * hid + (EDGE_IN - 1) // div),
            "policy":    lin_init(next(keys), 1, hid),
        },
        "value": {
            "l1": lin_init(next(keys), hid, hid),
            "l2": lin_init(next(keys), 1, hid),
        },
    }


def flatten_weights(params):
    """Flat (name, np.array) list; concat-input weights pre-split along K."""
    div = 2 + N_HISTORY
    names, arrs = [], []

    def add(n, a):
        names.append(n)
        arrs.append(np.asarray(a, np.float32))

    def add_layer(prefix, layer, sizes, parts):
        wt, b = layer
        wt = np.asarray(wt, np.float32)
        off = 0
        for pn, sz in zip(parts, sizes):
            add(prefix + pn, wt[off:off + sz])
            off += sz
        add(prefix + "b", b)

    for key, nin, ein, gin in (("gn1", NODE_IN, EDGE_IN, GLOB_IN),
                               ("gn2", HID, HID, HID)):
        p = params[key]
        pre = key + "_"
        add_layer(pre + "we_",  p["edge_mlp"],   (nin, ein), ("x", "e"))
        add_layer(pre + "wn_",  p["node_mlp"],   (nin, HID), ("x", "e"))
        add_layer(pre + "wn2_", p["node_mlp_2"], (HID, gin), ("a", "g"))
        add_layer(pre + "wg_",  p["global_mlp"], (gin, HID), ("g", "x"))

    a = params["actions"]
    add_layer("wgm_", a["glob_mlp"],  (HID, GLOB_IN // div),            ("g", "a"))
    add_layer("wnm_", a["node_mlp"],  (HID, (NODE_IN - 1) // div),      ("n", "a"))
    add_layer("we1_", a["edge_mlp1"], (HID, (EDGE_IN - 1) // div, HID), ("r", "a", "c"))
    add_layer("we2_", a["edge_mlp2"], (HID, HID),                       ("e", "E"))
    # N == 1 heads stored as (1, HID) rows -> VPU multiply + lane reduce path
    add("wp_w", jnp.transpose(a["policy"][0]))
    add("wp_b", a["policy"][1])
    add_layer("wv1_", params["value"]["l1"], (HID,), ("w",))
    add("wv2_w", jnp.transpose(params["value"]["l2"][0]))
    add("wv2_b", params["value"]["l2"][1])
    return names, arrs


# ----------------------------- topology precompute ---------------------------
def norm_np(arr):
    # mirrors Actions_block.norm (host-side python loop in the torch code too)
    l = [int(v) for v in np.asarray(arr)]
    lnew = []
    for j in range(len(l)):
        if j == 0:
            lnew.append(l[j])
        elif l[j - 1] == l[j]:
            lnew.append(lnew[-1])
        else:
            lnew.append(lnew[-1] + 1)
    return np.array(lnew, dtype=np.int64)


def one_hot_np(idx, num):
    """(len(idx), num) f32 with out[i, idx[i]] = 1  (row gather matrix)."""
    idx = np.asarray(idx, np.int64)
    m = np.zeros((idx.shape[0], num), np.float32)
    if idx.shape[0] > 0:
        m[np.arange(idx.shape[0]), idx] = 1.0
    return m


def scatter_onehot_np(idx, size):
    """(size, len(idx)) f32 with out[idx[i], i] = 1  (scatter_add matrix)."""
    return one_hot_np(idx, size).T


def build_topology(G):
    """Precompute all graph-topology matrices (host, once per topology)."""
    row = np.asarray(G["edge_index"])[0]
    col = np.asarray(G["edge_index"])[1]
    batch = np.asarray(G["batch"])
    N = int(G["x"].shape[0])
    E = int(row.shape[0])
    B = int(G["glob"].shape[0])
    A = int(np.asarray(G["num_effects"]).sum())
    nb = norm_np(G["actions_batch"])
    P = int(nb.max()) + 1

    names, arrs = [], []

    def add(n, a):
        names.append(n)
        arrs.append(np.asarray(a, np.float32))

    add("gath_row", one_hot_np(row, N))
    add("gath_col", one_hot_np(col, N))
    add("gath_batch", one_hot_np(batch, B))
    sm = scatter_onehot_np(batch, B)                       # (B, N)
    add("mean_batch", sm / np.maximum(sm.sum(axis=1, keepdims=True), 1.0))

    # Vectorised scatter_max over `row`: kmax permutation-gather matrices.
    # Short segments are padded by repeating their first edge; empty segments
    # have all-zero rows -> result 0.
    # TODO(synk): torch_scatter.scatter_max fills empty segments with 0;
    # mirrored here (never triggers for this graph).
    segs = [np.nonzero(row == s)[0] for s in range(N)]
    kmax = max([len(s) for s in segs] + [1])
    for j in range(kmax):
        Pj = np.zeros((N, E), np.float32)
        for s, es in enumerate(segs):
            if len(es) == 0:
                continue
            Pj[s, es[min(j, len(es) - 1)]] = 1.0
        add("permmax_%d" % j, Pj)

    pool = scatter_onehot_np(nb, P)                        # (P, A)
    has_U = int(G["action_globs"].shape[0]) > 0
    has_V = int(G["action_nodes"].shape[0]) > 0
    has_E = int(G["action_edges"].shape[0]) > 0
    if has_U:
        add("gath_U", one_hot_np(np.asarray(G["U"]), B))
        add("poolU", pool @ scatter_onehot_np(np.asarray(G["UA"]), A))
    if has_V:
        add("gath_V", one_hot_np(np.asarray(G["V"]), N))
        add("poolV", pool @ scatter_onehot_np(np.asarray(G["VA"]), A))
    if has_E:
        Eix = np.asarray(G["E"])
        add("gath_rowE", one_hot_np(row[Eix], N))
        add("gath_colE", one_hot_np(col[Eix], N))
        add("gath_E", one_hot_np(Eix, E))
        add("poolE", pool @ scatter_onehot_np(np.asarray(G["EA"]), A))

    meta = dict(N=N, E=E, B=B, P=P, kmax=kmax, has_U=has_U, has_V=has_V, has_E=has_E)
    return names, arrs, meta


def build_data(G, meta):
    names = ["x", "edge_attr", "glob"]
    arrs = [G["x"], G["edge_attr"], G["glob"]]
    if meta["has_U"]:
        names.append("action_globs"); arrs.append(G["action_globs"])
    if meta["has_V"]:
        names.append("action_nodes"); arrs.append(G["action_nodes"])
    if meta["has_E"]:
        names.append("action_edges"); arrs.append(G["action_edges"])
    return names, arrs


# ----------------------------- slab packing -----------------------------------
def compute_layout(named_shapes):
    """[(name, (rows, cols))] -> ({name: (row_off, rows, cols)}, total_rows).
    Each block's row offset is 8-aligned so all in-kernel slices start on a
    sublane-tile boundary."""
    offsets, r = {}, 0
    for name, (rows, cols) in named_shapes:
        offsets[name] = (r, int(rows), int(cols))
        r += pad8(rows)
    return offsets, r


def pack_const_slab(named_arrays, width):
    offsets, total = compute_layout([(n, a.shape) for n, a in named_arrays])
    slab = np.zeros((total, width), np.float32)
    for n, a in named_arrays:
        off, rows, cols = offsets[n]
        slab[off:off + rows, :cols] = a
    return slab, offsets


# ----------------------------- fused Pallas kernel ---------------------------
def make_fused_forward(const_offsets, data_offsets, data_names, data_rows,
                       const_rows, meta, width):
    """Single fused pallas_call for a fixed graph topology, 2 input slabs."""
    N, E, B, P = meta["N"], meta["E"], meta["B"], meta["P"]
    kmax = meta["kmax"]
    has_U, has_V, has_E = meta["has_U"], meta["has_V"], meta["has_E"]
    R_out = max(pad8(P), pad8(B))

    def kernel(const_ref, data_ref, out_ref):
        def get(name):
            if name in data_offsets:
                off, rows, cols = data_offsets[name]
                return data_ref[off:off + rows, 0:cols]
            off, rows, cols = const_offsets[name]
            return const_ref[off:off + rows, 0:cols]

        def mm(a, b):
            k = a.shape[1]
            if k <= 4:   # tiny-K contraction: unrolled broadcast-FMA on the VPU
                out = a[:, 0:1] * b[0:1, :]
                for i in range(1, k):
                    out = out + a[:, i:i + 1] * b[i:i + 1, :]
                return out
            return jnp.dot(a, b, preferred_element_type=jnp.float32)

        def lin2(a, b, wa, wb, bias, relu=False):
            y = mm(a, get(wa)) + mm(b, get(wb)) + get(bias)
            return jnp.maximum(y, 0.0) if relu else y

        gath_row, gath_col = get("gath_row"), get("gath_col")
        gath_batch, mean_batch = get("gath_batch"), get("mean_batch")
        perms = [get("permmax_%d" % j) for j in range(kmax)]

        def gn_block(x, e, g, p):
            # edge model: relu(edge_mlp(cat([x[row], edge_attr])))
            src = mm(gath_row, x)
            edge_out = lin2(src, e, p + "we_x", p + "we_e", p + "we_b", relu=True)
            # node model
            xc = mm(gath_col, x)
            nh = lin2(xc, edge_out, p + "wn_x", p + "wn_e", p + "wn_b")
            # scatter_max(nh, row, dim_size=N): kmax permutation matmuls + VPU max
            agg = mm(perms[0], nh)
            for j in range(1, kmax):
                agg = jnp.maximum(agg, mm(perms[j], nh))
            gb = mm(gath_batch, g)
            x_new = lin2(agg, gb, p + "wn2_a", p + "wn2_g", p + "wn2_b", relu=True)
            # global model
            mean_x = mm(mean_batch, x_new)
            g_new = lin2(g, mean_x, p + "wg_g", p + "wg_x", p + "wg_b", relu=True)
            return x_new, edge_out, g_new

        x, e, g = get("x"), get("edge_attr"), get("glob")
        n1, e1, g1 = gn_block(x, e, g, "gn1_")
        n2, e2, g2 = gn_block(n1, e1, g1, "gn2_")
        sn, se, sg = n1 + n2, e1 + e2, g1 + g2

        # Actions_block: the action-row scatter + norm(actions_batch) pooling are
        # folded into the precomputed pool* matrices (unique indices -> set==add).
        pooled = jnp.zeros((P, HID), jnp.float32)
        if has_U:
            gU = mm(get("gath_U"), sg)
            vU = lin2(gU, get("action_globs"), "wgm_g", "wgm_a", "wgm_b")
            pooled = pooled + mm(get("poolU"), vU)
        if has_V:
            nV = mm(get("gath_V"), sn)
            vV = lin2(nV, get("action_nodes"), "wnm_n", "wnm_a", "wnm_b")
            pooled = pooled + mm(get("poolV"), vV)
        if has_E:
            rE = mm(get("gath_rowE"), sn)
            cE = mm(get("gath_colE"), sn)
            EE = (mm(rE, get("we1_r")) + mm(get("action_edges"), get("we1_a"))
                  + mm(cE, get("we1_c")) + get("we1_b"))
            eE = mm(get("gath_E"), se)
            vE = lin2(eE, EE, "we2_e", "we2_E", "we2_b")
            pooled = pooled + mm(get("poolE"), vE)

        # N == 1 heads: VPU multiply + lane reduce, keeps the MXU off the tail.
        pi = jnp.tanh(jnp.sum(pooled * get("wp_w"), axis=-1, keepdims=True)
                      + get("wp_b")) * SCALE
        vh = jnp.maximum(mm(sg, get("wv1_w")) + get("wv1_b"), 0.0)
        val = jax.nn.sigmoid(jnp.sum(vh * get("wv2_w"), axis=-1, keepdims=True)
                             + get("wv2_b"))

        # single lane-padded output tile: col 0 = pi (rows 0:P), col 1 = val (0:B)
        out_ref[...] = jnp.zeros((R_out, 128), jnp.float32)
        out_ref[0:P, 0:1] = pi
        out_ref[0:B, 1:2] = val

    # advisory cost estimate so XLA can overlap this call with surrounding ops
    flops = 0
    for nin, ein, gin in ((NODE_IN, EDGE_IN, GLOB_IN), (HID, HID, HID)):
        flops += 2 * E * N * nin * 2 + 2 * E * (nin + ein) * HID
        flops += 2 * E * (nin + HID) * HID + 2 * kmax * N * E * HID
        flops += 2 * N * B * gin + 2 * N * (HID + gin) * HID
        flops += 2 * B * N * HID + 2 * B * (gin + HID) * HID
    flops += 2 * B * HID * (HID + 1) + 2 * P * HID + 8 * HID * HID
    bytes_accessed = 4 * width * (const_rows + data_rows + R_out)

    call = pl.pallas_call(
        kernel,
        out_shape=jax.ShapeDtypeStruct((R_out, 128), jnp.float32),
        in_specs=[_VMEM, _VMEM],
        out_specs=_VMEM,
        cost_estimate=pl.CostEstimate(flops=int(flops),
                                      transcendentals=int(P + B),
                                      bytes_accessed=int(bytes_accessed)),
    )

    def fwd(const_slab, *data_arrs):
        # per-call data slab (one DMA): pad + place each raw array (plain XLA ops)
        slab = jnp.zeros((data_rows, width), jnp.float32)
        for name, a in zip(data_names, data_arrs):
            off, _, _ = data_offsets[name]
            slab = jax.lax.dynamic_update_slice(slab, a.astype(jnp.float32), (off, 0))
        out = call(const_slab, slab)
        return out[0:P, 0:1], out[0:B, 1:2]

    return jax.jit(fwd)


# ----------------------------- pure-JAX reference ----------------------------
def _ref_lin(x, layer, act=None):
    wt, b = layer
    y = jnp.dot(x, wt, precision=jax.lax.Precision.HIGHEST) + b
    if act == "relu":
        y = jnp.maximum(y, 0.0)
    return y


def reference_forward(params, G):
    row = jnp.asarray(np.asarray(G["edge_index"])[0])
    col = jnp.asarray(np.asarray(G["edge_index"])[1])
    batch = jnp.asarray(G["batch"])
    x, e, g = G["x"], G["edge_attr"], G["glob"]
    N, B = x.shape[0], g.shape[0]

    def gn(p, x, e, g):
        edge_out = _ref_lin(jnp.concatenate([x[row], e], axis=1), p["edge_mlp"], "relu")
        nh = _ref_lin(jnp.concatenate([x[col], edge_out], axis=1), p["node_mlp"])
        mx = jax.ops.segment_max(nh, row, num_segments=N)
        cnt = jax.ops.segment_sum(jnp.ones((nh.shape[0],)), row, num_segments=N)
        agg = jnp.where((cnt > 0)[:, None], mx, 0.0)
        x_new = _ref_lin(jnp.concatenate([agg, g[batch]], axis=1), p["node_mlp_2"], "relu")
        s = jax.ops.segment_sum(x_new, batch, num_segments=B)
        c = jnp.maximum(jax.ops.segment_sum(jnp.ones((N,)), batch, num_segments=B), 1.0)
        g_new = _ref_lin(jnp.concatenate([g, s / c[:, None]], axis=1), p["global_mlp"], "relu")
        return x_new, edge_out, g_new

    n1, e1, g1 = gn(params["gn1"], x, e, g)
    n2, e2, g2 = gn(params["gn2"], n1, e1, g1)
    sn, se, sg = n1 + n2, e1 + e2, g1 + g2

    a = params["actions"]
    A = int(np.asarray(G["num_effects"]).sum())
    nb = norm_np(G["actions_batch"])
    P = int(nb.max()) + 1
    acts = jnp.zeros((A, HID), jnp.float32)
    if G["action_globs"].shape[0] > 0:
        vU = _ref_lin(jnp.concatenate([sg[jnp.asarray(G["U"])], G["action_globs"]], 1),
                      a["glob_mlp"])
        acts = acts.at[jnp.asarray(G["UA"])].set(vU)
    if G["action_nodes"].shape[0] > 0:
        vV = _ref_lin(jnp.concatenate([sn[jnp.asarray(G["V"])], G["action_nodes"]], 1),
                      a["node_mlp"])
        acts = acts.at[jnp.asarray(G["VA"])].set(vV)
    if G["action_edges"].shape[0] > 0:
        Eix = jnp.asarray(G["E"])
        EE = _ref_lin(jnp.concatenate([sn[row[Eix]], G["action_edges"], sn[col[Eix]]], 1),
                      a["edge_mlp1"])
        vE = _ref_lin(jnp.concatenate([se[Eix], EE], 1), a["edge_mlp2"])
        acts = acts.at[jnp.asarray(G["EA"])].set(vE)
    pooled = jax.ops.segment_sum(acts, jnp.asarray(nb), num_segments=P)
    pi = jnp.tanh(_ref_lin(pooled, a["policy"])) * SCALE
    vh = _ref_lin(sg, params["value"]["l1"], "relu")
    val = jax.nn.sigmoid(_ref_lin(vh, params["value"]["l2"]))
    return pi, val


# ----------------------------- example data ----------------------------------
def make_graph(key):
    kx, ke, kg, kag, kan, kae = jax.random.split(key, 6)
    div = 2 + N_HISTORY
    N, Ne, B = 8, 16, 2
    # every node appears at least once as a "row" target (scatter_max safe)
    row = np.array([0, 1, 2, 3, 0, 1, 2, 3, 4, 5, 6, 7, 4, 5, 6, 7], np.int32)
    col = np.array([1, 2, 3, 0, 2, 3, 0, 1, 5, 6, 7, 4, 6, 7, 4, 5], np.int32)
    return {
        "x": jax.random.normal(kx, (N, NODE_IN), jnp.float32),
        "edge_attr": jax.random.normal(ke, (Ne, EDGE_IN), jnp.float32),
        "glob": jax.random.normal(kg, (B, GLOB_IN), jnp.float32),
        "edge_index": np.stack([row, col], axis=0),
        "batch": np.array([0, 0, 0, 0, 1, 1, 1, 1], np.int32),
        # action bookkeeping: 6 actions total, 2 of each type, 3 per graph
        "num_effects": np.ones((6,), np.int32),
        "action_globs": jax.random.normal(kag, (2, GLOB_IN // div), jnp.float32),
        "U": np.array([0, 1], np.int32),
        "UA": np.array([0, 3], np.int32),
        "action_nodes": jax.random.normal(kan, (2, (NODE_IN - 1) // div), jnp.float32),
        "V": np.array([2, 5], np.int32),
        "VA": np.array([1, 4], np.int32),
        "action_edges": jax.random.normal(kae, (2, (EDGE_IN - 1) // div), jnp.float32),
        "E": np.array([3, 10], np.int32),
        "EA": np.array([2, 5], np.int32),
        "actions_batch": np.array([0, 0, 0, 1, 1, 1], np.int32),
    }


if __name__ == "__main__":
    root = jax.random.PRNGKey(0)
    kp, kd = jax.random.split(root)
    params = make_params(kp)
    G = make_graph(kd)

    # one-time, host-side setup per graph topology / parameter set
    w_names, w_arrs = flatten_weights(params)
    t_names, t_arrs, meta = build_topology(G)
    d_names, d_arrs = build_data(G, meta)

    const_named = list(zip(t_names + w_names, t_arrs + w_arrs))
    max_cols = max([a.shape[1] for _, a in const_named] +
                   [int(np.asarray(a).shape[1]) for a in d_arrs])
    width = pad128(max_cols)
    const_slab, const_offsets = pack_const_slab(const_named, width)
    data_offsets, data_rows = compute_layout(
        [(n, np.asarray(a).shape) for n, a in zip(d_names, d_arrs)])

    fwd = make_fused_forward(const_offsets, data_offsets, d_names, data_rows,
                             const_slab.shape[0], meta, width)

    const_slab_j = jnp.asarray(const_slab)
    data_inputs = [jnp.asarray(a, jnp.float32) for a in d_arrs]

    pi, val = fwd(const_slab_j, *data_inputs)
    pi = jax.block_until_ready(pi)
    val = jax.block_until_ready(val)

    assert pi.shape == (meta["P"], 1) and val.shape == (meta["B"], 1)
    assert bool(jnp.all(jnp.isfinite(pi))) and bool(jnp.all(jnp.isfinite(val)))

    pi_ref, val_ref = reference_forward(params, G)
    np.testing.assert_allclose(np.asarray(pi), np.asarray(pi_ref), rtol=5e-3, atol=5e-3)
    np.testing.assert_allclose(np.asarray(val), np.asarray(val_ref), rtol=5e-3, atol=5e-3)

    print("KERNEL_OK")
</pallas_src>

<mosaic_0001>
module attributes {stable_mosaic.version = 11 : i64} {
  func.func @kernel(%arg0: memref<904x128xf32, #tpu.memory_space<vmem>>, %arg1: memref<56x128xf32, #tpu.memory_space<vmem>>, %arg2: memref<8x128xf32, #tpu.memory_space<vmem>>) attributes {dimension_semantics = [], scalar_prefetch = 0 : i64, scratch_operands = 0 : i64, tpu.core_type = #tpu.core_type<tc>} {
    %c0 = arith.constant 0 : index
    %c0_0 = arith.constant 0 : index
    %0 = vector.load %arg0[%c0, %c0_0] : memref<904x128xf32, #tpu.memory_space<vmem>>, vector<16x8xf32>
    %c16 = arith.constant 16 : index
    %c0_1 = arith.constant 0 : index
    %1 = vector.load %arg0[%c16, %c0_1] : memref<904x128xf32, #tpu.memory_space<vmem>>, vector<16x8xf32>
    %c32 = arith.constant 32 : index
    %c0_2 = arith.constant 0 : index
    %2 = vector.load %arg0[%c32, %c0_2] : memref<904x128xf32, #tpu.memory_space<vmem>>, vector<8x2xf32>
    %c40 = arith.constant 40 : index
    %c0_3 = arith.constant 0 : index
    %3 = vector.load %arg0[%c40, %c0_3] : memref<904x128xf32, #tpu.memory_space<vmem>>, vector<2x8xf32>
    %c48 = arith.constant 48 : index
    %c0_4 = arith.constant 0 : index
    %4 = vector.load %arg0[%c48, %c0_4] : memref<904x128xf32, #tpu.memory_space<vmem>>, vector<8x16xf32>
    %c56 = arith.constant 56 : index
    %c0_5 = arith.constant 0 : index
    %5 = vector.load %arg0[%c56, %c0_5] : memref<904x128xf32, #tpu.memory_space<vmem>>, vector<8x16xf32>
    %c0_6 = arith.constant 0 : index
    %c0_7 = arith.constant 0 : index
    %6 = vector.load %arg1[%c0_6, %c0_7] : memref<56x128xf32, #tpu.memory_space<vmem>>, vector<8x7xf32>
    %c8 = arith.constant 8 : index
    %c0_8 = arith.constant 0 : index
    %7 = vector.load %arg1[%c8, %c0_8] : memref<56x128xf32, #tpu.memory_space<vmem>>, vector<16x5xf32>
    %c24 = arith.constant 24 : index
    %c0_9 = arith.constant 0 : index
    %8 = vector.load %arg1[%c24, %c0_9] : memref<56x128xf32, #tpu.memory_space<vmem>>, vector<2x6xf32>
    %cst = arith.constant dense<0.000000e+00> : vector<16x7xf32>
    %9 = tpu.matmul %0, %6, %cst {dimension_numbers = #tpu.dot_dimension_numbers<[1], [0], [0], [1], [0, 0, 1, 1], [], []>} : vector<16x8xf32>, vector<8x7xf32>, vector<16x7xf32> -> vector<16x7xf32>
    %c128 = arith.constant 128 : index
    %c0_10 = arith.constant 0 : index
    %10 = vector.load %arg0[%c128, %c0_10] : memref<904x128xf32, #tpu.memory_space<vmem>>, vector<7x32xf32>
    %cst_11 = arith.constant dense<0.000000e+00> : vector<16x32xf32>
    %11 = tpu.matmul %9, %10, %cst_11 {dimension_numbers = #tpu.dot_dimension_numbers<[1], [0], [0], [1], [0, 0, 1, 1], [], []>} : vector<16x7xf32>, vector<7x32xf32>, vector<16x32xf32> -> vector<16x32xf32>
    %c136 = arith.constant 136 : index
    %c0_12 = arith.constant 0 : index
    %12 = vector.load %arg0[%c136, %c0_12] : memref<904x128xf32, #tpu.memory_space<vmem>>, vector<5x32xf32>
    %cst_13 = arith.constant dense<0.000000e+00> : vector<16x32xf32>
    %13 = tpu.matmul %7, %12, %cst_13 {dimension_numbers = #tpu.dot_dimension_numbers<[1], [0], [0], [1], [0, 0, 1, 1], [], []>} : vector<16x5xf32>, vector<5x32xf32>, vector<16x32xf32> -> vector<16x32xf32>
    %14 = arith.addf %11, %13 : vector<16x32xf32>
    %c144 = arith.constant 144 : index
    %c0_14 = arith.constant 0 : index
    %15 = vector.load %arg0[%c144, %c0_14] : memref<904x128xf32, #tpu.memory_space<vmem>>, vector<1x32xf32>
    %16 = vector.broadcast %15 : vector<1x32xf32> to vector<16x32xf32>
    %17 = arith.addf %14, %16 : vector<16x32xf32>
    %cst_15 = arith.constant 0.000000e+00 : f32
    %18 = vector.broadcast %cst_15 : f32 to vector<16x32xf32>
    %19 = arith.maximumf %17, %18 : vector<16x32xf32>
    %cst_16 = arith.constant dense<0.000000e+00> : vector<16x7xf32>
    %20 = tpu.matmul %1, %6, %cst_16 {dimension_numbers = #tpu.dot_dimension_numbers<[1], [0], [0], [1], [0, 0, 1, 1], [], []>} : vector<16x8xf32>, vector<8x7xf32>, vector<16x7xf32> -> vector<16x7xf32>
    %c152 = arith.constant 152 : index
    %c0_17 = arith.constant 0 : index
    %21 = vector.load %arg0[%c152, %c0_17] : memref<904x128xf32, #tpu.memory_space<vmem>>, vector<7x32xf32>
    %cst_18 = arith.constant dense<0.000000e+00> : vector<16x32xf32>
    %22 = tpu.matmul %20, %21, %cst_18 {dimension_numbers = #tpu.dot_dimension_numbers<[1], [0], [0], [1], [0, 0, 1, 1], [], []>} : vector<16x7xf32>, vector<7x32xf32>, vector<16x32xf32> -> vector<16x32xf32>
    %c160 = arith.constant 160 : index
    %c0_19 = arith.constant 0 : index
    %23 = vector.load %arg0[%c160, %c0_19] : memref<904x128xf32, #tpu.memory_space<vmem>>, vector<32x32xf32>
    %cst_20 = arith.constant dense<0.000000e+00> : vector<16x32xf32>
    %24 = tpu.matmul %19, %23, %cst_20 {dimension_numbers = #tpu.dot_dimension_numbers<[1], [0], [0], [1], [0, 0, 1, 1], [], []>} : vector<16x32xf32>, vector<32x32xf32>, vector<16x32xf32> -> vector<16x32xf32>
    %25 = arith.addf %22, %24 : vector<16x32xf32>
    %c192 = arith.constant 192 : index
    %c0_21 = arith.constant 0 : index
    %26 = vector.load %arg0[%c192, %c0_21] : memref<904x128xf32, #tpu.memory_space<vmem>>, vector<1x32xf32>
    %27 = vector.broadcast %26 : vector<1x32xf32> to vector<16x32xf32>
    %28 = arith.addf %25, %27 : vector<16x32xf32>
    %cst_22 = arith.constant dense<0.000000e+00> : vector<8x32xf32>
    %29 = tpu.matmul %4, %28, %cst_22 {dimension_numbers = #tpu.dot_dimension_numbers<[1], [0], [0], [1], [0, 0, 1, 1], [], []>} : vector<8x16xf32>, vector<16x32xf32>, vector<8x32xf32> -> vector<8x32xf32>
    %cst_23 = arith.constant dense<0.000000e+00> : vector<8x32xf32>
    %30 = tpu.matmul %5, %28, %cst_23 {dimension_numbers = #tpu.dot_dimension_numbers<[1], [0], [0], [1], [0, 0, 1, 1], [], []>} : vector<8x16xf32>, vector<16x32xf32>, vector<8x32xf32> -> vector<8x32xf32>
    %31 = arith.maximumf %29, %30 : vector<8x32xf32>
    %32 = vector.extract_strided_slice %2 {offsets = [0, 0], sizes = [8, 1], strides = [1, 1]} : vector<8x2xf32> to vector<8x1xf32>
    %33 = vector.extract_strided_slice %8 {offsets = [0, 0], sizes = [1, 6], strides = [1, 1]} : vector<2x6xf32> to vector<1x6xf32>
    %34 = vector.broadcast %32 : vector<8x1xf32> to vector<8x6xf32>
    %35 = vector.broadcast %33 : vector<1x6xf32> to vector<8x6xf32>
    %36 = arith.mulf %34, %35 : vector<8x6xf32>
    %37 = vector.extract_strided_slice %2 {offsets = [0, 1], sizes = [8, 1], strides = [1, 1]} : vector<8x2xf32> to vector<8x1xf32>
    %38 = vector.extract_strided_slice %8 {offsets = [1, 0], sizes = [1, 6], strides = [1, 1]} : vector<2x6xf32> to vector<1x6xf32>
    %39 = vector.broadcast %37 : vector<8x1xf32> to vector<8x6xf32>
    %40 = vector.broadcast %38 : vector<1x6xf32> to vector<8x6xf32>
    %41 = arith.mulf %39, %40 : vector<8x6xf32>
    %42 = arith.addf %36, %41 : vector<8x6xf32>
    %c200 = arith.constant 200 : index
    %c0_24 = arith.constant 0 : index
    %43 = vector.load %arg0[%c200, %c0_24] : memref<904x128xf32, #tpu.memory_space<vmem>>, vector<32x32xf32>
    %cst_25 = arith.constant dense<0.000000e+00> : vector<8x32xf32>
    %44 = tpu.matmul %31, %43, %cst_25 {dimension_numbers = #tpu.dot_dimension_numbers<[1], [0], [0], [1], [0, 0, 1, 1], [], []>} : vector<8x32xf32>, vector<32x32xf32>, vector<8x32xf32> -> vector<8x32xf32>
    %c232 = arith.constant 232 : index
    %c0_26 = arith.constant 0 : index
    %45 = vector.load %arg0[%c232, %c0_26] : memref<904x128xf32, #tpu.memory_space<vmem>>, vector<6x32xf32>
    %cst_27 = arith.constant dense<0.000000e+00> : vector<8x32xf32>
    %46 = tpu.matmul %42, %45, %cst_27 {dimension_numbers = #tpu.dot_dimension_numbers<[1], [0], [0], [1], [0, 0, 1, 1], [], []>} : vector<8x6xf32>, vector<6x32xf32>, vector<8x32xf32> -> vector<8x32xf32>
    %47 = arith.addf %44, %46 : vector<8x32xf32>
    %c240 = arith.constant 240 : index
    %c0_28 = arith.constant 0 : index
    %48 = vector.load %arg0[%c240, %c0_28] : memref<904x128xf32, #tpu.memory_space<vmem>>, vector<1x32xf32>
    %49 = vector.broadcast %48 : vector<1x32xf32> to vector<8x32xf32>
    %50 = arith.addf %47, %49 : vector<8x32xf32>
    %cst_29 = arith.constant 0.000000e+00 : f32
    %51 = vector.broadcast %cst_29 : f32 to vector<8x32xf32>
    %52 = arith.maximumf %50, %51 : vector<8x32xf32>
    %cst_30 = arith.constant dense<0.000000e+00> : vector<2x32xf32>
    %53 = tpu.matmul %3, %52, %cst_30 {dimension_numbers = #tpu.dot_dimension_numbers<[1], [0], [0], [1], [0, 0, 1, 1], [], []>} : vector<2x8xf32>, vector<8x32xf32>, vector<2x32xf32> -> vector<2x32xf32>
    %c248 = arith.constant 248 : index
    %c0_31 = arith.constant 0 : index
    %54 = vector.load %arg0[%c248, %c0_31] : memref<904x128xf32, #tpu.memory_space<vmem>>, vector<6x32xf32>
    %cst_32 = arith.constant dense<0.000000e+00> : vector<2x32xf32>
    %55 = tpu.matmul %8, %54, %cst_32 {dimension_numbers = #tpu.dot_dimension_numbers<[1], [0], [0], [1], [0, 0, 1, 1], [], []>} : vector<2x6xf32>, vector<6x32xf32>, vector<2x32xf32> -> vector<2x32xf32>
    %c256 = arith.constant 256 : index
    %c0_33 = arith.constant 0 : index
    %56 = vector.load %arg0[%c256, %c0_33] : memref<904x128xf32, #tpu.memory_space<vmem>>, vector<32x32xf32>
    %cst_34 = arith.constant dense<0.000000e+00> : vector<2x32xf32>
    %57 = tpu.matmul %53, %56, %cst_34 {dimension_numbers = #tpu.dot_dimension_numbers<[1], [0], [0], [1], [0, 0, 1, 1], [], []>} : vector<2x32xf32>, vector<32x32xf32>, vector<2x32xf32> -> vector<2x32xf32>
    %58 = arith.addf %55, %57 : vector<2x32xf32>
    %c288 = arith.constant 288 : index
    %c0_35 = arith.constant 0 : index
    %59 = vector.load %arg0[%c288, %c0_35] : memref<904x128xf32, #tpu.memory_space<vmem>>, vector<1x32xf32>
    %60 = vector.broadcast %59 : vector<1x32xf32> to vector<2x32xf32>
    %61 = arith.addf %58, %60 : vector<2x32xf32>
    %cst_36 = arith.constant 0.000000e+00 : f32
    %62 = vector.broadcast %cst_36 : f32 to vector<2x32xf32>
    %63 = arith.maximumf %61, %62 : vector<2x32xf32>
    %cst_37 = arith.constant dense<0.000000e+00> : vector<16x32xf32>
    %64 = tpu.matmul %0, %52, %cst_37 {dimension_numbers = #tpu.dot_dimension_numbers<[1], [0], [0], [1], [0, 0, 1, 1], [], []>} : vector<16x8xf32>, vector<8x32xf32>, vector<16x32xf32> -> vector<16x32xf32>
    %c296 = arith.constant 296 : index
    %c0_38 = arith.constant 0 : index
    %65 = vector.load %arg0[%c296, %c0_38] : memref<904x128xf32, #tpu.memory_space<vmem>>, vector<32x32xf32>
    %cst_39 = arith.constant dense<0.000000e+00> : vector<16x32xf32>
    %66 = tpu.matmul %64, %65, %cst_39 {dimension_numbers = #tpu.dot_dimension_numbers<[1], [0], [0], [1], [0, 0, 1, 1], [], []>} : vector<16x32xf32>, vector<32x32xf32>, vector<16x32xf32> -> vector<16x32xf32>
    %c328 = arith.constant 328 : index
    %c0_40 = arith.constant 0 : index
    %67 = vector.load %arg0[%c328, %c0_40] : memref<904x128xf32, #tpu.memory_space<vmem>>, vector<32x32xf32>
    %cst_41 = arith.constant dense<0.000000e+00> : vector<16x32xf32>
    %68 = tpu.matmul %19, %67, %cst_41 {dimension_numbers = #tpu.dot_dimension_numbers<[1], [0], [0], [1], [0, 0, 1, 1], [], []>} : vector<16x32xf32>, vector<32x32xf32>, vector<16x32xf32> -> vector<16x32xf32>
    %69 = arith.addf %66, %68 : vector<16x32xf32>
    %c360 = arith.constant 360 : index
    %c0_42 = arith.constant 0 : index
    %70 = vector.load %arg0[%c360, %c0_42] : memref<904x128xf32, #tpu.memory_space<vmem>>, vector<1x32xf32>
    %71 = vector.broadcast %70 : vector<1x32xf32> to vector<16x32xf32>
    %72 = arith.addf %69, %71 : vector<16x32xf32>
    %cst_43 = arith.constant 0.000000e+00 : f32
    %73 = vector.broadcast %cst_43 : f32 to vector<16x32xf32>
    %74 = arith.maximumf %72, %73 : vector<16x32xf32>
    %cst_44 = arith.constant dense<0.000000e+00> : vector<16x32xf32>
    %75 = tpu.matmul %1, %52, %cst_44 {dimension_numbers = #tpu.dot_dimension_numbers<[1], [0], [0], [1], [0, 0, 1, 1], [], []>} : vector<16x8xf32>, vector<8x32xf32>, vector<16x32xf32> -> vector<16x32xf32>
    %c368 = arith.constant 368 : index
    %c0_45 = arith.constant 0 : index
    %76 = vector.load %arg0[%c368, %c0_45] : memref<904x128xf32, #tpu.memory_space<vmem>>, vector<32x32xf32>
    %cst_46 = arith.constant dense<0.000000e+00> : vector<16x32xf32>
    %77 = tpu.matmul %75, %76, %cst_46 {dimension_numbers = #tpu.dot_dimension_numbers<[1], [0], [0], [1], [0, 0, 1, 1], [], []>} : vector<16x32xf32>, vector<32x32xf32>, vector<16x32xf32> -> vector<16x32xf32>
    %c400 = arith.constant 400 : index
    %c0_47 = arith.constant 0 : index
    %78 = vector.load %arg0[%c400, %c0_47] : memref<904x128xf32, #tpu.memory_space<vmem>>, vector<32x32xf32>
    %cst_48 = arith.constant dense<0.000000e+00> : vector<16x32xf32>
    %79 = tpu.matmul %74, %78, %cst_48 {dimension_numbers = #tpu.dot_dimension_numbers<[1], [0], [0], [1], [0, 0, 1, 1], [], []>} : vector<16x32xf32>, vector<32x32xf32>, vector<16x32xf32> -> vector<16x32xf32>
    %80 = arith.addf %77, %79 : vector<16x32xf32>
    %c432 = arith.constant 432 : index
    %c0_49 = arith.constant 0 : index
    %81 = vector.load %arg0[%c432, %c0_49] : memref<904x128xf32, #tpu.memory_space<vmem>>, vector<1x32xf32>
    %82 = vector.broadcast %81 : vector<1x32xf32> to vector<16x32xf32>
    %83 = arith.addf %80, %82 : vector<16x32xf32>
    %cst_50 = arith.constant dense<0.000000e+00> : vector<8x32xf32>
    %84 = tpu.matmul %4, %83, %cst_50 {dimension_numbers = #tpu.dot_dimension_numbers<[1], [0], [0], [1], [0, 0, 1, 1], [], []>} : vector<8x16xf32>, vector<16x32xf32>, vector<8x32xf32> -> vector<8x32xf32>
    %cst_51 = arith.constant dense<0.000000e+00> : vector<8x32xf32>
    %85 = tpu.matmul %5, %83, %cst_51 {dimension_numbers = #tpu.dot_dimension_numbers<[1], [0], [0], [1], [0, 0, 1, 1], [], []>} : vector<8x16xf32>, vector<16x32xf32>, vector<8x32xf32> -> vector<8x32xf32>
    %86 = arith.maximumf %84, %85 : vector<8x32xf32>
    %87 = vector.extract_strided_slice %2 {offsets = [0, 0], sizes = [8, 1], strides = [1, 1]} : vector<8x2xf32> to vector<8x1xf32>
    %88 = vector.extract_strided_slice %63 {offsets = [0, 0], sizes = [1, 32], strides = [1, 1]} : vector<2x32xf32> to vector<1x32xf32>
    %89 = vector.broadcast %87 : vector<8x1xf32> to vector<8x32xf32>
    %90 = vector.broadcast %88 : vector<1x32xf32> to vector<8x32xf32>
    %91 = arith.mulf %89, %90 : vector<8x32xf32>
    %92 = vector.extract_strided_slice %2 {offsets = [0, 1], sizes = [8, 1], strides = [1, 1]} : vector<8x2xf32> to vector<8x1xf32>
    %93 = vector.extract_strided_slice %63 {offsets = [1, 0], sizes = [1, 32], strides = [1, 1]} : vector<2x32xf32> to vector<1x32xf32>
    %94 = vector.broadcast %92 : vector<8x1xf32> to vector<8x32xf32>
    %95 = vector.broadcast %93 : vector<1x32xf32> to vector<8x32xf32>
    %96 = arith.mulf %94, %95 : vector<8x32xf32>
    %97 = arith.addf %91, %96 : vector<8x32xf32>
    %c440 = arith.constant 440 : index
    %c0_52 = arith.constant 0 : index
    %98 = vector.load %arg0[%c440, %c0_52] : memref<904x128xf32, #tpu.memory_space<vmem>>, vector<32x32xf32>
    %cst_53 = arith.constant dense<0.000000e+00> : vector<8x32xf32>
    %99 = tpu.matmul %86, %98, %cst_53 {dimension_numbers = #tpu.dot_dimension_numbers<[1], [0], [0], [1], [0, 0, 1, 1], [], []>} : vector<8x32xf32>, vector<32x32xf32>, vector<8x32xf32> -> vector<8x32xf32>
    %c472 = arith.constant 472 : index
    %c0_54 = arith.constant 0 : index
    %100 = vector.load %arg0[%c472, %c0_54] : memref<904x128xf32, #tpu.memory_space<vmem>>, vector<32x32xf32>
    %cst_55 = arith.constant dense<0.000000e+00> : vector<8x32xf32>
    %101 = tpu.matmul %97, %100, %cst_55 {dimension_numbers = #tpu.dot_dimension_numbers<[1], [0], [0], [1], [0, 0, 1, 1], [], []>} : vector<8x32xf32>, vector<32x32xf32>, vector<8x32xf32> -> vector<8x32xf32>
    %102 = arith.addf %99, %101 : vector<8x32xf32>
    %c504 = arith.constant 504 : index
    %c0_56 = arith.constant 0 : index
    %103 = vector.load %arg0[%c504, %c0_56] : memref<904x128xf32, #tpu.memory_space<vmem>>, vector<1x32xf32>
    %104 = vector.broadcast %103 : vector<1x32xf32> to vector<8x32xf32>
    %105 = arith.addf %102, %104 : vector<8x32xf32>
    %cst_57 = arith.constant 0.000000e+00 : f32
    %106 = vector.broadcast %cst_57 : f32 to vector<8x32xf32>
    %107 = arith.maximumf %105, %106 : vector<8x32xf32>
    %cst_58 = arith.constant dense<0.000000e+00> : vector<2x32xf32>
    %108 = tpu.matmul %3, %107, %cst_58 {dimension_numbers = #tpu.dot_dimension_numbers<[1], [0], [0], [1], [0, 0, 1, 1], [], []>} : vector<2x8xf32>, vector<8x32xf32>, vector<2x32xf32> -> vector<2x32xf32>
    %c512 = arith.constant 512 : index
    %c0_59 = arith.constant 0 : index
    %109 = vector.load %arg0[%c512, %c0_59] : memref<904x128xf32, #tpu.memory_space<vmem>>, vector<32x32xf32>
    %cst_60 = arith.constant dense<0.000000e+00> : vector<2x32xf32>
    %110 = tpu.matmul %63, %109, %cst_60 {dimension_numbers = #tpu.dot_dimension_numbers<[1], [0], [0], [1], [0, 0, 1, 1], [], []>} : vector<2x32xf32>, vector<32x32xf32>, vector<2x32xf32> -> vector<2x32xf32>
    %c544 = arith.constant 544 : index
    %c0_61 = arith.constant 0 : index
    %111 = vector.load %arg0[%c544, %c0_61] : memref<904x128xf32, #tpu.memory_space<vmem>>, vector<32x32xf32>
    %cst_62 = arith.constant dense<0.000000e+00> : vector<2x32xf32>
    %112 = tpu.matmul %108, %111, %cst_62 {dimension_numbers = #tpu.dot_dimension_numbers<[1], [0], [0], [1], [0, 0, 1, 1], [], []>} : vector<2x32xf32>, vector<32x32xf32>, vector<2x32xf32> -> vector<2x32xf32>
    %113 = arith.addf %110, %112 : vector<2x32xf32>
    %c576 = arith.constant 576 : index
    %c0_63 = arith.constant 0 : index
    %114 = vector.load %arg0[%c576, %c0_63] : memref<904x128xf32, #tpu.memory_space<vmem>>, vector<1x32xf32>
    %115 = vector.broadcast %114 : vector<1x32xf32> to vector<2x32xf32>
    %116 = arith.addf %113, %115 : vector<2x32xf32>
    %cst_64 = arith.constant 0.000000e+00 : f32
    %117 = vector.broadcast %cst_64 : f32 to vector<2x32xf32>
    %118 = arith.maximumf %116, %117 : vector<2x32xf32>
    %119 = arith.addf %52, %107 : vector<8x32xf32>
    %120 = arith.addf %19, %74 : vector<16x32xf32>
    %121 = arith.addf %63, %118 : vector<2x32xf32>
    %cst_65 = arith.constant 0.000000e+00 : f32
    %122 = vector.broadcast %cst_65 : f32 to vector<2x32xf32>
    %c64 = arith.constant 64 : index
    %c0_66 = arith.constant 0 : index
    %123 = vector.load %arg0[%c64, %c0_66] : memref<904x128xf32, #tpu.memory_space<vmem>>, vector<2x2xf32>
    %124 = vector.extract_strided_slice %123 {offsets = [0, 0], sizes = [2, 1], strides = [1, 1]} : vector<2x2xf32> to vector<2x1xf32>
    %125 = vector.extract_strided_slice %121 {offsets = [0, 0], sizes = [1, 32], strides = [1, 1]} : vector<2x32xf32> to vector<1x32xf32>
    %126 = vector.broadcast %124 : vector<2x1xf32> to vector<2x32xf32>
    %127 = vector.broadcast %125 : vector<1x32xf32> to vector<2x32xf32>
    %128 = arith.mulf %126, %127 : vector<2x32xf32>
    %129 = vector.extract_strided_slice %123 {offsets = [0, 1], sizes = [2, 1], strides = [1, 1]} : vector<2x2xf32> to vector<2x1xf32>
    %130 = vector.extract_strided_slice %121 {offsets = [1, 0], sizes = [1, 32], strides = [1, 1]} : vector<2x32xf32> to vector<1x32xf32>
    %131 = vector.broadcast %129 : vector<2x1xf32> to vector<2x32xf32>
    %132 = vector.broadcast %130 : vector<1x32xf32> to vector<2x32xf32>
    %133 = arith.mulf %131, %132 : vector<2x32xf32>
    %134 = arith.addf %128, %133 : vector<2x32xf32>
    %c32_67 = arith.constant 32 : index
    %c0_68 = arith.constant 0 : index
    %135 = vector.load %arg1[%c32_67, %c0_68] : memref<56x128xf32, #tpu.memory_space<vmem>>, vector<2x2xf32>
    %c584 = arith.constant 584 : index
    %c0_69 = arith.constant 0 : index
    %136 = vector.load %arg0[%c584, %c0_69] : memref<904x128xf32, #tpu.memory_space<vmem>>, vector<32x32xf32>
    %cst_70 = arith.constant dense<0.000000e+00> : vector<2x32xf32>
    %137 = tpu.matmul %134, %136, %cst_70 {dimension_numbers = #tpu.dot_dimension_numbers<[1], [0], [0], [1], [0, 0, 1, 1], [], []>} : vector<2x32xf32>, vector<32x32xf32>, vector<2x32xf32> -> vector<2x32xf32>
    %c616 = arith.constant 616 : index
    %c0_71 = arith.constant 0 : index
    %138 = vector.load %arg0[%c616, %c0_71] : memref<904x128xf32, #tpu.memory_space<vmem>>, vector<2x32xf32>
    %139 = vector.extract_strided_slice %135 {offsets = [0, 0], sizes = [2, 1], strides = [1, 1]} : vector<2x2xf32> to vector<2x1xf32>
    %140 = vector.extract_strided_slice %138 {offsets = [0, 0], sizes = [1, 32], strides = [1, 1]} : vector<2x32xf32> to vector<1x32xf32>
    %141 = vector.broadcast %139 : vector<2x1xf32> to vector<2x32xf32>
    %142 = vector.broadcast %140 : vector<1x32xf32> to vector<2x32xf32>
    %143 = arith.mulf %141, %142 : vector<2x32xf32>
    %144 = vector.extract_strided_slice %135 {offsets = [0, 1], sizes = [2, 1], strides = [1, 1]} : vector<2x2xf32> to vector<2x1xf32>
    %145 = vector.extract_strided_slice %138 {offsets = [1, 0], sizes = [1, 32], strides = [1, 1]} : vector<2x32xf32> to vector<1x32xf32>
    %146 = vector.broadcast %144 : vector<2x1xf32> to vector<2x32xf32>
    %147 = vector.broadcast %145 : vector<1x32xf32> to vector<2x32xf32>
    %148 = arith.mulf %146, %147 : vector<2x32xf32>
    %149 = arith.addf %143, %148 : vector<2x32xf32>
    %150 = arith.addf %137, %149 : vector<2x32xf32>
    %c624 = arith.constant 624 : index
    %c0_72 = arith.constant 0 : index
    %151 = vector.load %arg0[%c624, %c0_72] : memref<904x128xf32, #tpu.memory_space<vmem>>, vector<1x32xf32>
    %152 = vector.broadcast %151 : vector<1x32xf32> to vector<2x32xf32>
    %153 = arith.addf %150, %152 : vector<2x32xf32>
    %c72 = arith.constant 72 : index
    %c0_73 = arith.constant 0 : index
    %154 = vector.load %arg0[%c72, %c0_73] : memref<904x128xf32, #tpu.memory_space<vmem>>, vector<2x2xf32>
    %155 = vector.extract_strided_slice %154 {offsets = [0, 0], sizes = [2, 1], strides = [1, 1]} : vector<2x2xf32> to vector<2x1xf32>
    %156 = vector.extract_strided_slice %153 {offsets = [0, 0], sizes = [1, 32], strides = [1, 1]} : vector<2x32xf32> to vector<1x32xf32>
    %157 = vector.broadcast %155 : vector<2x1xf32> to vector<2x32xf32>
    %158 = vector.broadcast %156 : vector<1x32xf32> to vector<2x32xf32>
    %159 = arith.mulf %157, %158 : vector<2x32xf32>
    %160 = vector.extract_strided_slice %154 {offsets = [0, 1], sizes = [2, 1], strides = [1, 1]} : vector<2x2xf32> to vector<2x1xf32>
    %161 = vector.extract_strided_slice %153 {offsets = [1, 0], sizes = [1, 32], strides = [1, 1]} : vector<2x32xf32> to vector<1x32xf32>
    %162 = vector.broadcast %160 : vector<2x1xf32> to vector<2x32xf32>
    %163 = vector.broadcast %161 : vector<1x32xf32> to vector<2x32xf32>
    %164 = arith.mulf %162, %163 : vector<2x32xf32>
    %165 = arith.addf %159, %164 : vector<2x32xf32>
    %166 = arith.addf %122, %165 : vector<2x32xf32>
    %c80 = arith.constant 80 : index
    %c0_74 = arith.constant 0 : index
    %167 = vector.load %arg0[%c80, %c0_74] : memref<904x128xf32, #tpu.memory_space<vmem>>, vector<2x8xf32>
    %cst_75 = arith.constant dense<0.000000e+00> : vector<2x32xf32>
    %168 = tpu.matmul %167, %119, %cst_75 {dimension_numbers = #tpu.dot_dimension_numbers<[1], [0], [0], [1], [0, 0, 1, 1], [], []>} : vector<2x8xf32>, vector<8x32xf32>, vector<2x32xf32> -> vector<2x32xf32>
    %c40_76 = arith.constant 40 : index
    %c0_77 = arith.constant 0 : index
    %169 = vector.load %arg1[%c40_76, %c0_77] : memref<56x128xf32, #tpu.memory_space<vmem>>, vector<2x2xf32>
    %c632 = arith.constant 632 : index
    %c0_78 = arith.constant 0 : index
    %170 = vector.load %arg0[%c632, %c0_78] : memref<904x128xf32, #tpu.memory_space<vmem>>, vector<32x32xf32>
    %cst_79 = arith.constant dense<0.000000e+00> : vector<2x32xf32>
    %171 = tpu.matmul %168, %170, %cst_79 {dimension_numbers = #tpu.dot_dimension_numbers<[1], [0], [0], [1], [0, 0, 1, 1], [], []>} : vector<2x32xf32>, vector<32x32xf32>, vector<2x32xf32> -> vector<2x32xf32>
    %c664 = arith.constant 664 : index
    %c0_80 = arith.constant 0 : index
    %172 = vector.load %arg0[%c664, %c0_80] : memref<904x128xf32, #tpu.memory_space<vmem>>, vector<2x32xf32>
    %173 = vector.extract_strided_slice %169 {offsets = [0, 0], sizes = [2, 1], strides = [1, 1]} : vector<2x2xf32> to vector<2x1xf32>
    %174 = vector.extract_strided_slice %172 {offsets = [0, 0], sizes = [1, 32], strides = [1, 1]} : vector<2x32xf32> to vector<1x32xf32>
    %175 = vector.broadcast %173 : vector<2x1xf32> to vector<2x32xf32>
    %176 = vector.broadcast %174 : vector<1x32xf32> to vector<2x32xf32>
    %177 = arith.mulf %175, %176 : vector<2x32xf32>
    %178 = vector.extract_strided_slice %169 {offsets = [0, 1], sizes = [2, 1], strides = [1, 1]} : vector<2x2xf32> to vector<2x1xf32>
    %179 = vector.extract_strided_slice %172 {offsets = [1, 0], sizes = [1, 32], strides = [1, 1]} : vector<2x32xf32> to vector<1x32xf32>
    %180 = vector.broadcast %178 : vector<2x1xf32> to vector<2x32xf32>
    %181 = vector.broadcast %179 : vector<1x32xf32> to vector<2x32xf32>
    %182 = arith.mulf %180, %181 : vector<2x32xf32>
    %183 = arith.addf %177, %182 : vector<2x32xf32>
    %184 = arith.addf %171, %183 : vector<2x32xf32>
    %c672 = arith.constant 672 : index
    %c0_81 = arith.constant 0 : index
    %185 = vector.load %arg0[%c672, %c0_81] : memref<904x128xf32, #tpu.memory_space<vmem>>, vector<1x32xf32>
    %186 = vector.broadcast %185 : vector<1x32xf32> to vector<2x32xf32>
    %187 = arith.addf %184, %186 : vector<2x32xf32>
    %c88 = arith.constant 88 : index
    %c0_82 = arith.constant 0 : index
    %188 = vector.load %arg0[%c88, %c0_82] : memref<904x128xf32, #tpu.memory_space<vmem>>, vector<2x2xf32>
    %189 = vector.extract_strided_slice %188 {offsets = [0, 0], sizes = [2, 1], strides = [1, 1]} : vector<2x2xf32> to vector<2x1xf32>
    %190 = vector.extract_strided_slice %187 {offsets = [0, 0], sizes = [1, 32], strides = [1, 1]} : vector<2x32xf32> to vector<1x32xf32>
    %191 = vector.broadcast %189 : vector<2x1xf32> to vector<2x32xf32>
    %192 = vector.broadcast %190 : vector<1x32xf32> to vector<2x32xf32>
    %193 = arith.mulf %191, %192 : vector<2x32xf32>
    %194 = vector.extract_strided_slice %188 {offsets = [0, 1], sizes = [2, 1], strides = [1, 1]} : vector<2x2xf32> to vector<2x1xf32>
    %195 = vector.extract_strided_slice %187 {offsets = [1, 0], sizes = [1, 32], strides = [1, 1]} : vector<2x32xf32> to vector<1x32xf32>
    %196 = vector.broadcast %194 : vector<2x1xf32> to vector<2x32xf32>
    %197 = vector.broadcast %195 : vector<1x32xf32> to vector<2x32xf32>
    %198 = arith.mulf %196, %197 : vector<2x32xf32>
    %199 = arith.addf %193, %198 : vector<2x32xf32>
    %200 = arith.addf %166, %199 : vector<2x32xf32>
    %c96 = arith.constant 96 : index
    %c0_83 = arith.constant 0 : index
    %201 = vector.load %arg0[%c96, %c0_83] : memref<904x128xf32, #tpu.memory_space<vmem>>, vector<2x8xf32>
    %cst_84 = arith.constant dense<0.000000e+00> : vector<2x32xf32>
    %202 = tpu.matmul %201, %119, %cst_84 {dimension_numbers = #tpu.dot_dimension_numbers<[1], [0], [0], [1], [0, 0, 1, 1], [], []>} : vector<2x8xf32>, vector<8x32xf32>, vector<2x32xf32> -> vector<2x32xf32>
    %c104 = arith.constant 104 : index
    %c0_85 = arith.constant 0 : index
    %203 = vector.load %arg0[%c104, %c0_85] : memref<904x128xf32, #tpu.memory_space<vmem>>, vector<2x8xf32>
    %cst_86 = arith.constant dense<0.000000e+00> : vector<2x32xf32>
    %204 = tpu.matmul %203, %119, %cst_86 {dimension_numbers = #tpu.dot_dimension_numbers<[1], [0], [0], [1], [0, 0, 1, 1], [], []>} : vector<2x8xf32>, vector<8x32xf32>, vector<2x32xf32> -> vector<2x32xf32>
    %c680 = arith.constant 680 : index
    %c0_87 = arith.constant 0 : index
    %205 = vector.load %arg0[%c680, %c0_87] : memref<904x128xf32, #tpu.memory_space<vmem>>, vector<32x32xf32>
    %cst_88 = arith.constant dense<0.000000e+00> : vector<2x32xf32>
    %206 = tpu.matmul %202, %205, %cst_88 {dimension_numbers = #tpu.dot_dimension_numbers<[1], [0], [0], [1], [0, 0, 1, 1], [], []>} : vector<2x32xf32>, vector<32x32xf32>, vector<2x32xf32> -> vector<2x32xf32>
    %c48_89 = arith.constant 48 : index
    %c0_90 = arith.constant 0 : index
    %207 = vector.load %arg1[%c48_89, %c0_90] : memref<56x128xf32, #tpu.memory_space<vmem>>, vector<2x1xf32>
    %c712 = arith.constant 712 : index
    %c0_91 = arith.constant 0 : index
    %208 = vector.load %arg0[%c712, %c0_91] : memref<904x128xf32, #tpu.memory_space<vmem>>, vector<1x32xf32>
    %209 = vector.broadcast %207 : vector<2x1xf32> to vector<2x32xf32>
    %210 = vector.broadcast %208 : vector<1x32xf32> to vector<2x32xf32>
    %211 = arith.mulf %209, %210 : vector<2x32xf32>
    %212 = arith.addf %206, %211 : vector<2x32xf32>
    %c720 = arith.constant 720 : index
    %c0_92 = arith.constant 0 : index
    %213 = vector.load %arg0[%c720, %c0_92] : memref<904x128xf32, #tpu.memory_space<vmem>>, vector<32x32xf32>
    %cst_93 = arith.constant dense<0.000000e+00> : vector<2x32xf32>
    %214 = tpu.matmul %204, %213, %cst_93 {dimension_numbers = #tpu.dot_dimension_numbers<[1], [0], [0], [1], [0, 0, 1, 1], [], []>} : vector<2x32xf32>, vector<32x32xf32>, vector<2x32xf32> -> vector<2x32xf32>
    %215 = arith.addf %212, %214 : vector<2x32xf32>
    %c752 = arith.constant 752 : index
    %c0_94 = arith.constant 0 : index
    %216 = vector.load %arg0[%c752, %c0_94] : memref<904x128xf32, #tpu.memory_space<vmem>>, vector<1x32xf32>
    %217 = vector.broadcast %216 : vector<1x32xf32> to vector<2x32xf32>
    %218 = arith.addf %215, %217 : vector<2x32xf32>
    %c112 = arith.constant 112 : index
    %c0_95 = arith.constant 0 : index
    %219 = vector.load %arg0[%c112, %c0_95] : memref<904x128xf32, #tpu.memory_space<vmem>>, vector<2x16xf32>
    %cst_96 = arith.constant dense<0.000000e+00> : vector<2x32xf32>
    %220 = tpu.matmul %219, %120, %cst_96 {dimension_numbers = #tpu.dot_dimension_numbers<[1], [0], [0], [1], [0, 0, 1, 1], [], []>} : vector<2x16xf32>, vector<16x32xf32>, vector<2x32xf32> -> vector<2x32xf32>
    %c760 = arith.constant 760 : index
    %c0_97 = arith.constant 0 : index
    %221 = vector.load %arg0[%c760, %c0_97] : memref<904x128xf32, #tpu.memory_space<vmem>>, vector<32x32xf32>
    %cst_98 = arith.constant dense<0.000000e+00> : vector<2x32xf32>
    %222 = tpu.matmul %220, %221, %cst_98 {dimension_numbers = #tpu.dot_dimension_numbers<[1], [0], [0], [1], [0, 0, 1, 1], [], []>} : vector<2x32xf32>, vector<32x32xf32>, vector<2x32xf32> -> vector<2x32xf32>
    %c792 = arith.constant 792 : index
    %c0_99 = arith.constant 0 : index
    %223 = vector.load %arg0[%c792, %c0_99] : memref<904x128xf32, #tpu.memory_space<vmem>>, vector<32x32xf32>
    %cst_100 = arith.constant dense<0.000000e+00> : vector<2x32xf32>
    %224 = tpu.matmul %218, %223, %cst_100 {dimension_numbers = #tpu.dot_dimension_numbers<[1], [0], [0], [1], [0, 0, 1, 1], [], []>} : vector<2x32xf32>, vector<32x32xf32>, vector<2x32xf32> -> vector<2x32xf32>
    %225 = arith.addf %222, %224 : vector<2x32xf32>
    %c824 = arith.constant 824 : index
    %c0_101 = arith.constant 0 : index
    %226 = vector.load %arg0[%c824, %c0_101] : memref<904x128xf32, #tpu.memory_space<vmem>>, vector<1x32xf32>
    %227 = vector.broadcast %226 : vector<1x32xf32> to vector<2x32xf32>
    %228 = arith.addf %225, %227 : vector<2x32xf32>
    %c120 = arith.constant 120 : index
    %c0_102 = arith.constant 0 : index
    %229 = vector.load %arg0[%c120, %c0_102] : memref<904x128xf32, #tpu.memory_space<vmem>>, vector<2x2xf32>
    %230 = vector.extract_strided_slice %229 {offsets = [0, 0], sizes = [2, 1], strides = [1, 1]} : vector<2x2xf32> to vector<2x1xf32>
    %231 = vector.extract_strided_slice %228 {offsets = [0, 0], sizes = [1, 32], strides = [1, 1]} : vector<2x32xf32> to vector<1x32xf32>
    %232 = vector.broadcast %230 : vector<2x1xf32> to vector<2x32xf32>
    %233 = vector.broadcast %231 : vector<1x32xf32> to vector<2x32xf32>
    %234 = arith.mulf %232, %233 : vector<2x32xf32>
    %235 = vector.extract_strided_slice %229 {offsets = [0, 1], sizes = [2, 1], strides = [1, 1]} : vector<2x2xf32> to vector<2x1xf32>
    %236 = vector.extract_strided_slice %228 {offsets = [1, 0], sizes = [1, 32], strides = [1, 1]} : vector<2x32xf32> to vector<1x32xf32>
    %237 = vector.broadcast %235 : vector<2x1xf32> to vector<2x32xf32>
    %238 = vector.broadcast %236 : vector<1x32xf32> to vector<2x32xf32>
    %239 = arith.mulf %237, %238 : vector<2x32xf32>
    %240 = arith.addf %234, %239 : vector<2x32xf32>
    %241 = arith.addf %200, %240 : vector<2x32xf32>
    %c832 = arith.constant 832 : index
    %c0_103 = arith.constant 0 : index
    %242 = vector.load %arg0[%c832, %c0_103] : memref<904x128xf32, #tpu.memory_space<vmem>>, vector<1x32xf32>
    %243 = vector.broadcast %242 : vector<1x32xf32> to vector<2x32xf32>
    %244 = arith.mulf %241, %243 : vector<2x32xf32>
    %cst_104 = arith.constant dense<0.000000e+00> : vector<2xf32>
    %245 = vector.multi_reduction <add>, %244, %cst_104 [1] : vector<2x32xf32> to vector<2xf32>
    %246 = vector.shape_cast %245 : vector<2xf32> to vector<2x1xf32>
    %c840 = arith.constant 840 : index
    %c0_105 = arith.constant 0 : index
    %247 = vector.load %arg0[%c840, %c0_105] : memref<904x128xf32, #tpu.memory_space<vmem>>, vector<1x1xf32>
    %248 = vector.broadcast %247 : vector<1x1xf32> to vector<2x1xf32>
    %249 = arith.addf %246, %248 : vector<2x1xf32>
    %250 = math.tanh %249 : vector<2x1xf32>
    %cst_106 = arith.constant 1.000000e+01 : f32
    %251 = vector.broadcast %cst_106 : f32 to vector<2x1xf32>
    %252 = arith.mulf %250, %251 : vector<2x1xf32>
    %c848 = arith.constant 848 : index
    %c0_107 = arith.constant 0 : index
    %253 = vector.load %arg0[%c848, %c0_107] : memref<904x128xf32, #tpu.memory_space<vmem>>, vector<32x32xf32>
    %cst_108 = arith.constant dense<0.000000e+00> : vector<2x32xf32>
    %254 = tpu.matmul %121, %253, %cst_108 {dimension_numbers = #tpu.dot_dimension_numbers<[1], [0], [0], [1], [0, 0, 1, 1], [], []>} : vector<2x32xf32>, vector<32x32xf32>, vector<2x32xf32> -> vector<2x32xf32>
    %c880 = arith.constant 880 : index
    %c0_109 = arith.constant 0 : index
    %255 = vector.load %arg0[%c880, %c0_109] : memref<904x128xf32, #tpu.memory_space<vmem>>, vector<1x32xf32>
    %256 = vector.broadcast %255 : vector<1x32xf32> to vector<2x32xf32>
    %257 = arith.addf %254, %256 : vector<2x32xf32>
    %cst_110 = arith.constant 0.000000e+00 : f32
    %258 = vector.broadcast %cst_110 : f32 to vector<2x32xf32>
    %259 = arith.maximumf %257, %258 : vector<2x32xf32>
    %c888 = arith.constant 888 : index
    %c0_111 = arith.constant 0 : index
    %260 = vector.load %arg0[%c888, %c0_111] : memref<904x128xf32, #tpu.memory_space<vmem>>, vector<1x32xf32>
    %261 = vector.broadcast %260 : vector<1x32xf32> to vector<2x32xf32>
    %262 = arith.mulf %259, %261 : vector<2x32xf32>
    %cst_112 = arith.constant dense<0.000000e+00> : vector<2xf32>
    %263 = vector.multi_reduction <add>, %262, %cst_112 [1] : vector<2x32xf32> to vector<2xf32>
    %264 = vector.shape_cast %263 : vector<2xf32> to vector<2x1xf32>
    %c896 = arith.constant 896 : index
    %c0_113 = arith.constant 0 : index
    %265 = vector.load %arg0[%c896, %c0_113] : memref<904x128xf32, #tpu.memory_space<vmem>>, vector<1x1xf32>
    %266 = vector.broadcast %265 : vector<1x1xf32> to vector<2x1xf32>
    %267 = arith.addf %264, %266 : vector<2x1xf32>
    %268 = arith.negf %267 : vector<2x1xf32>
    %269 = math.exp %268 : vector<2x1xf32>
    %cst_114 = arith.constant 1.000000e+00 : f32
    %270 = vector.broadcast %cst_114 : f32 to vector<2x1xf32>
    %271 = arith.addf %270, %269 : vector<2x1xf32>
    %272 = arith.divf %270, %271 : vector<2x1xf32>
    %cst_115 = arith.constant 0.000000e+00 : f32
    %273 = vector.broadcast %cst_115 : f32 to vector<8x128xf32>
    %c0_116 = arith.constant 0 : index
    %c0_117 = arith.constant 0 : index
    %274 = vector.load %arg2[%c0_116, %c0_117] : memref<8x128xf32, #tpu.memory_space<vmem>>, vector<8x128xf32>
    tpu.vector_store %arg2[%c0_116, %c0_117], %273 {strides = array<i32>} : memref<8x128xf32, #tpu.memory_space<vmem>>, vector<8x128xf32>,
    %c0_118 = arith.constant 0 : index
    %c0_119 = arith.constant 0 : index
    %275 = vector.load %arg2[%c0_118, %c0_119] : memref<8x128xf32, #tpu.memory_space<vmem>>, vector<2x1xf32>
    tpu.vector_store %arg2[%c0_118, %c0_119], %252 {strides = array<i32>} : memref<8x128xf32, #tpu.memory_space<vmem>>, vector<2x1xf32>,
    %c0_120 = arith.constant 0 : index
    %c1 = arith.constant 1 : index
    %276 = vector.load %arg2[%c0_120, %c1] : memref<8x128xf32, #tpu.memory_space<vmem>>, vector<2x1xf32>
    tpu.vector_store %arg2[%c0_120, %c1], %272 {strides = array<i32>} : memref<8x128xf32, #tpu.memory_space<vmem>>, vector<2x1xf32>,
    return
  }
}

</mosaic_0001>

<llo_original>
// kernel: fwd.1
$region0: #{fwd.1}
  #allocation0 [shape = 'u32[]', space=smem, size = 0x4, offset = 0x4, fixed_abs, tag = 'smem constant byte address 0x4 - core index']
  #allocation1 [shape = 'u32[144,128]{1,0:T(1,128)}', space=vmem, size = 0x12000, scoped, tag = 'internal scratch']
  %s0 = inlined_call_operand.hbm [shape: f32[904,128], index: 0, kind: input, shape index: {}]
  %s1 = inlined_call_operand.vmem [shape: f32[56,128], index: 1, kind: input, shape index: {}]
  %s2 = inlined_call_operand.vmem [shape: f32[8,128], index: 2, kind: output, shape index: {}]
  %s3 = sld [smem:[#allocation0]]
  $region22: #{fwd.1} parent=0
    _
  %s5 = ssub.s32 1, %s3
  %s6 = scalar_select 0, %s5, %s3
  $region1: #{fwd.1} parent=0
    #allocation2 [shape = 'u8[462848]{0}', space=vmem, size = 0x71000, scoped, tag = 'input window, operand 0, single buffered']
    #allocation3 [shape = 's32[1]{0}', space=sflag, size = 0x4, scoped, tag = 'scoped memory for fwd.1']
    %7 = vsyncpa [#allocation3], 0
    // Predicated region
    $region2: #{fwd.1} parent=1 // pred_check
      _
    $region3: #{fwd.1} parent=1 // pred_check_branch
      %9 = sbr.rel (0) target = $region5
    $region4: #{fwd.1} parent=1 // pred_region
      %s11 = ssub.s32 14464, 14464
      %12 = vsyncadd [#allocation3], %s11
      %s13 = sshll.u32 [#allocation2], 4
      %s14 = int_to_ptr.vmem [resolvable:$true] %s13
      %19 = dma.hbm_to_vmem [thread:$0]  %s0, 14464, %s14, [#allocation3], 128, 128, 8
    $region5: #{fwd.1} parent=1 // pred_fallthru
      _
    // Predicated region
    $region6: #{fwd.1} parent=1 // pred_check
      _
    $region7: #{fwd.1} parent=1 // pred_check_branch
      %21 = sbr.rel (0) target = $region9
    $region8: #{fwd.1} parent=1 // pred_region
      _
    $region9: #{fwd.1} parent=1 // pred_fallthru
      _
    // Predicated region
    $region10: #{fwd.1} parent=1 // pred_check
      _
    $region11: #{fwd.1} parent=1 // pred_check_branch
      %23 = sbr.rel (0) target = $region13
    $region12: #{fwd.1} parent=1 // pred_region
      %24 = dma.done [#allocation3], 14464
    $region13: #{fwd.1} parent=1 // pred_fallthru
      _
    %v25 = vld [vmem:[#allocation2] sm:$0xff]
    %v26 = vld [vmem:[#allocation2 + $0x8] sm:$0xff]
    %v27 = vld [vmem:[#allocation2 + $0x10] sm:$0xff]
    %v28 = vld [vmem:[#allocation2 + $0x18] sm:$0xff]
    %v29 = vld [vmem:[#allocation2 + $0x20] sm:$0xff]
    %v30 = vld [vmem:[#allocation2 + $0x28] sm:$0x3]
    %v31 = vld [vmem:[#allocation2 + $0x30] sm:$0xff]
    %v32 = vld [vmem:[#allocation2 + $0x38] sm:$0xff]
    %v33 = vld [vmem:[%s1] sm:$0xff]
    %v34 = vld [vmem:[%s1 + $0x8] sm:$0xff]
    %v35 = vld [vmem:[%s1 + $0x10] sm:$0xff]
    %v36 = vld [vmem:[%s1 + $0x18] sm:$0x3]
    %vm37 = vcmask 64512
    %v39 = vsel %vm37, %v25, 0
    %v42 = vsel %vm37, %v26, 0
    %44 = vmatprep.subr.mxu0 0.0
    %45 = vmatpush1.msra.mxu0 %v33
    %46 = vmatprep.subr.mxu0 0.0
    %47 = vmatpush1.msra.mxu0 0.0
    %48 = vmatprep.subr.mxu0 0.0
    %49 = vmatpush1.msra.mxu0 0.0
    %50 = vmatprep.subr.mxu0 0.0
    %51 = vmatpush1.msra.mxu0 0.0
    %52 = vmatprep.subr.mxu0 0.0
    %53 = vmatpush1.msra.mxu0 0.0
    %54 = vmatprep.subr.mxu0 0.0
    %55 = vmatpush1.msra.mxu0 0.0
    %56 = vmatprep.subr.mxu0 0.0
    %57 = vmatpush1.msra.mxu0 0.0
    %58 = vmatprep.subr.mxu0 0.0
    %59 = vmatpush1.msra.mxu0 0.0
    %60 = vmatprep.subr.mxu0 0.0
    %61 = vmatpush1.msra.mxu0 0.0
    %62 = vmatprep.subr.mxu0 0.0
    %63 = vmatpush1.msra.mxu0 0.0
    %64 = vmatprep.subr.mxu0 0.0
    %65 = vmatpush1.msra.mxu0 0.0
    %66 = vmatprep.subr.mxu0 0.0
    %67 = vmatpush1.msra.mxu0 0.0
    %68 = vmatprep.subr.mxu0 0.0
    %69 = vmatpush1.msra.mxu0 0.0
    %70 = vmatprep.subr.mxu0 0.0
    %71 = vmatpush1.msra.mxu0 0.0
    %72 = vmatprep.subr.mxu0 0.0
    %73 = vmatpush1.msra.mxu0 0.0
    %74 = vmatprep.subr.mxu0 0.0
    %75 = vmatpush1.msra.mxu0 0.0
    %76 = vmatprep.subr.mxu0 0.0
    %77 = vmatpush1.msra.mxu0 0.0
    %78 = vmatprep.subr.mxu0 0.0
    %79 = vmatpush1.msra.mxu0 0.0
    %80 = vmatprep.subr.mxu0 0.0
    %81 = vmatpush1.msra.mxu0 0.0
    %82 = vmatprep.subr.mxu0 0.0
    %83 = vmatpush1.msra.mxu0 0.0
    %84 = vmatprep.subr.mxu0 0.0
    %85 = vmatpush1.msra.mxu0 0.0
    %86 = vmatprep.subr.mxu0 0.0
    %87 = vmatpush1.msra.mxu0 0.0
    %88 = vmatprep.subr.mxu0 0.0
    %89 = vmatpush1.msra.mxu0 0.0
    %90 = vmatprep.subr.mxu0 0.0
    %91 = vmatpush1.msra.mxu0 0.0
    %92 = vmatprep.subr.mxu0 0.0
    %93 = vmatpush1.msra.mxu0 0.0
    %94 = vmatprep.subr.mxu0 0.0
    %95 = vmatpush1.msra.mxu0 0.0
    %96 = vmatprep.subr.mxu0 0.0
    %97 = vmatpush1.msra.mxu0 0.0
    %98 = vmatprep.subr.mxu0 0.0
    %99 = vmatpush1.msra.mxu0 0.0
    %100 = vmatprep.subr.mxu0 0.0
    %101 = vmatpush1.msra.mxu0 0.0
    %102 = vmatprep.subr.mxu0 0.0
    %103 = vmatpush1.msra.mxu0 0.0
    %104 = vmatprep.subr.mxu0 0.0
    %105 = vmatpush1.msra.mxu0 0.0
    %106 = vmatprep.subr.mxu0 0.0
    %107 = vmatpush1.msra.mxu0 0.0
    %108 = vmatprep.mubr.f32.mxu0 0.0
    %109 = vmatmul.mubr.f32.gmra.mrb[0].mxu0 %v39
    %v110 = vpop.f32.mrb[0].mxu0
    %v111 = vadd.f32 0.0, %v110
    %v112 = vpop.f32.mrb[0].mxu0
    %113 = vmatprep.mubr.f32.mxu0 0.0
    %114 = vmatmul.mubr.f32.gmra.mrb[0].mxu0 %v42
    %v115 = vpop.f32.mrb[0].mxu0
    %v116 = vadd.f32 0.0, %v115
    %v117 = vpop.f32.mrb[0].mxu0
    %118 = vdwg.mxu0
    %v119 = vld [vmem:[#allocation2 + $0x80] sm:$0x7f]
    %v120 = vld [vmem:[#allocation2 + $0x88] sm:$0x1f]
    %vm121 = vcmask 39936
    %v123 = vsel %vm121, %v34, 0
    %v126 = vsel %vm121, %v35, 0
    %vm128 = vcmask 1044480
    %v130 = vsel %vm128, %v120, 0
    %132 = vmatprep.subr.mxu0 0.0
    %133 = vmatpush1.msra.mxu0 %v130
    %134 = vmatprep.subr.mxu0 0.0
    %135 = vmatpush1.msra.mxu0 0.0
    %136 = vmatprep.subr.mxu0 0.0
    %137 = vmatpush1.msra.mxu0 0.0
    %138 = vmatprep.subr.mxu0 0.0
    %139 = vmatpush1.msra.mxu0 0.0
    %140 = vmatprep.subr.mxu0 0.0
    %141 = vmatpush1.msra.mxu0 0.0
    %142 = vmatprep.subr.mxu0 0.0
    %143 = vmatpush1.msra.mxu0 0.0
    %144 = vmatprep.subr.mxu0 0.0
    %145 = vmatpush1.msra.mxu0 0.0
    %146 = vmatprep.subr.mxu0 0.0
    %147 = vmatpush1.msra.mxu0 0.0
    %148 = vmatprep.subr.mxu0 0.0
    %149 = vmatpush1.msra.mxu0 0.0
    %150 = vmatprep.subr.mxu0 0.0
    %151 = vmatpush1.msra.mxu0 0.0
    %152 = vmatprep.subr.mxu0 0.0
    %153 = vmatpush1.msra.mxu0 0.0
    %154 = vmatprep.subr.mxu0 0.0
    %155 = vmatpush1.msra.mxu0 0.0
    %156 = vmatprep.subr.mxu0 0.0
    %157 = vmatpush1.msra.mxu0 0.0
    %158 = vmatprep.subr.mxu0 0.0
    %159 = vmatpush1.msra.mxu0 0.0
    %160 = vmatprep.subr.mxu0 0.0
    %161 = vmatpush1.msra.mxu0 0.0
    %162 = vmatprep.subr.mxu0 0.0
    %163 = vmatpush1.msra.mxu0 0.0
    %164 = vmatprep.subr.mxu0 0.0
    %165 = vmatpush1.msra.mxu0 0.0
    %166 = vmatprep.subr.mxu0 0.0
    %167 = vmatpush1.msra.mxu0 0.0
    %168 = vmatprep.subr.mxu0 0.0
    %169 = vmatpush1.msra.mxu0 0.0
    %170 = vmatprep.subr.mxu0 0.0
    %171 = vmatpush1.msra.mxu0 0.0
    %172 = vmatprep.subr.mxu0 0.0
    %173 = vmatpush1.msra.mxu0 0.0
    %174 = vmatprep.subr.mxu0 0.0
    %175 = vmatpush1.msra.mxu0 0.0
    %176 = vmatprep.subr.mxu0 0.0
    %177 = vmatpush1.msra.mxu0 0.0
    %178 = vmatprep.subr.mxu0 0.0
    %179 = vmatpush1.msra.mxu0 0.0
    %180 = vmatprep.subr.mxu0 0.0
    %181 = vmatpush1.msra.mxu0 0.0
    %182 = vmatprep.subr.mxu0 0.0
    %183 = vmatpush1.msra.mxu0 0.0
    %184 = vmatprep.subr.mxu0 0.0
    %185 = vmatpush1.msra.mxu0 0.0
    %186 = vmatprep.subr.mxu0 0.0
    %187 = vmatpush1.msra.mxu0 0.0
    %188 = vmatprep.subr.mxu0 0.0
    %189 = vmatpush1.msra.mxu0 0.0
    %190 = vmatprep.subr.mxu0 0.0
    %191 = vmatpush1.msra.mxu0 0.0
    %192 = vmatprep.subr.mxu0 0.0
    %193 = vmatpush1.msra.mxu0 0.0
    %194 = vmatprep.subr.mxu0 0.0
    %195 = vmatpush1.msra.mxu0 0.0
    %196 = vmatprep.mubr.f32.mxu0 0.0
    %197 = vmatmul.mubr.f32.gmra.mrb[0].mxu0 %v123
    %v198 = vpop.f32.mrb[0].mxu0
    %v199 = vadd.f32 0.0, %v198
    %v200 = vpop.f32.mrb[0].mxu0
    %201 = vmatprep.mubr.f32.mxu0 0.0
    %202 = vmatmul.mubr.f32.gmra.mrb[0].mxu0 %v126
    %v203 = vpop.f32.mrb[0].mxu0
    %v204 = vadd.f32 0.0, %v203
    %v205 = vpop.f32.mrb[0].mxu0
    %206 = vdwg.mxu0
    %vm207 = vcmask 56320
    %v209 = vsel %vm207, %v111, 0
    %v212 = vsel %vm207, %v116, 0
    %vm214 = vcmask 1046528
    %v216 = vsel %vm214, %v119, 0
    %218 = vmatprep.subr.mxu0 0.0
    %219 = vmatpush1.msra.mxu0 %v216
    %220 = vmatprep.subr.mxu0 0.0
    %221 = vmatpush1.msra.mxu0 0.0
    %222 = vmatprep.subr.mxu0 0.0
    %223 = vmatpush1.msra.mxu0 0.0
    %224 = vmatprep.subr.mxu0 0.0
    %225 = vmatpush1.msra.mxu0 0.0
    %226 = vmatprep.subr.mxu0 0.0
    %227 = vmatpush1.msra.mxu0 0.0
    %228 = vmatprep.subr.mxu0 0.0
    %229 = vmatpush1.msra.mxu0 0.0
    %230 = vmatprep.subr.mxu0 0.0
    %231 = vmatpush1.msra.mxu0 0.0
    %232 = vmatprep.subr.mxu0 0.0
    %233 = vmatpush1.msra.mxu0 0.0
    %234 = vmatprep.subr.mxu0 0.0
    %235 = vmatpush1.msra.mxu0 0.0
    %236 = vmatprep.subr.mxu0 0.0
    %237 = vmatpush1.msra.mxu0 0.0
    %238 = vmatprep.subr.mxu0 0.0
    %239 = vmatpush1.msra.mxu0 0.0
    %240 = vmatprep.subr.mxu0 0.0
    %241 = vmatpush1.msra.mxu0 0.0
    %242 = vmatprep.subr.mxu0 0.0
    %243 = vmatpush1.msra.mxu0 0.0
    %244 = vmatprep.subr.mxu0 0.0
    %245 = vmatpush1.msra.mxu0 0.0
    %246 = vmatprep.subr.mxu0 0.0
    %247 = vmatpush1.msra.mxu0 0.0
    %248 = vmatprep.subr.mxu0 0.0
    %249 = vmatpush1.msra.mxu0 0.0
    %250 = vmatprep.subr.mxu0 0.0
    %251 = vmatpush1.msra.mxu0 0.0
    %252 = vmatprep.subr.mxu0 0.0
    %253 = vmatpush1.msra.mxu0 0.0
    %254 = vmatprep.subr.mxu0 0.0
    %255 = vmatpush1.msra.mxu0 0.0
    %256 = vmatprep.subr.mxu0 0.0
    %257 = vmatpush1.msra.mxu0 0.0
    %258 = vmatprep.subr.mxu0 0.0
    %259 = vmatpush1.msra.mxu0 0.0
    %260 = vmatprep.subr.mxu0 0.0
    %261 = vmatpush1.msra.mxu0 0.0
    %262 = vmatprep.subr.mxu0 0.0
    %263 = vmatpush1.msra.mxu0 0.0
    %264 = vmatprep.subr.mxu0 0.0
    %265 = vmatpush1.msra.mxu0 0.0
    %266 = vmatprep.subr.mxu0 0.0
    %267 = vmatpush1.msra.mxu0 0.0
    %268 = vmatprep.subr.mxu0 0.0
    %269 = vmatpush1.msra.mxu0 0.0
    %270 = vmatprep.subr.mxu0 0.0
    %271 = vmatpush1.msra.mxu0 0.0
    %272 = vmatprep.subr.mxu0 0.0
    %273 = vmatpush1.msra.mxu0 0.0
    %274 = vmatprep.subr.mxu0 0.0
    %275 = vmatpush1.msra.mxu0 0.0
    %276 = vmatprep.subr.mxu0 0.0
    %277 = vmatpush1.msra.mxu0 0.0
    %278 = vmatprep.subr.mxu0 0.0
    %279 = vmatpush1.msra.mxu0 0.0
    %280 = vmatprep.subr.mxu0 0.0
    %281 = vmatpush1.msra.mxu0 0.0
    %282 = vmatprep.mubr.f32.mxu0 0.0
    %283 = vmatmul.mubr.f32.gmra.mrb[0].mxu0 %v209
    %v284 = vpop.f32.mrb[0].mxu0
    %v285 = vadd.f32 %v199, %v284
    %v286 = vpop.f32.mrb[0].mxu0
    %287 = vmatprep.mubr.f32.mxu0 0.0
    %288 = vmatmul.mubr.f32.gmra.mrb[0].mxu0 %v212
    %v289 = vpop.f32.mrb[0].mxu0
    %v290 = vadd.f32 %v204, %v289
    %v291 = vpop.f32.mrb[0].mxu0
    %292 = vdwg.mxu0
    %v293 = vld [vmem:[#allocation2 + $0x90] sm:$0x1]
    %v294 = vlaneseq
    %v295 = vshrl.u32 %v294, 7
    %v296 = vsub.s32 0, %v295
    %v297 = vrot.slane %v293, %v296
    %v298 = vadd.f32 %v285, %v297
    %v299 = vadd.f32 %v290, %v297
    %v300 = vmax.f32 %v298, 0.0
    %v301 = vmax.f32 %v299, 0.0
    %v303 = vsel %vm37, %v27, 0
    %v306 = vsel %vm37, %v28, 0
    %308 = vmatprep.subr.mxu0 0.0
    %309 = vmatpush1.msra.mxu0 %v33
    %310 = vmatprep.subr.mxu0 0.0
    %311 = vmatpush1.msra.mxu0 0.0
    %312 = vmatprep.subr.mxu0 0.0
    %313 = vmatpush1.msra.mxu0 0.0
    %314 = vmatprep.subr.mxu0 0.0
    %315 = vmatpush1.msra.mxu0 0.0
    %316 = vmatprep.subr.mxu0 0.0
    %317 = vmatpush1.msra.mxu0 0.0
    %318 = vmatprep.subr.mxu0 0.0
    %319 = vmatpush1.msra.mxu0 0.0
    %320 = vmatprep.subr.mxu0 0.0
    %321 = vmatpush1.msra.mxu0 0.0
    %322 = vmatprep.subr.mxu0 0.0
    %323 = vmatpush1.msra.mxu0 0.0
    %324 = vmatprep.subr.mxu0 0.0
    %325 = vmatpush1.msra.mxu0 0.0
    %326 = vmatprep.subr.mxu0 0.0
    %327 = vmatpush1.msra.mxu0 0.0
    %328 = vmatprep.subr.mxu0 0.0
    %329 = vmatpush1.msra.mxu0 0.0
    %330 = vmatprep.subr.mxu0 0.0
    %331 = vmatpush1.msra.mxu0 0.0
    %332 = vmatprep.subr.mxu0 0.0
    %333 = vmatpush1.msra.mxu0 0.0
    %334 = vmatprep.subr.mxu0 0.0
    %335 = vmatpush1.msra.mxu0 0.0
    %336 = vmatprep.subr.mxu0 0.0
    %337 = vmatpush1.msra.mxu0 0.0
    %338 = vmatprep.subr.mxu0 0.0
    %339 = vmatpush1.msra.mxu0 0.0
    %340 = vmatprep.subr.mxu0 0.0
    %341 = vmatpush1.msra.mxu0 0.0
    %342 = vmatprep.subr.mxu0 0.0
    %343 = vmatpush1.msra.mxu0 0.0
    %344 = vmatprep.subr.mxu0 0.0
    %345 = vmatpush1.msra.mxu0 0.0
    %346 = vmatprep.subr.mxu0 0.0
    %347 = vmatpush1.msra.mxu0 0.0
    %348 = vmatprep.subr.mxu0 0.0
    %349 = vmatpush1.msra.mxu0 0.0
    %350 = vmatprep.subr.mxu0 0.0
    %351 = vmatpush1.msra.mxu0 0.0
    %352 = vmatprep.subr.mxu0 0.0
    %353 = vmatpush1.msra.mxu0 0.0
    %354 = vmatprep.subr.mxu0 0.0
    %355 = vmatpush1.msra.mxu0 0.0
    %356 = vmatprep.subr.mxu0 0.0
    %357 = vmatpush1.msra.mxu0 0.0
    %358 = vmatprep.subr.mxu0 0.0
    %359 = vmatpush1.msra.mxu0 0.0
    %360 = vmatprep.subr.mxu0 0.0
    %361 = vmatpush1.msra.mxu0 0.0
    %362 = vmatprep.subr.mxu0 0.0
    %363 = vmatpush1.msra.mxu0 0.0
    %364 = vmatprep.subr.mxu0 0.0
    %365 = vmatpush1.msra.mxu0 0.0
    %366 = vmatprep.subr.mxu0 0.0
    %367 = vmatpush1.msra.mxu0 0.0
    %368 = vmatprep.subr.mxu0 0.0
    %369 = vmatpush1.msra.mxu0 0.0
    %370 = vmatprep.subr.mxu0 0.0
    %371 = vmatpush1.msra.mxu0 0.0
    %372 = vmatprep.mubr.f32.mxu0 0.0
    %373 = vmatmul.mubr.f32.gmra.mrb[0].mxu0 %v303
    %v374 = vpop.f32.mrb[0].mxu0
    %v375 = vadd.f32 0.0, %v374
    %v376 = vpop.f32.mrb[0].mxu0
    %377 = vmatprep.mubr.f32.mxu0 0.0
    %378 = vmatmul.mubr.f32.gmra.mrb[0].mxu0 %v306
    %v379 = vpop.f32.mrb[0].mxu0
    %v380 = vadd.f32 0.0, %v379
    %v381 = vpop.f32.mrb[0].mxu0
    %382 = vdwg.mxu0
    %v383 = vld [vmem:[#allocation2 + $0x98] sm:$0x7f]
    %v384 = vld [vmem:[#allocation2 + $0xa0] sm:$0xff]
    %v385 = vld [vmem:[#allocation2 + $0xa8] sm:$0xff]
    %v386 = vld [vmem:[#allocation2 + $0xb0] sm:$0xff]
    %v387 = vld [vmem:[#allocation2 + $0xb8] sm:$0xff]
    %vm388 = vcmask 261120
    %v390 = vsel %vm388, %v300, 0
    %v393 = vsel %vm388, %v301, 0
    %395 = vmatprep.subr.mxu0 0.0
    %396 = vmatpush1.msra.mxu0 %v384
    %397 = vmatprep.subr.mxu0 0.0
    %398 = vmatpush1.msra.mxu0 %v385
    %399 = vmatprep.subr.mxu0 0.0
    %400 = vmatpush1.msra.mxu0 %v386
    %401 = vmatprep.subr.mxu0 0.0
    %402 = vmatpush1.msra.mxu0 %v387
    %403 = vmatprep.subr.mxu0 0.0
    %404 = vmatpush1.msra.mxu0 0.0
    %405 = vmatprep.subr.mxu0 0.0
    %406 = vmatpush1.msra.mxu0 0.0
    %407 = vmatprep.subr.mxu0 0.0
    %408 = vmatpush1.msra.mxu0 0.0
    %409 = vmatprep.subr.mxu0 0.0
    %410 = vmatpush1.msra.mxu0 0.0
    %411 = vmatprep.subr.mxu0 0.0
    %412 = vmatpush1.msra.mxu0 0.0
    %413 = vmatprep.subr.mxu0 0.0
    %414 = vmatpush1.msra.mxu0 0.0
    %415 = vmatprep.subr.mxu0 0.0
    %416 = vmatpush1.msra.mxu0 0.0
    %417 = vmatprep.subr.mxu0 0.0
    %418 = vmatpush1.msra.mxu0 0.0
    %419 = vmatprep.subr.mxu0 0.0
    %420 = vmatpush1.msra.mxu0 0.0
    %421 = vmatprep.subr.mxu0 0.0
    %422 = vmatpush1.msra.mxu0 0.0
    %423 = vmatprep.subr.mxu0 0.0
    %424 = vmatpush1.msra.mxu0 0.0
    %425 = vmatprep.subr.mxu0 0.0
    %426 = vmatpush1.msra.mxu0 0.0
    %427 = vmatprep.subr.mxu0 0.0
    %428 = vmatpush1.msra.mxu0 0.0
    %429 = vmatprep.subr.mxu0 0.0
    %430 = vmatpush1.msra.mxu0 0.0
    %431 = vmatprep.subr.mxu0 0.0
    %432 = vmatpush1.msra.mxu0 0.0
    %433 = vmatprep.subr.mxu0 0.0
    %434 = vmatpush1.msra.mxu0 0.0
    %435 = vmatprep.subr.mxu0 0.0
    %436 = vmatpush1.msra.mxu0 0.0
    %437 = vmatprep.subr.mxu0 0.0
    %438 = vmatpush1.msra.mxu0 0.0
    %439 = vmatprep.subr.mxu0 0.0
    %440 = vmatpush1.msra.mxu0 0.0
    %441 = vmatprep.subr.mxu0 0.0
    %442 = vmatpush1.msra.mxu0 0.0
    %443 = vmatprep.subr.mxu0 0.0
    %444 = vmatpush1.msra.mxu0 0.0
    %445 = vmatprep.subr.mxu0 0.0
    %446 = vmatpush1.msra.mxu0 0.0
    %447 = vmatprep.subr.mxu0 0.0
    %448 = vmatpush1.msra.mxu0 0.0
    %449 = vmatprep.subr.mxu0 0.0
    %450 = vmatpush1.msra.mxu0 0.0
    %451 = vmatprep.subr.mxu0 0.0
    %452 = vmatpush1.msra.mxu0 0.0
    %453 = vmatprep.subr.mxu0 0.0
    %454 = vmatpush1.msra.mxu0 0.0
    %455 = vmatprep.subr.mxu0 0.0
    %456 = vmatpush1.msra.mxu0 0.0
    %457 = vmatprep.subr.mxu0 0.0
    %458 = vmatpush1.msra.mxu0 0.0
    %459 = vmatprep.mubr.f32.mxu0 0.0
    %460 = vmatmul.mubr.f32.gmra.mrb[0].mxu0 %v390
    %v461 = vpop.f32.mrb[0].mxu0
    %v462 = vadd.f32 0.0, %v461
    %v463 = vpop.f32.mrb[0].mxu0
    %464 = vmatprep.mubr.f32.mxu0 0.0
    %465 = vmatmul.mubr.f32.gmra.mrb[0].mxu0 %v393
    %v466 = vpop.f32.mrb[0].mxu0
    %v467 = vadd.f32 0.0, %v466
    %v468 = vpop.f32.mrb[0].mxu0
    %469 = vdwg.mxu0
    %v471 = vsel %vm207, %v375, 0
    %v474 = vsel %vm207, %v380, 0
    %v477 = vsel %vm214, %v383, 0
    %479 = vmatprep.subr.mxu0 0.0
    %480 = vmatpush1.msra.mxu0 %v477
    %481 = vmatprep.subr.mxu0 0.0
    %482 = vmatpush1.msra.mxu0 0.0
    %483 = vmatprep.subr.mxu0 0.0
    %484 = vmatpush1.msra.mxu0 0.0
    %485 = vmatprep.subr.mxu0 0.0
    %486 = vmatpush1.msra.mxu0 0.0
    %487 = vmatprep.subr.mxu0 0.0
    %488 = vmatpush1.msra.mxu0 0.0
    %489 = vmatprep.subr.mxu0 0.0
    %490 = vmatpush1.msra.mxu0 0.0
    %491 = vmatprep.subr.mxu0 0.0
    %492 = vmatpush1.msra.mxu0 0.0
    %493 = vmatprep.subr.mxu0 0.0
    %494 = vmatpush1.msra.mxu0 0.0
    %495 = vmatprep.subr.mxu0 0.0
    %496 = vmatpush1.msra.mxu0 0.0
    %497 = vmatprep.subr.mxu0 0.0
    %498 = vmatpush1.msra.mxu0 0.0
    %499 = vmatprep.subr.mxu0 0.0
    %500 = vmatpush1.msra.mxu0 0.0
    %501 = vmatprep.subr.mxu0 0.0
    %502 = vmatpush1.msra.mxu0 0.0
    %503 = vmatprep.subr.mxu0 0.0
    %504 = vmatpush1.msra.mxu0 0.0
    %505 = vmatprep.subr.mxu0 0.0
    %506 = vmatpush1.msra.mxu0 0.0
    %507 = vmatprep.subr.mxu0 0.0
    %508 = vmatpush1.msra.mxu0 0.0
    %509 = vmatprep.subr.mxu0 0.0
    %510 = vmatpush1.msra.mxu0 0.0
    %511 = vmatprep.subr.mxu0 0.0
    %512 = vmatpush1.msra.mxu0 0.0
    %513 = vmatprep.subr.mxu0 0.0
    %514 = vmatpush1.msra.mxu0 0.0
    %515 = vmatprep.subr.mxu0 0.0
    %516 = vmatpush1.msra.mxu0 0.0
    %517 = vmatprep.subr.mxu0 0.0
    %518 = vmatpush1.msra.mxu0 0.0
    %519 = vmatprep.subr.mxu0 0.0
    %520 = vmatpush1.msra.mxu0 0.0
    %521 = vmatprep.subr.mxu0 0.0
    %522 = vmatpush1.msra.mxu0 0.0
    %523 = vmatprep.subr.mxu0 0.0
    %524 = vmatpush1.msra.mxu0 0.0
    %525 = vmatprep.subr.mxu0 0.0
    %526 = vmatpush1.msra.mxu0 0.0
    %527 = vmatprep.subr.mxu0 0.0
    %528 = vmatpush1.msra.mxu0 0.0
    %529 = vmatprep.subr.mxu0 0.0
    %530 = vmatpush1.msra.mxu0 0.0
    %531 = vmatprep.subr.mxu0 0.0
    %532 = vmatpush1.msra.mxu0 0.0
    %533 = vmatprep.subr.mxu0 0.0
    %534 = vmatpush1.msra.mxu0 0.0
    %535 = vmatprep.subr.mxu0 0.0
    %536 = vmatpush1.msra.mxu0 0.0
    %537 = vmatprep.subr.mxu0 0.0
    %538 = vmatpush1.msra.mxu0 0.0
    %539 = vmatprep.subr.mxu0 0.0
    %540 = vmatpush1.msra.mxu0 0.0
    %541 = vmatprep.subr.mxu0 0.0
    %542 = vmatpush1.msra.mxu0 0.0
    %543 = vmatprep.mubr.f32.mxu0 0.0
    %544 = vmatmul.mubr.f32.gmra.mrb[0].mxu0 %v471
    %v545 = vpop.f32.mrb[0].mxu0
    %v546 = vadd.f32 %v462, %v545
    %v547 = vpop.f32.mrb[0].mxu0
    %548 = vmatprep.mubr.f32.mxu0 0.0
    %549 = vmatmul.mubr.f32.gmra.mrb[0].mxu0 %v474
    %v550 = vpop.f32.mrb[0].mxu0
    %v551 = vadd.f32 %v467, %v550
    %v552 = vpop.f32.mrb[0].mxu0
    %553 = vdwg.mxu0
    %v554 = vld [vmem:[#allocation2 + $0xc0] sm:$0x1]
    %v555 = vlaneseq
    %v556 = vshrl.u32 %v555, 7
    %v557 = vsub.s32 0, %v556
    %v558 = vrot.slane %v554, %v557
    %v559 = vadd.f32 %v546, %v558
    %v560 = vadd.f32 %v551, %v558
    %vm561 = vcmask 130048
    %v563 = vsel %vm561, %v31, 0
    %565 = vmatprep.subr.mxu0 0.0
    %566 = vmatpush1.msra.mxu0 %v559
    %567 = vmatprep.subr.mxu0 0.0
    %568 = vmatpush1.msra.mxu0 %v560
    %569 = vmatprep.subr.mxu0 0.0
    %570 = vmatpush1.msra.mxu0 0.0
    %571 = vmatprep.subr.mxu0 0.0
    %572 = vmatpush1.msra.mxu0 0.0
    %573 = vmatprep.subr.mxu0 0.0
    %574 = vmatpush1.msra.mxu0 0.0
    %575 = vmatprep.subr.mxu0 0.0
    %576 = vmatpush1.msra.mxu0 0.0
    %577 = vmatprep.subr.mxu0 0.0
    %578 = vmatpush1.msra.mxu0 0.0
    %579 = vmatprep.subr.mxu0 0.0
    %580 = vmatpush1.msra.mxu0 0.0
    %581 = vmatprep.subr.mxu0 0.0
    %582 = vmatpush1.msra.mxu0 0.0
    %583 = vmatprep.subr.mxu0 0.0
    %584 = vmatpush1.msra.mxu0 0.0
    %585 = vmatprep.subr.mxu0 0.0
    %586 = vmatpush1.msra.mxu0 0.0
    %587 = vmatprep.subr.mxu0 0.0
    %588 = vmatpush1.msra.mxu0 0.0
    %589 = vmatprep.subr.mxu0 0.0
    %590 = vmatpush1.msra.mxu0 0.0
    %591 = vmatprep.subr.mxu0 0.0
    %592 = vmatpush1.msra.mxu0 0.0
    %593 = vmatprep.subr.mxu0 0.0
    %594 = vmatpush1.msra.mxu0 0.0
    %595 = vmatprep.subr.mxu0 0.0
    %596 = vmatpush1.msra.mxu0 0.0
    %597 = vmatprep.subr.mxu0 0.0
    %598 = vmatpush1.msra.mxu0 0.0
    %599 = vmatprep.subr.mxu0 0.0
    %600 = vmatpush1.msra.mxu0 0.0
    %601 = vmatprep.subr.mxu0 0.0
    %602 = vmatpush1.msra.mxu0 0.0
    %603 = vmatprep.subr.mxu0 0.0
    %604 = vmatpush1.msra.mxu0 0.0
    %605 = vmatprep.subr.mxu0 0.0
    %606 = vmatpush1.msra.mxu0 0.0
    %607 = vmatprep.subr.mxu0 0.0
    %608 = vmatpush1.msra.mxu0 0.0
    %609 = vmatprep.subr.mxu0 0.0
    %610 = vmatpush1.msra.mxu0 0.0
    %611 = vmatprep.subr.mxu0 0.0
    %612 = vmatpush1.msra.mxu0 0.0
    %613 = vmatprep.subr.mxu0 0.0
    %614 = vmatpush1.msra.mxu0 0.0
    %615 = vmatprep.subr.mxu0 0.0
    %616 = vmatpush1.msra.mxu0 0.0
    %617 = vmatprep.subr.mxu0 0.0
    %618 = vmatpush1.msra.mxu0 0.0
    %619 = vmatprep.subr.mxu0 0.0
    %620 = vmatpush1.msra.mxu0 0.0
    %621 = vmatprep.subr.mxu0 0.0
    %622 = vmatpush1.msra.mxu0 0.0
    %623 = vmatprep.subr.mxu0 0.0
    %624 = vmatpush1.msra.mxu0 0.0
    %625 = vmatprep.subr.mxu0 0.0
    %626 = vmatpush1.msra.mxu0 0.0
    %627 = vmatprep.subr.mxu0 0.0
    %628 = vmatpush1.msra.mxu0 0.0
    %629 = vmatprep.mubr.f32.mxu0 0.0
    %630 = vmatmul.mubr.f32.gmra.mrb[0].mxu0 %v563
    %v631 = vpop.f32.mrb[0].mxu0
    %v632 = vadd.f32 0.0, %v631
    %v633 = vpop.f32.mrb[0].mxu0
    %634 = vdwg.mxu0
    %v636 = vsel %vm561, %v32, 0
    %638 = vmatprep.subr.mxu0 0.0
    %639 = vmatpush1.msra.mxu0 %v559
    %640 = vmatprep.subr.mxu0 0.0
    %641 = vmatpush1.msra.mxu0 %v560
    %642 = vmatprep.subr.mxu0 0.0
    %643 = vmatpush1.msra.mxu0 0.0
    %644 = vmatprep.subr.mxu0 0.0
    %645 = vmatpush1.msra.mxu0 0.0
    %646 = vmatprep.subr.mxu0 0.0
    %647 = vmatpush1.msra.mxu0 0.0
    %648 = vmatprep.subr.mxu0 0.0
    %649 = vmatpush1.msra.mxu0 0.0
    %650 = vmatprep.subr.mxu0 0.0
    %651 = vmatpush1.msra.mxu0 0.0
    %652 = vmatprep.subr.mxu0 0.0
    %653 = vmatpush1.msra.mxu0 0.0
    %654 = vmatprep.subr.mxu0 0.0
    %655 = vmatpush1.msra.mxu0 0.0
    %656 = vmatprep.subr.mxu0 0.0
    %657 = vmatpush1.msra.mxu0 0.0
    %658 = vmatprep.subr.mxu0 0.0
    %659 = vmatpush1.msra.mxu0 0.0
    %660 = vmatprep.subr.mxu0 0.0
    %661 = vmatpush1.msra.mxu0 0.0
    %662 = vmatprep.subr.mxu0 0.0
    %663 = vmatpush1.msra.mxu0 0.0
    %664 = vmatprep.subr.mxu0 0.0
    %665 = vmatpush1.msra.mxu0 0.0
    %666 = vmatprep.subr.mxu0 0.0
    %667 = vmatpush1.msra.mxu0 0.0
    %668 = vmatprep.subr.mxu0 0.0
    %669 = vmatpush1.msra.mxu0 0.0
    %670 = vmatprep.subr.mxu0 0.0
    %671 = vmatpush1.msra.mxu0 0.0
    %672 = vmatprep.subr.mxu0 0.0
    %673 = vmatpush1.msra.mxu0 0.0
    %674 = vmatprep.subr.mxu0 0.0
    %675 = vmatpush1.msra.mxu0 0.0
    %676 = vmatprep.subr.mxu0 0.0
    %677 = vmatpush1.msra.mxu0 0.0
    %678 = vmatprep.subr.mxu0 0.0
    %679 = vmatpush1.msra.mxu0 0.0
    %680 = vmatprep.subr.mxu0 0.0
    %681 = vmatpush1.msra.mxu0 0.0
    %682 = vmatprep.subr.mxu0 0.0
    %683 = vmatpush1.msra.mxu0 0.0
    %684 = vmatprep.subr.mxu0 0.0
    %685 = vmatpush1.msra.mxu0 0.0
    %686 = vmatprep.subr.mxu0 0.0
    %687 = vmatpush1.msra.mxu0 0.0
    %688 = vmatprep.subr.mxu0 0.0
    %689 = vmatpush1.msra.mxu0 0.0
    %690 = vmatprep.subr.mxu0 0.0
    %691 = vmatpush1.msra.mxu0 0.0
    %692 = vmatprep.subr.mxu0 0.0
    %693 = vmatpush1.msra.mxu0 0.0
    %694 = vmatprep.subr.mxu0 0.0
    %695 = vmatpush1.msra.mxu0 0.0
    %696 = vmatprep.subr.mxu0 0.0
    %697 = vmatpush1.msra.mxu0 0.0
    %698 = vmatprep.subr.mxu0 0.0
    %699 = vmatpush1.msra.mxu0 0.0
    %700 = vmatprep.subr.mxu0 0.0
    %701 = vmatpush1.msra.mxu0 0.0
    %702 = vmatprep.mubr.f32.mxu0 0.0
    %703 = vmatmul.mubr.f32.gmra.mrb[0].mxu0 %v636
    %v704 = vpop.f32.mrb[0].mxu0
    %v705 = vadd.f32 0.0, %v704
    %v706 = vpop.f32.mrb[0].mxu0
    %707 = vdwg.mxu0
    %v708 = vmax.f32 %v632, %v705
    %710 = vset.pattern.permute.xlu0 0
    %711 = vperm.xlu0 %710, %v29
    %v712 = vpop.permute.xlu0 %711
    %v714 = vlaneseq
    %v715 = vshrl.u32 %v714, 7
    %v716 = vsub.s32 0, %v715
    %v717 = vrot.slane %v36, %v716
    %v718 = vmul.f32 %v712, %v717
    %719 = vset.pattern.permute.xlu0 1
    %720 = vperm.xlu0 %719, %v29
    %v721 = vpop.permute.xlu0 %720
    %v723 = vlaneseq
    %v724 = vshrl.u32 %v723, 7
    %v725 = vsub.s32 1, %v724
    %v726 = vrot.slane %v36, %v725
    %v727 = vmul.f32 %v721, %v726
    %v728 = vadd.f32 %v718, %v727
    %v729 = vld [vmem:[#allocation2 + $0xc8] sm:$0xff]
    %v730 = vld [vmem:[#allocation2 + $0xd0] sm:$0xff]
    %v731 = vld [vmem:[#allocation2 + $0xd8] sm:$0xff]
    %v732 = vld [vmem:[#allocation2 + $0xe0] sm:$0xff]
    %v733 = vld [vmem:[#allocation2 + $0xe8] sm:$0x3f]
    %vm734 = vcmask 48128
    %v736 = vsel %vm734, %v728, 0
    %vm738 = vcmask 1045504
    %v740 = vsel %vm738, %v733, 0
    %742 = vmatprep.subr.mxu0 0.0
    %743 = vmatpush1.msra.mxu0 %v740
    %744 = vmatprep.subr.mxu0 0.0
    %745 = vmatpush1.msra.mxu0 0.0
    %746 = vmatprep.subr.mxu0 0.0
    %747 = vmatpush1.msra.mxu0 0.0
    %748 = vmatprep.subr.mxu0 0.0
    %749 = vmatpush1.msra.mxu0 0.0
    %750 = vmatprep.subr.mxu0 0.0
    %751 = vmatpush1.msra.mxu0 0.0
    %752 = vmatprep.subr.mxu0 0.0
    %753 = vmatpush1.msra.mxu0 0.0
    %754 = vmatprep.subr.mxu0 0.0
    %755 = vmatpush1.msra.mxu0 0.0
    %756 = vmatprep.subr.mxu0 0.0
    %757 = vmatpush1.msra.mxu0 0.0
    %758 = vmatprep.subr.mxu0 0.0
    %759 = vmatpush1.msra.mxu0 0.0
    %760 = vmatprep.subr.mxu0 0.0
    %761 = vmatpush1.msra.mxu0 0.0
    %762 = vmatprep.subr.mxu0 0.0
    %763 = vmatpush1.msra.mxu0 0.0
    %764 = vmatprep.subr.mxu0 0.0
    %765 = vmatpush1.msra.mxu0 0.0
    %766 = vmatprep.subr.mxu0 0.0
    %767 = vmatpush1.msra.mxu0 0.0
    %768 = vmatprep.subr.mxu0 0.0
    %769 = vmatpush1.msra.mxu0 0.0
    %770 = vmatprep.subr.mxu0 0.0
    %771 = vmatpush1.msra.mxu0 0.0
    %772 = vmatprep.subr.mxu0 0.0
    %773 = vmatpush1.msra.mxu0 0.0
    %774 = vmatprep.subr.mxu0 0.0
    %775 = vmatpush1.msra.mxu0 0.0
    %776 = vmatprep.subr.mxu0 0.0
    %777 = vmatpush1.msra.mxu0 0.0
    %778 = vmatprep.subr.mxu0 0.0
    %779 = vmatpush1.msra.mxu0 0.0
    %780 = vmatprep.subr.mxu0 0.0
    %781 = vmatpush1.msra.mxu0 0.0
    %782 = vmatprep.subr.mxu0 0.0
    %783 = vmatpush1.msra.mxu0 0.0
    %784 = vmatprep.subr.mxu0 0.0
    %785 = vmatpush1.msra.mxu0 0.0
    %786 = vmatprep.subr.mxu0 0.0
    %787 = vmatpush1.msra.mxu0 0.0
    %788 = vmatprep.subr.mxu0 0.0
    %789 = vmatpush1.msra.mxu0 0.0
    %790 = vmatprep.subr.mxu0 0.0
    %791 = vmatpush1.msra.mxu0 0.0
    %792 = vmatprep.subr.mxu0 0.0
    %793 = vmatpush1.msra.mxu0 0.0
    %794 = vmatprep.subr.mxu0 0.0
    %795 = vmatpush1.msra.mxu0 0.0
    %796 = vmatprep.subr.mxu0 0.0
    %797 = vmatpush1.msra.mxu0 0.0
    %798 = vmatprep.subr.mxu0 0.0
    %799 = vmatpush1.msra.mxu0 0.0
    %800 = vmatprep.subr.mxu0 0.0
    %801 = vmatpush1.msra.mxu0 0.0
    %802 = vmatprep.subr.mxu0 0.0
    %803 = vmatpush1.msra.mxu0 0.0
    %804 = vmatprep.subr.mxu0 0.0
    %805 = vmatpush1.msra.mxu0 0.0
    %806 = vmatprep.mubr.f32.mxu0 0.0
    %807 = vmatmul.mubr.f32.gmra.mrb[0].mxu0 %v736
    %v808 = vpop.f32.mrb[0].mxu0
    %v809 = vadd.f32 0.0, %v808
    %v810 = vpop.f32.mrb[0].mxu0
    %811 = vdwg.mxu0
    %v813 = vsel %vm388, %v708, 0
    %815 = vmatprep.subr.mxu0 0.0
    %816 = vmatpush1.msra.mxu0 %v729
    %817 = vmatprep.subr.mxu0 0.0
    %818 = vmatpush1.msra.mxu0 %v730
    %819 = vmatprep.subr.mxu0 0.0
    %820 = vmatpush1.msra.mxu0 %v731
    %821 = vmatprep.subr.mxu0 0.0
    %822 = vmatpush1.msra.mxu0 %v732
    %823 = vmatprep.subr.mxu0 0.0
    %824 = vmatpush1.msra.mxu0 0.0
    %825 = vmatprep.subr.mxu0 0.0
    %826 = vmatpush1.msra.mxu0 0.0
    %827 = vmatprep.subr.mxu0 0.0
    %828 = vmatpush1.msra.mxu0 0.0
    %829 = vmatprep.subr.mxu0 0.0
    %830 = vmatpush1.msra.mxu0 0.0
    %831 = vmatprep.subr.mxu0 0.0
    %832 = vmatpush1.msra.mxu0 0.0
    %833 = vmatprep.subr.mxu0 0.0
    %834 = vmatpush1.msra.mxu0 0.0
    %835 = vmatprep.subr.mxu0 0.0
    %836 = vmatpush1.msra.mxu0 0.0
    %837 = vmatprep.subr.mxu0 0.0
    %838 = vmatpush1.msra.mxu0 0.0
    %839 = vmatprep.subr.mxu0 0.0
    %840 = vmatpush1.msra.mxu0 0.0
    %841 = vmatprep.subr.mxu0 0.0
    %842 = vmatpush1.msra.mxu0 0.0
    %843 = vmatprep.subr.mxu0 0.0
    %844 = vmatpush1.msra.mxu0 0.0
    %845 = vmatprep.subr.mxu0 0.0
    %846 = vmatpush1.msra.mxu0 0.0
    %847 = vmatprep.subr.mxu0 0.0
    %848 = vmatpush1.msra.mxu0 0.0
    %849 = vmatprep.subr.mxu0 0.0
    %850 = vmatpush1.msra.mxu0 0.0
    %851 = vmatprep.subr.mxu0 0.0
    %852 = vmatpush1.msra.mxu0 0.0
    %853 = vmatprep.subr.mxu0 0.0
    %854 = vmatpush1.msra.mxu0 0.0
    %855 = vmatprep.subr.mxu0 0.0
    %856 = vmatpush1.msra.mxu0 0.0
    %857 = vmatprep.subr.mxu0 0.0
    %858 = vmatpush1.msra.mxu0 0.0
    %859 = vmatprep.subr.mxu0 0.0
    %860 = vmatpush1.msra.mxu0 0.0
    %861 = vmatprep.subr.mxu0 0.0
    %862 = vmatpush1.msra.mxu0 0.0
    %863 = vmatprep.subr.mxu0 0.0
    %864 = vmatpush1.msra.mxu0 0.0
    %865 = vmatprep.subr.mxu0 0.0
    %866 = vmatpush1.msra.mxu0 0.0
    %867 = vmatprep.subr.mxu0 0.0
    %868 = vmatpush1.msra.mxu0 0.0
    %869 = vmatprep.subr.mxu0 0.0
    %870 = vmatpush1.msra.mxu0 0.0
    %871 = vmatprep.subr.mxu0 0.0
    %872 = vmatpush1.msra.mxu0 0.0
    %873 = vmatprep.subr.mxu0 0.0
    %874 = vmatpush1.msra.mxu0 0.0
    %875 = vmatprep.subr.mxu0 0.0
    %876 = vmatpush1.msra.mxu0 0.0
    %877 = vmatprep.subr.mxu0 0.0
    %878 = vmatpush1.msra.mxu0 0.0
    %879 = vmatprep.mubr.f32.mxu0 0.0
    %880 = vmatmul.mubr.f32.gmra.mrb[0].mxu0 %v813
    %v881 = vpop.f32.mrb[0].mxu0
    %v882 = vadd.f32 %v809, %v881
    %v883 = vpop.f32.mrb[0].mxu0
    %884 = vdwg.mxu0
    %v885 = vld [vmem:[#allocation2 + $0xf0] sm:$0x1]
    %v886 = vlaneseq
    %v887 = vshrl.u32 %v886, 7
    %v888 = vsub.s32 0, %v887
    %v889 = vrot.slane %v885, %v888
    %v890 = vadd.f32 %v882, %v889
    %v891 = vmax.f32 %v890, 0.0
    %v893 = vsel %vm37, %v30, 0
    %895 = vmatprep.subr.mxu0 0.0
    %896 = vmatpush1.msra.mxu0 %v891
    %897 = vmatprep.subr.mxu0 0.0
    %898 = vmatpush1.msra.mxu0 0.0
    %899 = vmatprep.subr.mxu0 0.0
    %900 = vmatpush1.msra.mxu0 0.0
    %901 = vmatprep.subr.mxu0 0.0
    %902 = vmatpush1.msra.mxu0 0.0
    %903 = vmatprep.subr.mxu0 0.0
    %904 = vmatpush1.msra.mxu0 0.0
    %905 = vmatprep.subr.mxu0 0.0
    %906 = vmatpush1.msra.mxu0 0.0
    %907 = vmatprep.subr.mxu0 0.0
    %908 = vmatpush1.msra.mxu0 0.0
    %909 = vmatprep.subr.mxu0 0.0
    %910 = vmatpush1.msra.mxu0 0.0
    %911 = vmatprep.subr.mxu0 0.0
    %912 = vmatpush1.msra.mxu0 0.0
    %913 = vmatprep.subr.mxu0 0.0
    %914 = vmatpush1.msra.mxu0 0.0
    %915 = vmatprep.subr.mxu0 0.0
    %916 = vmatpush1.msra.mxu0 0.0
    %917 = vmatprep.subr.mxu0 0.0
    %918 = vmatpush1.msra.mxu0 0.0
    %919 = vmatprep.subr.mxu0 0.0
    %920 = vmatpush1.msra.mxu0 0.0
    %921 = vmatprep.subr.mxu0 0.0
    %922 = vmatpush1.msra.mxu0 0.0
    %923 = vmatprep.subr.mxu0 0.0
    %924 = vmatpush1.msra.mxu0 0.0
    %925 = vmatprep.subr.mxu0 0.0
    %926 = vmatpush1.msra.mxu0 0.0
    %927 = vmatprep.subr.mxu0 0.0
    %928 = vmatpush1.msra.mxu0 0.0
    %929 = vmatprep.subr.mxu0 0.0
    %930 = vmatpush1.msra.mxu0 0.0
    %931 = vmatprep.subr.mxu0 0.0
    %932 = vmatpush1.msra.mxu0 0.0
    %933 = vmatprep.subr.mxu0 0.0
    %934 = vmatpush1.msra.mxu0 0.0
    %935 = vmatprep.subr.mxu0 0.0
    %936 = vmatpush1.msra.mxu0 0.0
    %937 = vmatprep.subr.mxu0 0.0
    %938 = vmatpush1.msra.mxu0 0.0
    %939 = vmatprep.subr.mxu0 0.0
    %940 = vmatpush1.msra.mxu0 0.0
    %941 = vmatprep.subr.mxu0 0.0
    %942 = vmatpush1.msra.mxu0 0.0
    %943 = vmatprep.subr.mxu0 0.0
    %944 = vmatpush1.msra.mxu0 0.0
    %945 = vmatprep.subr.mxu0 0.0
    %946 = vmatpush1.msra.mxu0 0.0
    %947 = vmatprep.subr.mxu0 0.0
    %948 = vmatpush1.msra.mxu0 0.0
    %949 = vmatprep.subr.mxu0 0.0
    %950 = vmatpush1.msra.mxu0 0.0
    %951 = vmatprep.subr.mxu0 0.0
    %952 = vmatpush1.msra.mxu0 0.0
    %953 = vmatprep.subr.mxu0 0.0
    %954 = vmatpush1.msra.mxu0 0.0
    %955 = vmatprep.subr.mxu0 0.0
    %956 = vmatpush1.msra.mxu0 0.0
    %957 = vmatprep.subr.mxu0 0.0
    %958 = vmatpush1.msra.mxu0 0.0
    %959 = vmatprep.mubr.f32.mxu0 0.0
    %960 = vmatmul.mubr.f32.gmra.mrb[0].mxu0 %v893
    %v961 = vpop.f32.mrb[0].mxu0
    %v962 = vadd.f32 0.0, %v961
    %v963 = vpop.f32.mrb[0].mxu0
    %964 = vdwg.mxu0
    %v965 = vld [vmem:[#allocation2 + $0xf8] sm:$0x3f]
    %v966 = vld [vmem:[#allocation2 + $0x100] sm:$0xff]
    %v967 = vld [vmem:[#allocation2 + $0x108] sm:$0xff]
    %v968 = vld [vmem:[#allocation2 + $0x110] sm:$0xff]
    %v969 = vld [vmem:[#allocation2 + $0x118] sm:$0xff]
    %v971 = vsel %vm388, %v962, 0
    %973 = vmatprep.subr.mxu0 0.0
    %974 = vmatpush1.msra.mxu0 %v966
    %975 = vmatprep.subr.mxu0 0.0
    %976 = vmatpush1.msra.mxu0 %v967
    %977 = vmatprep.subr.mxu0 0.0
    %978 = vmatpush1.msra.mxu0 %v968
    %979 = vmatprep.subr.mxu0 0.0
    %980 = vmatpush1.msra.mxu0 %v969
    %981 = vmatprep.subr.mxu0 0.0
    %982 = vmatpush1.msra.mxu0 0.0
    %983 = vmatprep.subr.mxu0 0.0
    %984 = vmatpush1.msra.mxu0 0.0
    %985 = vmatprep.subr.mxu0 0.0
    %986 = vmatpush1.msra.mxu0 0.0
    %987 = vmatprep.subr.mxu0 0.0
    %988 = vmatpush1.msra.mxu0 0.0
    %989 = vmatprep.subr.mxu0 0.0
    %990 = vmatpush1.msra.mxu0 0.0
    %991 = vmatprep.subr.mxu0 0.0
    %992 = vmatpush1.msra.mxu0 0.0
    %993 = vmatprep.subr.mxu0 0.0
    %994 = vmatpush1.msra.mxu0 0.0
    %995 = vmatprep.subr.mxu0 0.0
    %996 = vmatpush1.msra.mxu0 0.0
    %997 = vmatprep.subr.mxu0 0.0
    %998 = vmatpush1.msra.mxu0 0.0
    %999 = vmatprep.subr.mxu0 0.0
    %1000 = vmatpush1.msra.mxu0 0.0
    %1001 = vmatprep.subr.mxu0 0.0
    %1002 = vmatpush1.msra.mxu0 0.0
    %1003 = vmatprep.subr.mxu0 0.0
    %1004 = vmatpush1.msra.mxu0 0.0
    %1005 = vmatprep.subr.mxu0 0.0
    %1006 = vmatpush1.msra.mxu0 0.0
    %1007 = vmatprep.subr.mxu0 0.0
    %1008 = vmatpush1.msra.mxu0 0.0
    %1009 = vmatprep.subr.mxu0 0.0
    %1010 = vmatpush1.msra.mxu0 0.0
    %1011 = vmatprep.subr.mxu0 0.0
    %1012 = vmatpush1.msra.mxu0 0.0
    %1013 = vmatprep.subr.mxu0 0.0
    %1014 = vmatpush1.msra.mxu0 0.0
    %1015 = vmatprep.subr.mxu0 0.0
    %1016 = vmatpush1.msra.mxu0 0.0
    %1017 = vmatprep.subr.mxu0 0.0
    %1018 = vmatpush1.msra.mxu0 0.0
    %1019 = vmatprep.subr.mxu0 0.0
    %1020 = vmatpush1.msra.mxu0 0.0
    %1021 = vmatprep.subr.mxu0 0.0
    %1022 = vmatpush1.msra.mxu0 0.0
    %1023 = vmatprep.subr.mxu0 0.0
    %1024 = vmatpush1.msra.mxu0 0.0
    %1025 = vmatprep.subr.mxu0 0.0
    %1026 = vmatpush1.msra.mxu0 0.0
    %1027 = vmatprep.subr.mxu0 0.0
    %1028 = vmatpush1.msra.mxu0 0.0
    %1029 = vmatprep.subr.mxu0 0.0
    %1030 = vmatpush1.msra.mxu0 0.0
    %1031 = vmatprep.subr.mxu0 0.0
    %1032 = vmatpush1.msra.mxu0 0.0
    %1033 = vmatprep.subr.mxu0 0.0
    %1034 = vmatpush1.msra.mxu0 0.0
    %1035 = vmatprep.subr.mxu0 0.0
    %1036 = vmatpush1.msra.mxu0 0.0
    %1037 = vmatprep.mubr.f32.mxu0 0.0
    %1038 = vmatmul.mubr.f32.gmra.mrb[0].mxu0 %v971
    %v1039 = vpop.f32.mrb[0].mxu0
    %v1040 = vadd.f32 0.0, %v1039
    %v1041 = vpop.f32.mrb[0].mxu0
    %1042 = vdwg.mxu0
    %v1044 = vsel %vm734, %v36, 0
    %v1047 = vsel %vm738, %v965, 0
    %1049 = vmatprep.subr.mxu0 0.0
    %1050 = vmatpush1.msra.mxu0 %v1047
    %1051 = vmatprep.subr.mxu0 0.0
    %1052 = vmatpush1.msra.mxu0 0.0
    %1053 = vmatprep.subr.mxu0 0.0
    %1054 = vmatpush1.msra.mxu0 0.0
    %1055 = vmatprep.subr.mxu0 0.0
    %1056 = vmatpush1.msra.mxu0 0.0
    %1057 = vmatprep.subr.mxu0 0.0
    %1058 = vmatpush1.msra.mxu0 0.0
    %1059 = vmatprep.subr.mxu0 0.0
    %1060 = vmatpush1.msra.mxu0 0.0
    %1061 = vmatprep.subr.mxu0 0.0
    %1062 = vmatpush1.msra.mxu0 0.0
    %1063 = vmatprep.subr.mxu0 0.0
    %1064 = vmatpush1.msra.mxu0 0.0
    %1065 = vmatprep.subr.mxu0 0.0
    %1066 = vmatpush1.msra.mxu0 0.0
    %1067 = vmatprep.subr.mxu0 0.0
    %1068 = vmatpush1.msra.mxu0 0.0
    %1069 = vmatprep.subr.mxu0 0.0
    %1070 = vmatpush1.msra.mxu0 0.0
    %1071 = vmatprep.subr.mxu0 0.0
    %1072 = vmatpush1.msra.mxu0 0.0
    %1073 = vmatprep.subr.mxu0 0.0
    %1074 = vmatpush1.msra.mxu0 0.0
    %1075 = vmatprep.subr.mxu0 0.0
    %1076 = vmatpush1.msra.mxu0 0.0
    %1077 = vmatprep.subr.mxu0 0.0
    %1078 = vmatpush1.msra.mxu0 0.0
    %1079 = vmatprep.subr.mxu0 0.0
    %1080 = vmatpush1.msra.mxu0 0.0
    %1081 = vmatprep.subr.mxu0 0.0
    %1082 = vmatpush1.msra.mxu0 0.0
    %1083 = vmatprep.subr.mxu0 0.0
    %1084 = vmatpush1.msra.mxu0 0.0
    %1085 = vmatprep.subr.mxu0 0.0
    %1086 = vmatpush1.msra.mxu0 0.0
    %1087 = vmatprep.subr.mxu0 0.0
    %1088 = vmatpush1.msra.mxu0 0.0
    %1089 = vmatprep.subr.mxu0 0.0
    %1090 = vmatpush1.msra.mxu0 0.0
    %1091 = vmatprep.subr.mxu0 0.0
    %1092 = vmatpush1.msra.mxu0 0.0
    %1093 = vmatprep.subr.mxu0 0.0
    %1094 = vmatpush1.msra.mxu0 0.0
    %1095 = vmatprep.subr.mxu0 0.0
    %1096 = vmatpush1.msra.mxu0 0.0
    %1097 = vmatprep.subr.mxu0 0.0
    %1098 = vmatpush1.msra.mxu0 0.0
    %1099 = vmatprep.subr.mxu0 0.0
    %1100 = vmatpush1.msra.mxu0 0.0
    %1101 = vmatprep.subr.mxu0 0.0
    %1102 = vmatpush1.msra.mxu0 0.0
    %1103 = vmatprep.subr.mxu0 0.0
    %1104 = vmatpush1.msra.mxu0 0.0
    %1105 = vmatprep.subr.mxu0 0.0
    %1106 = vmatpush1.msra.mxu0 0.0
    %1107 = vmatprep.subr.mxu0 0.0
    %1108 = vmatpush1.msra.mxu0 0.0
    %1109 = vmatprep.subr.mxu0 0.0
    %1110 = vmatpush1.msra.mxu0 0.0
    %1111 = vmatprep.subr.mxu0 0.0
    %1112 = vmatpush1.msra.mxu0 0.0
    %1113 = vmatprep.mubr.f32.mxu0 0.0
    %1114 = vmatmul.mubr.f32.gmra.mrb[0].mxu0 %v1044
    %v1115 = vpop.f32.mrb[0].mxu0
    %v1116 = vadd.f32 %v1040, %v1115
    %v1117 = vpop.f32.mrb[0].mxu0
    %1118 = vdwg.mxu0
    %v1119 = vld [vmem:[#allocation2 + $0x120] sm:$0x1]
    %v1120 = vlaneseq
    %v1121 = vshrl.u32 %v1120, 7
    %v1122 = vsub.s32 0, %v1121
    %v1123 = vrot.slane %v1119, %v1122
    %v1124 = vadd.f32 %v1116, %v1123
    %v1125 = vmax.f32 %v1124, 0.0
    %1126 = vmatprep.subr.mxu0 0.0
    %1127 = vmatpush1.msra.mxu0 %v891
    %1128 = vmatprep.subr.mxu0 0.0
    %1129 = vmatpush1.msra.mxu0 0.0
    %1130 = vmatprep.subr.mxu0 0.0
    %1131 = vmatpush1.msra.mxu0 0.0
    %1132 = vmatprep.subr.mxu0 0.0
    %1133 = vmatpush1.msra.mxu0 0.0
    %1134 = vmatprep.subr.mxu0 0.0
    %1135 = vmatpush1.msra.mxu0 0.0
    %1136 = vmatprep.subr.mxu0 0.0
    %1137 = vmatpush1.msra.mxu0 0.0
    %1138 = vmatprep.subr.mxu0 0.0
    %1139 = vmatpush1.msra.mxu0 0.0
    %1140 = vmatprep.subr.mxu0 0.0
    %1141 = vmatpush1.msra.mxu0 0.0
    %1142 = vmatprep.subr.mxu0 0.0
    %1143 = vmatpush1.msra.mxu0 0.0
    %1144 = vmatprep.subr.mxu0 0.0
    %1145 = vmatpush1.msra.mxu0 0.0
    %1146 = vmatprep.subr.mxu0 0.0
    %1147 = vmatpush1.msra.mxu0 0.0
    %1148 = vmatprep.subr.mxu0 0.0
    %1149 = vmatpush1.msra.mxu0 0.0
    %1150 = vmatprep.subr.mxu0 0.0
    %1151 = vmatpush1.msra.mxu0 0.0
    %1152 = vmatprep.subr.mxu0 0.0
    %1153 = vmatpush1.msra.mxu0 0.0
    %1154 = vmatprep.subr.mxu0 0.0
    %1155 = vmatpush1.msra.mxu0 0.0
    %1156 = vmatprep.subr.mxu0 0.0
    %1157 = vmatpush1.msra.mxu0 0.0
    %1158 = vmatprep.subr.mxu0 0.0
    %1159 = vmatpush1.msra.mxu0 0.0
    %1160 = vmatprep.subr.mxu0 0.0
    %1161 = vmatpush1.msra.mxu0 0.0
    %1162 = vmatprep.subr.mxu0 0.0
    %1163 = vmatpush1.msra.mxu0 0.0
    %1164 = vmatprep.subr.mxu0 0.0
    %1165 = vmatpush1.msra.mxu0 0.0
    %1166 = vmatprep.subr.mxu0 0.0
    %1167 = vmatpush1.msra.mxu0 0.0
    %1168 = vmatprep.subr.mxu0 0.0
    %1169 = vmatpush1.msra.mxu0 0.0
    %1170 = vmatprep.subr.mxu0 0.0
    %1171 = vmatpush1.msra.mxu0 0.0
    %1172 = vmatprep.subr.mxu0 0.0
    %1173 = vmatpush1.msra.mxu0 0.0
    %1174 = vmatprep.subr.mxu0 0.0
    %1175 = vmatpush1.msra.mxu0 0.0
    %1176 = vmatprep.subr.mxu0 0.0
    %1177 = vmatpush1.msra.mxu0 0.0
    %1178 = vmatprep.subr.mxu0 0.0
    %1179 = vmatpush1.msra.mxu0 0.0
    %1180 = vmatprep.subr.mxu0 0.0
    %1181 = vmatpush1.msra.mxu0 0.0
    %1182 = vmatprep.subr.mxu0 0.0
    %1183 = vmatpush1.msra.mxu0 0.0
    %1184 = vmatprep.subr.mxu0 0.0
    %1185 = vmatpush1.msra.mxu0 0.0
    %1186 = vmatprep.subr.mxu0 0.0
    %1187 = vmatpush1.msra.mxu0 0.0
    %1188 = vmatprep.subr.mxu0 0.0
    %1189 = vmatpush1.msra.mxu0 0.0
    %1190 = vmatprep.mubr.f32.mxu0 0.0
    %1191 = vmatmul.mubr.f32.gmra.mrb[0].mxu0 %v39
    %v1192 = vpop.f32.mrb[0].mxu0
    %v1193 = vadd.f32 0.0, %v1192
    %v1194 = vpop.f32.mrb[0].mxu0
    %1195 = vmatprep.mubr.f32.mxu0 0.0
    %1196 = vmatmul.mubr.f32.gmra.mrb[0].mxu0 %v42
    %v1197 = vpop.f32.mrb[0].mxu0
    %v1198 = vadd.f32 0.0, %v1197
    %v1199 = vpop.f32.mrb[0].mxu0
    %1200 = vdwg.mxu0
    %v1201 = vld [vmem:[#allocation2 + $0x128] sm:$0xff]
    %v1202 = vld [vmem:[#allocation2 + $0x130] sm:$0xff]
    %v1203 = vld [vmem:[#allocation2 + $0x138] sm:$0xff]
    %v1204 = vld [vmem:[#allocation2 + $0x140] sm:$0xff]
    %v1205 = vld [vmem:[#allocation2 + $0x148] sm:$0xff]
    %v1206 = vld [vmem:[#allocation2 + $0x150] sm:$0xff]
    %v1207 = vld [vmem:[#allocation2 + $0x158] sm:$0xff]
    %v1208 = vld [vmem:[#allocation2 + $0x160] sm:$0xff]
    %1209 = vmatprep.subr.mxu0 0.0
    %1210 = vmatpush1.msra.mxu0 %v1205
    %1211 = vmatprep.subr.mxu0 0.0
    %1212 = vmatpush1.msra.mxu0 %v1206
    %1213 = vmatprep.subr.mxu0 0.0
    %1214 = vmatpush1.msra.mxu0 %v1207
    %1215 = vmatprep.subr.mxu0 0.0
    %1216 = vmatpush1.msra.mxu0 %v1208
    %1217 = vmatprep.subr.mxu0 0.0
    %1218 = vmatpush1.msra.mxu0 0.0
    %1219 = vmatprep.subr.mxu0 0.0
    %1220 = vmatpush1.msra.mxu0 0.0
    %1221 = vmatprep.subr.mxu0 0.0
    %1222 = vmatpush1.msra.mxu0 0.0
    %1223 = vmatprep.subr.mxu0 0.0
    %1224 = vmatpush1.msra.mxu0 0.0
    %1225 = vmatprep.subr.mxu0 0.0
    %1226 = vmatpush1.msra.mxu0 0.0
    %1227 = vmatprep.subr.mxu0 0.0
    %1228 = vmatpush1.msra.mxu0 0.0
    %1229 = vmatprep.subr.mxu0 0.0
    %1230 = vmatpush1.msra.mxu0 0.0
    %1231 = vmatprep.subr.mxu0 0.0
    %1232 = vmatpush1.msra.mxu0 0.0
    %1233 = vmatprep.subr.mxu0 0.0
    %1234 = vmatpush1.msra.mxu0 0.0
    %1235 = vmatprep.subr.mxu0 0.0
    %1236 = vmatpush1.msra.mxu0 0.0
    %1237 = vmatprep.subr.mxu0 0.0
    %1238 = vmatpush1.msra.mxu0 0.0
    %1239 = vmatprep.subr.mxu0 0.0
    %1240 = vmatpush1.msra.mxu0 0.0
    %1241 = vmatprep.subr.mxu0 0.0
    %1242 = vmatpush1.msra.mxu0 0.0
    %1243 = vmatprep.subr.mxu0 0.0
    %1244 = vmatpush1.msra.mxu0 0.0
    %1245 = vmatprep.subr.mxu0 0.0
    %1246 = vmatpush1.msra.mxu0 0.0
    %1247 = vmatprep.subr.mxu0 0.0
    %1248 = vmatpush1.msra.mxu0 0.0
    %1249 = vmatprep.subr.mxu0 0.0
    %1250 = vmatpush1.msra.mxu0 0.0
    %1251 = vmatprep.subr.mxu0 0.0
    %1252 = vmatpush1.msra.mxu0 0.0
    %1253 = vmatprep.subr.mxu0 0.0
    %1254 = vmatpush1.msra.mxu0 0.0
    %1255 = vmatprep.subr.mxu0 0.0
    %1256 = vmatpush1.msra.mxu0 0.0
    %1257 = vmatprep.subr.mxu0 0.0
    %1258 = vmatpush1.msra.mxu0 0.0
    %1259 = vmatprep.subr.mxu0 0.0
    %1260 = vmatpush1.msra.mxu0 0.0
    %1261 = vmatprep.subr.mxu0 0.0
    %1262 = vmatpush1.msra.mxu0 0.0
    %1263 = vmatprep.subr.mxu0 0.0
    %1264 = vmatpush1.msra.mxu0 0.0
    %1265 = vmatprep.subr.mxu0 0.0
    %1266 = vmatpush1.msra.mxu0 0.0
    %1267 = vmatprep.subr.mxu0 0.0
    %1268 = vmatpush1.msra.mxu0 0.0
    %1269 = vmatprep.subr.mxu0 0.0
    %1270 = vmatpush1.msra.mxu0 0.0
    %1271 = vmatprep.subr.mxu0 0.0
    %1272 = vmatpush1.msra.mxu0 0.0
    %1273 = vmatprep.mubr.f32.mxu0 0.0
    %1274 = vmatmul.mubr.f32.gmra.mrb[0].mxu0 %v390
    %v1275 = vpop.f32.mrb[0].mxu0
    %v1276 = vadd.f32 0.0, %v1275
    %v1277 = vpop.f32.mrb[0].mxu0
    %1278 = vmatprep.mubr.f32.mxu0 0.0
    %1279 = vmatmul.mubr.f32.gmra.mrb[0].mxu0 %v393
    %v1280 = vpop.f32.mrb[0].mxu0
    %v1281 = vadd.f32 0.0, %v1280
    %v1282 = vpop.f32.mrb[0].mxu0
    %1283 = vdwg.mxu0
    %v1285 = vsel %vm388, %v1193, 0
    %v1288 = vsel %vm388, %v1198, 0
    %1290 = vmatprep.subr.mxu0 0.0
    %1291 = vmatpush1.msra.mxu0 %v1201
    %1292 = vmatprep.subr.mxu0 0.0
    %1293 = vmatpush1.msra.mxu0 %v1202
    %1294 = vmatprep.subr.mxu0 0.0
    %1295 = vmatpush1.msra.mxu0 %v1203
    %1296 = vmatprep.subr.mxu0 0.0
    %1297 = vmatpush1.msra.mxu0 %v1204
    %1298 = vmatprep.subr.mxu0 0.0
    %1299 = vmatpush1.msra.mxu0 0.0
    %1300 = vmatprep.subr.mxu0 0.0
    %1301 = vmatpush1.msra.mxu0 0.0
    %1302 = vmatprep.subr.mxu0 0.0
    %1303 = vmatpush1.msra.mxu0 0.0
    %1304 = vmatprep.subr.mxu0 0.0
    %1305 = vmatpush1.msra.mxu0 0.0
    %1306 = vmatprep.subr.mxu0 0.0
    %1307 = vmatpush1.msra.mxu0 0.0
    %1308 = vmatprep.subr.mxu0 0.0
    %1309 = vmatpush1.msra.mxu0 0.0
    %1310 = vmatprep.subr.mxu0 0.0
    %1311 = vmatpush1.msra.mxu0 0.0
    %1312 = vmatprep.subr.mxu0 0.0
    %1313 = vmatpush1.msra.mxu0 0.0
    %1314 = vmatprep.subr.mxu0 0.0
    %1315 = vmatpush1.msra.mxu0 0.0
    %1316 = vmatprep.subr.mxu0 0.0
    %1317 = vmatpush1.msra.mxu0 0.0
    %1318 = vmatprep.subr.mxu0 0.0
    %1319 = vmatpush1.msra.mxu0 0.0
    %1320 = vmatprep.subr.mxu0 0.0
    %1321 = vmatpush1.msra.mxu0 0.0
    %1322 = vmatprep.subr.mxu0 0.0
    %1323 = vmatpush1.msra.mxu0 0.0
    %1324 = vmatprep.subr.mxu0 0.0
    %1325 = vmatpush1.msra.mxu0 0.0
    %1326 = vmatprep.subr.mxu0 0.0
    %1327 = vmatpush1.msra.mxu0 0.0
    %1328 = vmatprep.subr.mxu0 0.0
    %1329 = vmatpush1.msra.mxu0 0.0
    %1330 = vmatprep.subr.mxu0 0.0
    %1331 = vmatpush1.msra.mxu0 0.0
    %1332 = vmatprep.subr.mxu0 0.0
    %1333 = vmatpush1.msra.mxu0 0.0
    %1334 = vmatprep.subr.mxu0 0.0
    %1335 = vmatpush1.msra.mxu0 0.0
    %1336 = vmatprep.subr.mxu0 0.0
    %1337 = vmatpush1.msra.mxu0 0.0
    %1338 = vmatprep.subr.mxu0 0.0
    %1339 = vmatpush1.msra.mxu0 0.0
    %1340 = vmatprep.subr.mxu0 0.0
    %1341 = vmatpush1.msra.mxu0 0.0
    %1342 = vmatprep.subr.mxu0 0.0
    %1343 = vmatpush1.msra.mxu0 0.0
    %1344 = vmatprep.subr.mxu0 0.0
    %1345 = vmatpush1.msra.mxu0 0.0
    %1346 = vmatprep.subr.mxu0 0.0
    %1347 = vmatpush1.msra.mxu0 0.0
    %1348 = vmatprep.subr.mxu0 0.0
    %1349 = vmatpush1.msra.mxu0 0.0
    %1350 = vmatprep.subr.mxu0 0.0
    %1351 = vmatpush1.msra.mxu0 0.0
    %1352 = vmatprep.subr.mxu0 0.0
    %1353 = vmatpush1.msra.mxu0 0.0
    %1354 = vmatprep.mubr.f32.mxu0 0.0
    %1355 = vmatmul.mubr.f32.gmra.mrb[0].mxu0 %v1285
    %v1356 = vpop.f32.mrb[0].mxu0
    %v1357 = vadd.f32 %v1276, %v1356
    %v1358 = vpop.f32.mrb[0].mxu0
    %1359 = vmatprep.mubr.f32.mxu0 0.0
    %1360 = vmatmul.mubr.f32.gmra.mrb[0].mxu0 %v1288
    %v1361 = vpop.f32.mrb[0].mxu0
    %v1362 = vadd.f32 %v1281, %v1361
    %v1363 = vpop.f32.mrb[0].mxu0
    %1364 = vdwg.mxu0
    %v1365 = vld [vmem:[#allocation2 + $0x168] sm:$0x1]
    %v1366 = vlaneseq
    %v1367 = vshrl.u32 %v1366, 7
    %v1368 = vsub.s32 0, %v1367
    %v1369 = vrot.slane %v1365, %v1368
    %v1370 = vadd.f32 %v1357, %v1369
    %v1371 = vadd.f32 %v1362, %v1369
    %v1372 = vmax.f32 %v1370, 0.0
    %v1373 = vmax.f32 %v1371, 0.0
    %1374 = vmatprep.subr.mxu0 0.0
    %1375 = vmatpush1.msra.mxu0 %v891
    %1376 = vmatprep.subr.mxu0 0.0
    %1377 = vmatpush1.msra.mxu0 0.0
    %1378 = vmatprep.subr.mxu0 0.0
    %1379 = vmatpush1.msra.mxu0 0.0
    %1380 = vmatprep.subr.mxu0 0.0
    %1381 = vmatpush1.msra.mxu0 0.0
    %1382 = vmatprep.subr.mxu0 0.0
    %1383 = vmatpush1.msra.mxu0 0.0
    %1384 = vmatprep.subr.mxu0 0.0
    %1385 = vmatpush1.msra.mxu0 0.0
    %1386 = vmatprep.subr.mxu0 0.0
    %1387 = vmatpush1.msra.mxu0 0.0
    %1388 = vmatprep.subr.mxu0 0.0
    %1389 = vmatpush1.msra.mxu0 0.0
    %1390 = vmatprep.subr.mxu0 0.0
    %1391 = vmatpush1.msra.mxu0 0.0
    %1392 = vmatprep.subr.mxu0 0.0
    %1393 = vmatpush1.msra.mxu0 0.0
    %1394 = vmatprep.subr.mxu0 0.0
    %1395 = vmatpush1.msra.mxu0 0.0
    %1396 = vmatprep.subr.mxu0 0.0
    %1397 = vmatpush1.msra.mxu0 0.0
    %1398 = vmatprep.subr.mxu0 0.0
    %1399 = vmatpush1.msra.mxu0 0.0
    %1400 = vmatprep.subr.mxu0 0.0
    %1401 = vmatpush1.msra.mxu0 0.0
    %1402 = vmatprep.subr.mxu0 0.0
    %1403 = vmatpush1.msra.mxu0 0.0
    %1404 = vmatprep.subr.mxu0 0.0
    %1405 = vmatpush1.msra.mxu0 0.0
    %1406 = vmatprep.subr.mxu0 0.0
    %1407 = vmatpush1.msra.mxu0 0.0
    %1408 = vmatprep.subr.mxu0 0.0
    %1409 = vmatpush1.msra.mxu0 0.0
    %1410 = vmatprep.subr.mxu0 0.0
    %1411 = vmatpush1.msra.mxu0 0.0
    %1412 = vmatprep.subr.mxu0 0.0
    %1413 = vmatpush1.msra.mxu0 0.0
    %1414 = vmatprep.subr.mxu0 0.0
    %1415 = vmatpush1.msra.mxu0 0.0
    %1416 = vmatprep.subr.mxu0 0.0
    %1417 = vmatpush1.msra.mxu0 0.0
    %1418 = vmatprep.subr.mxu0 0.0
    %1419 = vmatpush1.msra.mxu0 0.0
    %1420 = vmatprep.subr.mxu0 0.0
    %1421 = vmatpush1.msra.mxu0 0.0
    %1422 = vmatprep.subr.mxu0 0.0
    %1423 = vmatpush1.msra.mxu0 0.0
    %1424 = vmatprep.subr.mxu0 0.0
    %1425 = vmatpush1.msra.mxu0 0.0
    %1426 = vmatprep.subr.mxu0 0.0
    %1427 = vmatpush1.msra.mxu0 0.0
    %1428 = vmatprep.subr.mxu0 0.0
    %1429 = vmatpush1.msra.mxu0 0.0
    %1430 = vmatprep.subr.mxu0 0.0
    %1431 = vmatpush1.msra.mxu0 0.0
    %1432 = vmatprep.subr.mxu0 0.0
    %1433 = vmatpush1.msra.mxu0 0.0
    %1434 = vmatprep.subr.mxu0 0.0
    %1435 = vmatpush1.msra.mxu0 0.0
    %1436 = vmatprep.subr.mxu0 0.0
    %1437 = vmatpush1.msra.mxu0 0.0
    %1438 = vmatprep.mubr.f32.mxu0 0.0
    %1439 = vmatmul.mubr.f32.gmra.mrb[0].mxu0 %v303
    %v1440 = vpop.f32.mrb[0].mxu0
    %v1441 = vadd.f32 0.0, %v1440
    %v1442 = vpop.f32.mrb[0].mxu0
    %1443 = vmatprep.mubr.f32.mxu0 0.0
    %1444 = vmatmul.mubr.f32.gmra.mrb[0].mxu0 %v306
    %v1445 = vpop.f32.mrb[0].mxu0
    %v1446 = vadd.f32 0.0, %v1445
    %v1447 = vpop.f32.mrb[0].mxu0
    %1448 = vdwg.mxu0
    %v1449 = vld [vmem:[#allocation2 + $0x170] sm:$0xff]
    %v1450 = vld [vmem:[#allocation2 + $0x178] sm:$0xff]
    %v1451 = vld [vmem:[#allocation2 + $0x180] sm:$0xff]
    %v1452 = vld [vmem:[#allocation2 + $0x188] sm:$0xff]
    %v1453 = vld [vmem:[#allocation2 + $0x190] sm:$0xff]
    %v1454 = vld [vmem:[#allocation2 + $0x198] sm:$0xff]
    %v1455 = vld [vmem:[#allocation2 + $0x1a0] sm:$0xff]
    %v1456 = vld [vmem:[#allocation2 + $0x1a8] sm:$0xff]
    %v1458 = vsel %vm388, %v1372, 0
    %v1461 = vsel %vm388, %v1373, 0
    %1463 = vmatprep.subr.mxu0 0.0
    %1464 = vmatpush1.msra.mxu0 %v1453
    %1465 = vmatprep.subr.mxu0 0.0
    %1466 = vmatpush1.msra.mxu0 %v1454
    %1467 = vmatprep.subr.mxu0 0.0
    %1468 = vmatpush1.msra.mxu0 %v1455
    %1469 = vmatprep.subr.mxu0 0.0
    %1470 = vmatpush1.msra.mxu0 %v1456
    %1471 = vmatprep.subr.mxu0 0.0
    %1472 = vmatpush1.msra.mxu0 0.0
    %1473 = vmatprep.subr.mxu0 0.0
    %1474 = vmatpush1.msra.mxu0 0.0
    %1475 = vmatprep.subr.mxu0 0.0
    %1476 = vmatpush1.msra.mxu0 0.0
    %1477 = vmatprep.subr.mxu0 0.0
    %1478 = vmatpush1.msra.mxu0 0.0
    %1479 = vmatprep.subr.mxu0 0.0
    %1480 = vmatpush1.msra.mxu0 0.0
    %1481 = vmatprep.subr.mxu0 0.0
    %1482 = vmatpush1.msra.mxu0 0.0
    %1483 = vmatprep.subr.mxu0 0.0
    %1484 = vmatpush1.msra.mxu0 0.0
    %1485 = vmatprep.subr.mxu0 0.0
    %1486 = vmatpush1.msra.mxu0 0.0
    %1487 = vmatprep.subr.mxu0 0.0
    %1488 = vmatpush1.msra.mxu0 0.0
    %1489 = vmatprep.subr.mxu0 0.0
    %1490 = vmatpush1.msra.mxu0 0.0
    %1491 = vmatprep.subr.mxu0 0.0
    %1492 = vmatpush1.msra.mxu0 0.0
    %1493 = vmatprep.subr.mxu0 0.0
    %1494 = vmatpush1.msra.mxu0 0.0
    %1495 = vmatprep.subr.mxu0 0.0
    %1496 = vmatpush1.msra.mxu0 0.0
    %1497 = vmatprep.subr.mxu0 0.0
    %1498 = vmatpush1.msra.mxu0 0.0
    %1499 = vmatprep.subr.mxu0 0.0
    %1500 = vmatpush1.msra.mxu0 0.0
    %1501 = vmatprep.subr.mxu0 0.0
    %1502 = vmatpush1.msra.mxu0 0.0
    %1503 = vmatprep.subr.mxu0 0.0
    %1504 = vmatpush1.msra.mxu0 0.0
    %1505 = vmatprep.subr.mxu0 0.0
    %1506 = vmatpush1.msra.mxu0 0.0
    %1507 = vmatprep.subr.mxu0 0.0
    %1508 = vmatpush1.msra.mxu0 0.0
    %1509 = vmatprep.subr.mxu0 0.0
    %1510 = vmatpush1.msra.mxu0 0.0
    %1511 = vmatprep.subr.mxu0 0.0
    %1512 = vmatpush1.msra.mxu0 0.0
    %1513 = vmatprep.subr.mxu0 0.0
    %1514 = vmatpush1.msra.mxu0 0.0
    %1515 = vmatprep.subr.mxu0 0.0
    %1516 = vmatpush1.msra.mxu0 0.0
    %1517 = vmatprep.subr.mxu0 0.0
    %1518 = vmatpush1.msra.mxu0 0.0
    %1519 = vmatprep.subr.mxu0 0.0
    %1520 = vmatpush1.msra.mxu0 0.0
    %1521 = vmatprep.subr.mxu0 0.0
    %1522 = vmatpush1.msra.mxu0 0.0
    %1523 = vmatprep.subr.mxu0 0.0
    %1524 = vmatpush1.msra.mxu0 0.0
    %1525 = vmatprep.subr.mxu0 0.0
    %1526 = vmatpush1.msra.mxu0 0.0
    %1527 = vmatprep.mubr.f32.mxu0 0.0
    %1528 = vmatmul.mubr.f32.gmra.mrb[0].mxu0 %v1458
    %v1529 = vpop.f32.mrb[0].mxu0
    %v1530 = vadd.f32 0.0, %v1529
    %v1531 = vpop.f32.mrb[0].mxu0
    %1532 = vmatprep.mubr.f32.mxu0 0.0
    %1533 = vmatmul.mubr.f32.gmra.mrb[0].mxu0 %v1461
    %v1534 = vpop.f32.mrb[0].mxu0
    %v1535 = vadd.f32 0.0, %v1534
    %v1536 = vpop.f32.mrb[0].mxu0
    %1537 = vdwg.mxu0
    %v1539 = vsel %vm388, %v1441, 0
    %v1542 = vsel %vm388, %v1446, 0
    %1544 = vmatprep.subr.mxu0 0.0
    %1545 = vmatpush1.msra.mxu0 %v1449
    %1546 = vmatprep.subr.mxu0 0.0
    %1547 = vmatpush1.msra.mxu0 %v1450
    %1548 = vmatprep.subr.mxu0 0.0
    %1549 = vmatpush1.msra.mxu0 %v1451
    %1550 = vmatprep.subr.mxu0 0.0
    %1551 = vmatpush1.msra.mxu0 %v1452
    %1552 = vmatprep.subr.mxu0 0.0
    %1553 = vmatpush1.msra.mxu0 0.0
    %1554 = vmatprep.subr.mxu0 0.0
    %1555 = vmatpush1.msra.mxu0 0.0
    %1556 = vmatprep.subr.mxu0 0.0
    %1557 = vmatpush1.msra.mxu0 0.0
    %1558 = vmatprep.subr.mxu0 0.0
    %1559 = vmatpush1.msra.mxu0 0.0
    %1560 = vmatprep.subr.mxu0 0.0
    %1561 = vmatpush1.msra.mxu0 0.0
    %1562 = vmatprep.subr.mxu0 0.0
    %1563 = vmatpush1.msra.mxu0 0.0
    %1564 = vmatprep.subr.mxu0 0.0
    %1565 = vmatpush1.msra.mxu0 0.0
    %1566 = vmatprep.subr.mxu0 0.0
    %1567 = vmatpush1.msra.mxu0 0.0
    %1568 = vmatprep.subr.mxu0 0.0
    %1569 = vmatpush1.msra.mxu0 0.0
    %1570 = vmatprep.subr.mxu0 0.0
    %1571 = vmatpush1.msra.mxu0 0.0
    %1572 = vmatprep.subr.mxu0 0.0
    %1573 = vmatpush1.msra.mxu0 0.0
    %1574 = vmatprep.subr.mxu0 0.0
    %1575 = vmatpush1.msra.mxu0 0.0
    %1576 = vmatprep.subr.mxu0 0.0
    %1577 = vmatpush1.msra.mxu0 0.0
    %1578 = vmatprep.subr.mxu0 0.0
    %1579 = vmatpush1.msra.mxu0 0.0
    %1580 = vmatprep.subr.mxu0 0.0
    %1581 = vmatpush1.msra.mxu0 0.0
    %1582 = vmatprep.subr.mxu0 0.0
    %1583 = vmatpush1.msra.mxu0 0.0
    %1584 = vmatprep.subr.mxu0 0.0
    %1585 = vmatpush1.msra.mxu0 0.0
    %1586 = vmatprep.subr.mxu0 0.0
    %1587 = vmatpush1.msra.mxu0 0.0
    %1588 = vmatprep.subr.mxu0 0.0
    %1589 = vmatpush1.msra.mxu0 0.0
    %1590 = vmatprep.subr.mxu0 0.0
    %1591 = vmatpush1.msra.mxu0 0.0
    %1592 = vmatprep.subr.mxu0 0.0
    %1593 = vmatpush1.msra.mxu0 0.0
    %1594 = vmatprep.subr.mxu0 0.0
    %1595 = vmatpush1.msra.mxu0 0.0
    %1596 = vmatprep.subr.mxu0 0.0
    %1597 = vmatpush1.msra.mxu0 0.0
    %1598 = vmatprep.subr.mxu0 0.0
    %1599 = vmatpush1.msra.mxu0 0.0
    %1600 = vmatprep.subr.mxu0 0.0
    %1601 = vmatpush1.msra.mxu0 0.0
    %1602 = vmatprep.subr.mxu0 0.0
    %1603 = vmatpush1.msra.mxu0 0.0
    %1604 = vmatprep.subr.mxu0 0.0
    %1605 = vmatpush1.msra.mxu0 0.0
    %1606 = vmatprep.subr.mxu0 0.0
    %1607 = vmatpush1.msra.mxu0 0.0
    %1608 = vmatprep.mubr.f32.mxu0 0.0
    %1609 = vmatmul.mubr.f32.gmra.mrb[0].mxu0 %v1539
    %v1610 = vpop.f32.mrb[0].mxu0
    %v1611 = vadd.f32 %v1530, %v1610
    %v1612 = vpop.f32.mrb[0].mxu0
    %1613 = vmatprep.mubr.f32.mxu0 0.0
    %1614 = vmatmul.mubr.f32.gmra.mrb[0].mxu0 %v1542
    %v1615 = vpop.f32.mrb[0].mxu0
    %v1616 = vadd.f32 %v1535, %v1615
    %v1617 = vpop.f32.mrb[0].mxu0
    %1618 = vdwg.mxu0
    %v1619 = vld [vmem:[#allocation2 + $0x1b0] sm:$0x1]
    %v1620 = vlaneseq
    %v1621 = vshrl.u32 %v1620, 7
    %v1622 = vsub.s32 0, %v1621
    %v1623 = vrot.slane %v1619, %v1622
    %v1624 = vadd.f32 %v1611, %v1623
    %v1625 = vadd.f32 %v1616, %v1623
    %1626 = vmatprep.subr.mxu0 0.0
    %1627 = vmatpush1.msra.mxu0 %v1624
    %1628 = vmatprep.subr.mxu0 0.0
    %1629 = vmatpush1.msra.mxu0 %v1625
    %1630 = vmatprep.subr.mxu0 0.0
    %1631 = vmatpush1.msra.mxu0 0.0
    %1632 = vmatprep.subr.mxu0 0.0
    %1633 = vmatpush1.msra.mxu0 0.0
    %1634 = vmatprep.subr.mxu0 0.0
    %1635 = vmatpush1.msra.mxu0 0.0
    %1636 = vmatprep.subr.mxu0 0.0
    %1637 = vmatpush1.msra.mxu0 0.0
    %1638 = vmatprep.subr.mxu0 0.0
    %1639 = vmatpush1.msra.mxu0 0.0
    %1640 = vmatprep.subr.mxu0 0.0
    %1641 = vmatpush1.msra.mxu0 0.0
    %1642 = vmatprep.subr.mxu0 0.0
    %1643 = vmatpush1.msra.mxu0 0.0
    %1644 = vmatprep.subr.mxu0 0.0
    %1645 = vmatpush1.msra.mxu0 0.0
    %1646 = vmatprep.subr.mxu0 0.0
    %1647 = vmatpush1.msra.mxu0 0.0
    %1648 = vmatprep.subr.mxu0 0.0
    %1649 = vmatpush1.msra.mxu0 0.0
    %1650 = vmatprep.subr.mxu0 0.0
    %1651 = vmatpush1.msra.mxu0 0.0
    %1652 = vmatprep.subr.mxu0 0.0
    %1653 = vmatpush1.msra.mxu0 0.0
    %1654 = vmatprep.subr.mxu0 0.0
    %1655 = vmatpush1.msra.mxu0 0.0
    %1656 = vmatprep.subr.mxu0 0.0
    %1657 = vmatpush1.msra.mxu0 0.0
    %1658 = vmatprep.subr.mxu0 0.0
    %1659 = vmatpush1.msra.mxu0 0.0
    %1660 = vmatprep.subr.mxu0 0.0
    %1661 = vmatpush1.msra.mxu0 0.0
    %1662 = vmatprep.subr.mxu0 0.0
    %1663 = vmatpush1.msra.mxu0 0.0
    %1664 = vmatprep.subr.mxu0 0.0
    %1665 = vmatpush1.msra.mxu0 0.0
    %1666 = vmatprep.subr.mxu0 0.0
    %1667 = vmatpush1.msra.mxu0 0.0
    %1668 = vmatprep.subr.mxu0 0.0
    %1669 = vmatpush1.msra.mxu0 0.0
    %1670 = vmatprep.subr.mxu0 0.0
    %1671 = vmatpush1.msra.mxu0 0.0
    %1672 = vmatprep.subr.mxu0 0.0
    %1673 = vmatpush1.msra.mxu0 0.0
    %1674 = vmatprep.subr.mxu0 0.0
    %1675 = vmatpush1.msra.mxu0 0.0
    %1676 = vmatprep.subr.mxu0 0.0
    %1677 = vmatpush1.msra.mxu0 0.0
    %1678 = vmatprep.subr.mxu0 0.0
    %1679 = vmatpush1.msra.mxu0 0.0
    %1680 = vmatprep.subr.mxu0 0.0
    %1681 = vmatpush1.msra.mxu0 0.0
    %1682 = vmatprep.subr.mxu0 0.0
    %1683 = vmatpush1.msra.mxu0 0.0
    %1684 = vmatprep.subr.mxu0 0.0
    %1685 = vmatpush1.msra.mxu0 0.0
    %1686 = vmatprep.subr.mxu0 0.0
    %1687 = vmatpush1.msra.mxu0 0.0
    %1688 = vmatprep.subr.mxu0 0.0
    %1689 = vmatpush1.msra.mxu0 0.0
    %1690 = vmatprep.mubr.f32.mxu0 0.0
    %1691 = vmatmul.mubr.f32.gmra.mrb[0].mxu0 %v563
    %v1692 = vpop.f32.mrb[0].mxu0
    %v1693 = vadd.f32 0.0, %v1692
    %v1694 = vpop.f32.mrb[0].mxu0
    %1695 = vdwg.mxu0
    %1696 = vmatprep.subr.mxu0 0.0
    %1697 = vmatpush1.msra.mxu0 %v1624
    %1698 = vmatprep.subr.mxu0 0.0
    %1699 = vmatpush1.msra.mxu0 %v1625
    %1700 = vmatprep.subr.mxu0 0.0
    %1701 = vmatpush1.msra.mxu0 0.0
    %1702 = vmatprep.subr.mxu0 0.0
    %1703 = vmatpush1.msra.mxu0 0.0
    %1704 = vmatprep.subr.mxu0 0.0
    %1705 = vmatpush1.msra.mxu0 0.0
    %1706 = vmatprep.subr.mxu0 0.0
    %1707 = vmatpush1.msra.mxu0 0.0
    %1708 = vmatprep.subr.mxu0 0.0
    %1709 = vmatpush1.msra.mxu0 0.0
    %1710 = vmatprep.subr.mxu0 0.0
    %1711 = vmatpush1.msra.mxu0 0.0
    %1712 = vmatprep.subr.mxu0 0.0
    %1713 = vmatpush1.msra.mxu0 0.0
    %1714 = vmatprep.subr.mxu0 0.0
    %1715 = vmatpush1.msra.mxu0 0.0
    %1716 = vmatprep.subr.mxu0 0.0
    %1717 = vmatpush1.msra.mxu0 0.0
    %1718 = vmatprep.subr.mxu0 0.0
    %1719 = vmatpush1.msra.mxu0 0.0
    %1720 = vmatprep.subr.mxu0 0.0
    %1721 = vmatpush1.msra.mxu0 0.0
    %1722 = vmatprep.subr.mxu0 0.0
    %1723 = vmatpush1.msra.mxu0 0.0
    %1724 = vmatprep.subr.mxu0 0.0
    %1725 = vmatpush1.msra.mxu0 0.0
    %1726 = vmatprep.subr.mxu0 0.0
    %1727 = vmatpush1.msra.mxu0 0.0
    %1728 = vmatprep.subr.mxu0 0.0
    %1729 = vmatpush1.msra.mxu0 0.0
    %1730 = vmatprep.subr.mxu0 0.0
    %1731 = vmatpush1.msra.mxu0 0.0
    %1732 = vmatprep.subr.mxu0 0.0
    %1733 = vmatpush1.msra.mxu0 0.0
    %1734 = vmatprep.subr.mxu0 0.0
    %1735 = vmatpush1.msra.mxu0 0.0
    %1736 = vmatprep.subr.mxu0 0.0
    %1737 = vmatpush1.msra.mxu0 0.0
    %1738 = vmatprep.subr.mxu0 0.0
    %1739 = vmatpush1.msra.mxu0 0.0
    %1740 = vmatprep.subr.mxu0 0.0
    %1741 = vmatpush1.msra.mxu0 0.0
    %1742 = vmatprep.subr.mxu0 0.0
    %1743 = vmatpush1.msra.mxu0 0.0
    %1744 = vmatprep.subr.mxu0 0.0
    %1745 = vmatpush1.msra.mxu0 0.0
    %1746 = vmatprep.subr.mxu0 0.0
    %1747 = vmatpush1.msra.mxu0 0.0
    %1748 = vmatprep.subr.mxu0 0.0
    %1749 = vmatpush1.msra.mxu0 0.0
    %1750 = vmatprep.subr.mxu0 0.0
    %1751 = vmatpush1.msra.mxu0 0.0
    %1752 = vmatprep.subr.mxu0 0.0
    %1753 = vmatpush1.msra.mxu0 0.0
    %1754 = vmatprep.subr.mxu0 0.0
    %1755 = vmatpush1.msra.mxu0 0.0
    %1756 = vmatprep.subr.mxu0 0.0
    %1757 = vmatpush1.msra.mxu0 0.0
    %1758 = vmatprep.subr.mxu0 0.0
    %1759 = vmatpush1.msra.mxu0 0.0
    %1760 = vmatprep.mubr.f32.mxu0 0.0
    %1761 = vmatmul.mubr.f32.gmra.mrb[0].mxu0 %v636
    %v1762 = vpop.f32.mrb[0].mxu0
    %v1763 = vadd.f32 0.0, %v1762
    %v1764 = vpop.f32.mrb[0].mxu0
    %1765 = vdwg.mxu0
    %v1766 = vmax.f32 %v1693, %v1763
    %v1767 = vlaneseq
    %v1768 = vshrl.u32 %v1767, 7
    %v1769 = vsub.s32 0, %v1768
    %v1770 = vrot.slane %v1125, %v1769
    %v1771 = vmul.f32 %v712, %v1770
    %v1772 = vlaneseq
    %v1773 = vshrl.u32 %v1772, 7
    %v1774 = vsub.s32 1, %v1773
    %v1775 = vrot.slane %v1125, %v1774
    %v1776 = vmul.f32 %v721, %v1775
    %v1777 = vadd.f32 %v1771, %v1776
    %v1778 = vld [vmem:[#allocation2 + $0x1b8] sm:$0xff]
    %v1779 = vld [vmem:[#allocation2 + $0x1c0] sm:$0xff]
    %v1780 = vld [vmem:[#allocation2 + $0x1c8] sm:$0xff]
    %v1781 = vld [vmem:[#allocation2 + $0x1d0] sm:$0xff]
    %v1782 = vld [vmem:[#allocation2 + $0x1d8] sm:$0xff]
    %v1783 = vld [vmem:[#allocation2 + $0x1e0] sm:$0xff]
    %v1784 = vld [vmem:[#allocation2 + $0x1e8] sm:$0xff]
    %v1785 = vld [vmem:[#allocation2 + $0x1f0] sm:$0xff]
    %v1787 = vsel %vm388, %v1777, 0
    %1789 = vmatprep.subr.mxu0 0.0
    %1790 = vmatpush1.msra.mxu0 %v1782
    %1791 = vmatprep.subr.mxu0 0.0
    %1792 = vmatpush1.msra.mxu0 %v1783
    %1793 = vmatprep.subr.mxu0 0.0
    %1794 = vmatpush1.msra.mxu0 %v1784
    %1795 = vmatprep.subr.mxu0 0.0
    %1796 = vmatpush1.msra.mxu0 %v1785
    %1797 = vmatprep.subr.mxu0 0.0
    %1798 = vmatpush1.msra.mxu0 0.0
    %1799 = vmatprep.subr.mxu0 0.0
    %1800 = vmatpush1.msra.mxu0 0.0
    %1801 = vmatprep.subr.mxu0 0.0
    %1802 = vmatpush1.msra.mxu0 0.0
    %1803 = vmatprep.subr.mxu0 0.0
    %1804 = vmatpush1.msra.mxu0 0.0
    %1805 = vmatprep.subr.mxu0 0.0
    %1806 = vmatpush1.msra.mxu0 0.0
    %1807 = vmatprep.subr.mxu0 0.0
    %1808 = vmatpush1.msra.mxu0 0.0
    %1809 = vmatprep.subr.mxu0 0.0
    %1810 = vmatpush1.msra.mxu0 0.0
    %1811 = vmatprep.subr.mxu0 0.0
    %1812 = vmatpush1.msra.mxu0 0.0
    %1813 = vmatprep.subr.mxu0 0.0
    %1814 = vmatpush1.msra.mxu0 0.0
    %1815 = vmatprep.subr.mxu0 0.0
    %1816 = vmatpush1.msra.mxu0 0.0
    %1817 = vmatprep.subr.mxu0 0.0
    %1818 = vmatpush1.msra.mxu0 0.0
    %1819 = vmatprep.subr.mxu0 0.0
    %1820 = vmatpush1.msra.mxu0 0.0
    %1821 = vmatprep.subr.mxu0 0.0
    %1822 = vmatpush1.msra.mxu0 0.0
    %1823 = vmatprep.subr.mxu0 0.0
    %1824 = vmatpush1.msra.mxu0 0.0
    %1825 = vmatprep.subr.mxu0 0.0
    %1826 = vmatpush1.msra.mxu0 0.0
    %1827 = vmatprep.subr.mxu0 0.0
    %1828 = vmatpush1.msra.mxu0 0.0
    %1829 = vmatprep.subr.mxu0 0.0
    %1830 = vmatpush1.msra.mxu0 0.0
    %1831 = vmatprep.subr.mxu0 0.0
    %1832 = vmatpush1.msra.mxu0 0.0
    %1833 = vmatprep.subr.mxu0 0.0
    %1834 = vmatpush1.msra.mxu0 0.0
    %1835 = vmatprep.subr.mxu0 0.0
    %1836 = vmatpush1.msra.mxu0 0.0
    %1837 = vmatprep.subr.mxu0 0.0
    %1838 = vmatpush1.msra.mxu0 0.0
    %1839 = vmatprep.subr.mxu0 0.0
    %1840 = vmatpush1.msra.mxu0 0.0
    %1841 = vmatprep.subr.mxu0 0.0
    %1842 = vmatpush1.msra.mxu0 0.0
    %1843 = vmatprep.subr.mxu0 0.0
    %1844 = vmatpush1.msra.mxu0 0.0
    %1845 = vmatprep.subr.mxu0 0.0
    %1846 = vmatpush1.msra.mxu0 0.0
    %1847 = vmatprep.subr.mxu0 0.0
    %1848 = vmatpush1.msra.mxu0 0.0
    %1849 = vmatprep.subr.mxu0 0.0
    %1850 = vmatpush1.msra.mxu0 0.0
    %1851 = vmatprep.subr.mxu0 0.0
    %1852 = vmatpush1.msra.mxu0 0.0
    %1853 = vmatprep.mubr.f32.mxu0 0.0
    %1854 = vmatmul.mubr.f32.gmra.mrb[0].mxu0 %v1787
    %v1855 = vpop.f32.mrb[0].mxu0
    %v1856 = vadd.f32 0.0, %v1855
    %v1857 = vpop.f32.mrb[0].mxu0
    %1858 = vdwg.mxu0
    %v1860 = vsel %vm388, %v1766, 0
    %1862 = vmatprep.subr.mxu0 0.0
    %1863 = vmatpush1.msra.mxu0 %v1778
    %1864 = vmatprep.subr.mxu0 0.0
    %1865 = vmatpush1.msra.mxu0 %v1779
    %1866 = vmatprep.subr.mxu0 0.0
    %1867 = vmatpush1.msra.mxu0 %v1780
    %1868 = vmatprep.subr.mxu0 0.0
    %1869 = vmatpush1.msra.mxu0 %v1781
    %1870 = vmatprep.subr.mxu0 0.0
    %1871 = vmatpush1.msra.mxu0 0.0
    %1872 = vmatprep.subr.mxu0 0.0
    %1873 = vmatpush1.msra.mxu0 0.0
    %1874 = vmatprep.subr.mxu0 0.0
    %1875 = vmatpush1.msra.mxu0 0.0
    %1876 = vmatprep.subr.mxu0 0.0
    %1877 = vmatpush1.msra.mxu0 0.0
    %1878 = vmatprep.subr.mxu0 0.0
    %1879 = vmatpush1.msra.mxu0 0.0
    %1880 = vmatprep.subr.mxu0 0.0
    %1881 = vmatpush1.msra.mxu0 0.0
    %1882 = vmatprep.subr.mxu0 0.0
    %1883 = vmatpush1.msra.mxu0 0.0
    %1884 = vmatprep.subr.mxu0 0.0
    %1885 = vmatpush1.msra.mxu0 0.0
    %1886 = vmatprep.subr.mxu0 0.0
    %1887 = vmatpush1.msra.mxu0 0.0
    %1888 = vmatprep.subr.mxu0 0.0
    %1889 = vmatpush1.msra.mxu0 0.0
    %1890 = vmatprep.subr.mxu0 0.0
    %1891 = vmatpush1.msra.mxu0 0.0
    %1892 = vmatprep.subr.mxu0 0.0
    %1893 = vmatpush1.msra.mxu0 0.0
    %1894 = vmatprep.subr.mxu0 0.0
    %1895 = vmatpush1.msra.mxu0 0.0
    %1896 = vmatprep.subr.mxu0 0.0
    %1897 = vmatpush1.msra.mxu0 0.0
    %1898 = vmatprep.subr.mxu0 0.0
    %1899 = vmatpush1.msra.mxu0 0.0
    %1900 = vmatprep.subr.mxu0 0.0
    %1901 = vmatpush1.msra.mxu0 0.0
    %1902 = vmatprep.subr.mxu0 0.0
    %1903 = vmatpush1.msra.mxu0 0.0
    %1904 = vmatprep.subr.mxu0 0.0
    %1905 = vmatpush1.msra.mxu0 0.0
    %1906 = vmatprep.subr.mxu0 0.0
    %1907 = vmatpush1.msra.mxu0 0.0
    %1908 = vmatprep.subr.mxu0 0.0
    %1909 = vmatpush1.msra.mxu0 0.0
    %1910 = vmatprep.subr.mxu0 0.0
    %1911 = vmatpush1.msra.mxu0 0.0
    %1912 = vmatprep.subr.mxu0 0.0
    %1913 = vmatpush1.msra.mxu0 0.0
    %1914 = vmatprep.subr.mxu0 0.0
    %1915 = vmatpush1.msra.mxu0 0.0
    %1916 = vmatprep.subr.mxu0 0.0
    %1917 = vmatpush1.msra.mxu0 0.0
    %1918 = vmatprep.subr.mxu0 0.0
    %1919 = vmatpush1.msra.mxu0 0.0
    %1920 = vmatprep.subr.mxu0 0.0
    %1921 = vmatpush1.msra.mxu0 0.0
    %1922 = vmatprep.subr.mxu0 0.0
    %1923 = vmatpush1.msra.mxu0 0.0
    %1924 = vmatprep.subr.mxu0 0.0
    %1925 = vmatpush1.msra.mxu0 0.0
    %1926 = vmatprep.mubr.f32.mxu0 0.0
    %1927 = vmatmul.mubr.f32.gmra.mrb[0].mxu0 %v1860
    %v1928 = vpop.f32.mrb[0].mxu0
    %v1929 = vadd.f32 %v1856, %v1928
    %v1930 = vpop.f32.mrb[0].mxu0
    %1931 = vdwg.mxu0
    %v1932 = vld [vmem:[#allocation2 + $0x1f8] sm:$0x1]
    %v1933 = vlaneseq
    %v1934 = vshrl.u32 %v1933, 7
    %v1935 = vsub.s32 0, %v1934
    %v1936 = vrot.slane %v1932, %v1935
    %v1937 = vadd.f32 %v1929, %v1936
    %v1938 = vmax.f32 %v1937, 0.0
    %1939 = vmatprep.subr.mxu0 0.0
    %1940 = vmatpush1.msra.mxu0 %v1938
    %1941 = vmatprep.subr.mxu0 0.0
    %1942 = vmatpush1.msra.mxu0 0.0
    %1943 = vmatprep.subr.mxu0 0.0
    %1944 = vmatpush1.msra.mxu0 0.0
    %1945 = vmatprep.subr.mxu0 0.0
    %1946 = vmatpush1.msra.mxu0 0.0
    %1947 = vmatprep.subr.mxu0 0.0
    %1948 = vmatpush1.msra.mxu0 0.0
    %1949 = vmatprep.subr.mxu0 0.0
    %1950 = vmatpush1.msra.mxu0 0.0
    %1951 = vmatprep.subr.mxu0 0.0
    %1952 = vmatpush1.msra.mxu0 0.0
    %1953 = vmatprep.subr.mxu0 0.0
    %1954 = vmatpush1.msra.mxu0 0.0
    %1955 = vmatprep.subr.mxu0 0.0
    %1956 = vmatpush1.msra.mxu0 0.0
    %1957 = vmatprep.subr.mxu0 0.0
    %1958 = vmatpush1.msra.mxu0 0.0
    %1959 = vmatprep.subr.mxu0 0.0
    %1960 = vmatpush1.msra.mxu0 0.0
    %1961 = vmatprep.subr.mxu0 0.0
    %1962 = vmatpush1.msra.mxu0 0.0
    %1963 = vmatprep.subr.mxu0 0.0
    %1964 = vmatpush1.msra.mxu0 0.0
    %1965 = vmatprep.subr.mxu0 0.0
    %1966 = vmatpush1.msra.mxu0 0.0
    %1967 = vmatprep.subr.mxu0 0.0
    %1968 = vmatpush1.msra.mxu0 0.0
    %1969 = vmatprep.subr.mxu0 0.0
    %1970 = vmatpush1.msra.mxu0 0.0
    %1971 = vmatprep.subr.mxu0 0.0
    %1972 = vmatpush1.msra.mxu0 0.0
    %1973 = vmatprep.subr.mxu0 0.0
    %1974 = vmatpush1.msra.mxu0 0.0
    %1975 = vmatprep.subr.mxu0 0.0
    %1976 = vmatpush1.msra.mxu0 0.0
    %1977 = vmatprep.subr.mxu0 0.0
    %1978 = vmatpush1.msra.mxu0 0.0
    %1979 = vmatprep.subr.mxu0 0.0
    %1980 = vmatpush1.msra.mxu0 0.0
    %1981 = vmatprep.subr.mxu0 0.0
    %1982 = vmatpush1.msra.mxu0 0.0
    %1983 = vmatprep.subr.mxu0 0.0
    %1984 = vmatpush1.msra.mxu0 0.0
    %1985 = vmatprep.subr.mxu0 0.0
    %1986 = vmatpush1.msra.mxu0 0.0
    %1987 = vmatprep.subr.mxu0 0.0
    %1988 = vmatpush1.msra.mxu0 0.0
    %1989 = vmatprep.subr.mxu0 0.0
    %1990 = vmatpush1.msra.mxu0 0.0
    %1991 = vmatprep.subr.mxu0 0.0
    %1992 = vmatpush1.msra.mxu0 0.0
    %1993 = vmatprep.subr.mxu0 0.0
    %1994 = vmatpush1.msra.mxu0 0.0
    %1995 = vmatprep.subr.mxu0 0.0
    %1996 = vmatpush1.msra.mxu0 0.0
    %1997 = vmatprep.subr.mxu0 0.0
    %1998 = vmatpush1.msra.mxu0 0.0
    %1999 = vmatprep.subr.mxu0 0.0
    %2000 = vmatpush1.msra.mxu0 0.0
    %2001 = vmatprep.subr.mxu0 0.0
    %2002 = vmatpush1.msra.mxu0 0.0
    %2003 = vmatprep.mubr.f32.mxu0 0.0
    %2004 = vmatmul.mubr.f32.gmra.mrb[0].mxu0 %v893
    %v2005 = vpop.f32.mrb[0].mxu0
    %v2006 = vadd.f32 0.0, %v2005
    %v2007 = vpop.f32.mrb[0].mxu0
    %2008 = vdwg.mxu0
    %v2009 = vld [vmem:[#allocation2 + $0x200] sm:$0xff]
    %v2010 = vld [vmem:[#allocation2 + $0x208] sm:$0xff]
    %v2011 = vld [vmem:[#allocation2 + $0x210] sm:$0xff]
    %v2012 = vld [vmem:[#allocation2 + $0x218] sm:$0xff]
    %v2013 = vld [vmem:[#allocation2 + $0x220] sm:$0xff]
    %v2014 = vld [vmem:[#allocation2 + $0x228] sm:$0xff]
    %v2015 = vld [vmem:[#allocation2 + $0x230] sm:$0xff]
    %v2016 = vld [vmem:[#allocation2 + $0x238] sm:$0xff]
    %v2018 = vsel %vm388, %v2006, 0
    %2020 = vmatprep.subr.mxu0 0.0
    %2021 = vmatpush1.msra.mxu0 %v2013
    %2022 = vmatprep.subr.mxu0 0.0
    %2023 = vmatpush1.msra.mxu0 %v2014
    %2024 = vmatprep.subr.mxu0 0.0
    %2025 = vmatpush1.msra.mxu0 %v2015
    %2026 = vmatprep.subr.mxu0 0.0
    %2027 = vmatpush1.msra.mxu0 %v2016
    %2028 = vmatprep.subr.mxu0 0.0
    %2029 = vmatpush1.msra.mxu0 0.0
    %2030 = vmatprep.subr.mxu0 0.0
    %2031 = vmatpush1.msra.mxu0 0.0
    %2032 = vmatprep.subr.mxu0 0.0
    %2033 = vmatpush1.msra.mxu0 0.0
    %2034 = vmatprep.subr.mxu0 0.0
    %2035 = vmatpush1.msra.mxu0 0.0
    %2036 = vmatprep.subr.mxu0 0.0
    %2037 = vmatpush1.msra.mxu0 0.0
    %2038 = vmatprep.subr.mxu0 0.0
    %2039 = vmatpush1.msra.mxu0 0.0
    %2040 = vmatprep.subr.mxu0 0.0
    %2041 = vmatpush1.msra.mxu0 0.0
    %2042 = vmatprep.subr.mxu0 0.0
    %2043 = vmatpush1.msra.mxu0 0.0
    %2044 = vmatprep.subr.mxu0 0.0
    %2045 = vmatpush1.msra.mxu0 0.0
    %2046 = vmatprep.subr.mxu0 0.0
    %2047 = vmatpush1.msra.mxu0 0.0
    %2048 = vmatprep.subr.mxu0 0.0
    %2049 = vmatpush1.msra.mxu0 0.0
    %2050 = vmatprep.subr.mxu0 0.0
    %2051 = vmatpush1.msra.mxu0 0.0
    %2052 = vmatprep.subr.mxu0 0.0
    %2053 = vmatpush1.msra.mxu0 0.0
    %2054 = vmatprep.subr.mxu0 0.0
    %2055 = vmatpush1.msra.mxu0 0.0
    %2056 = vmatprep.subr.mxu0 0.0
    %2057 = vmatpush1.msra.mxu0 0.0
    %2058 = vmatprep.subr.mxu0 0.0
    %2059 = vmatpush1.msra.mxu0 0.0
    %2060 = vmatprep.subr.mxu0 0.0
    %2061 = vmatpush1.msra.mxu0 0.0
    %2062 = vmatprep.subr.mxu0 0.0
    %2063 = vmatpush1.msra.mxu0 0.0
    %2064 = vmatprep.subr.mxu0 0.0
    %2065 = vmatpush1.msra.mxu0 0.0
    %2066 = vmatprep.subr.mxu0 0.0
    %2067 = vmatpush1.msra.mxu0 0.0
    %2068 = vmatprep.subr.mxu0 0.0
    %2069 = vmatpush1.msra.mxu0 0.0
    %2070 = vmatprep.subr.mxu0 0.0
    %2071 = vmatpush1.msra.mxu0 0.0
    %2072 = vmatprep.subr.mxu0 0.0
    %2073 = vmatpush1.msra.mxu0 0.0
    %2074 = vmatprep.subr.mxu0 0.0
    %2075 = vmatpush1.msra.mxu0 0.0
    %2076 = vmatprep.subr.mxu0 0.0
    %2077 = vmatpush1.msra.mxu0 0.0
    %2078 = vmatprep.subr.mxu0 0.0
    %2079 = vmatpush1.msra.mxu0 0.0
    %2080 = vmatprep.subr.mxu0 0.0
    %2081 = vmatpush1.msra.mxu0 0.0
    %2082 = vmatprep.subr.mxu0 0.0
    %2083 = vmatpush1.msra.mxu0 0.0
    %2084 = vmatprep.mubr.f32.mxu0 0.0
    %2085 = vmatmul.mubr.f32.gmra.mrb[0].mxu0 %v2018
    %v2086 = vpop.f32.mrb[0].mxu0
    %v2087 = vadd.f32 0.0, %v2086
    %v2088 = vpop.f32.mrb[0].mxu0
    %2089 = vdwg.mxu0
    %v2091 = vsel %vm388, %v1125, 0
    %2093 = vmatprep.subr.mxu0 0.0
    %2094 = vmatpush1.msra.mxu0 %v2009
    %2095 = vmatprep.subr.mxu0 0.0
    %2096 = vmatpush1.msra.mxu0 %v2010
    %2097 = vmatprep.subr.mxu0 0.0
    %2098 = vmatpush1.msra.mxu0 %v2011
    %2099 = vmatprep.subr.mxu0 0.0
    %2100 = vmatpush1.msra.mxu0 %v2012
    %2101 = vmatprep.subr.mxu0 0.0
    %2102 = vmatpush1.msra.mxu0 0.0
    %2103 = vmatprep.subr.mxu0 0.0
    %2104 = vmatpush1.msra.mxu0 0.0
    %2105 = vmatprep.subr.mxu0 0.0
    %2106 = vmatpush1.msra.mxu0 0.0
    %2107 = vmatprep.subr.mxu0 0.0
    %2108 = vmatpush1.msra.mxu0 0.0
    %2109 = vmatprep.subr.mxu0 0.0
    %2110 = vmatpush1.msra.mxu0 0.0
    %2111 = vmatprep.subr.mxu0 0.0
    %2112 = vmatpush1.msra.mxu0 0.0
    %2113 = vmatprep.subr.mxu0 0.0
    %2114 = vmatpush1.msra.mxu0 0.0
    %2115 = vmatprep.subr.mxu0 0.0
    %2116 = vmatpush1.msra.mxu0 0.0
    %2117 = vmatprep.subr.mxu0 0.0
    %2118 = vmatpush1.msra.mxu0 0.0
    %2119 = vmatprep.subr.mxu0 0.0
    %2120 = vmatpush1.msra.mxu0 0.0
    %2121 = vmatprep.subr.mxu0 0.0
    %2122 = vmatpush1.msra.mxu0 0.0
    %2123 = vmatprep.subr.mxu0 0.0
    %2124 = vmatpush1.msra.mxu0 0.0
    %2125 = vmatprep.subr.mxu0 0.0
    %2126 = vmatpush1.msra.mxu0 0.0
    %2127 = vmatprep.subr.mxu0 0.0
    %2128 = vmatpush1.msra.mxu0 0.0
    %2129 = vmatprep.subr.mxu0 0.0
    %2130 = vmatpush1.msra.mxu0 0.0
    %2131 = vmatprep.subr.mxu0 0.0
    %2132 = vmatpush1.msra.mxu0 0.0
    %2133 = vmatprep.subr.mxu0 0.0
    %2134 = vmatpush1.msra.mxu0 0.0
    %2135 = vmatprep.subr.mxu0 0.0
    %2136 = vmatpush1.msra.mxu0 0.0
    %2137 = vmatprep.subr.mxu0 0.0
    %2138 = vmatpush1.msra.mxu0 0.0
    %2139 = vmatprep.subr.mxu0 0.0
    %2140 = vmatpush1.msra.mxu0 0.0
    %2141 = vmatprep.subr.mxu0 0.0
    %2142 = vmatpush1.msra.mxu0 0.0
    %2143 = vmatprep.subr.mxu0 0.0
    %2144 = vmatpush1.msra.mxu0 0.0
    %2145 = vmatprep.subr.mxu0 0.0
    %2146 = vmatpush1.msra.mxu0 0.0
    %2147 = vmatprep.subr.mxu0 0.0
    %2148 = vmatpush1.msra.mxu0 0.0
    %2149 = vmatprep.subr.mxu0 0.0
    %2150 = vmatpush1.msra.mxu0 0.0
    %2151 = vmatprep.subr.mxu0 0.0
    %2152 = vmatpush1.msra.mxu0 0.0
    %2153 = vmatprep.subr.mxu0 0.0
    %2154 = vmatpush1.msra.mxu0 0.0
    %2155 = vmatprep.subr.mxu0 0.0
    %2156 = vmatpush1.msra.mxu0 0.0
    %2157 = vmatprep.mubr.f32.mxu0 0.0
    %2158 = vmatmul.mubr.f32.gmra.mrb[0].mxu0 %v2091
    %v2159 = vpop.f32.mrb[0].mxu0
    %v2160 = vadd.f32 %v2087, %v2159
    %v2161 = vpop.f32.mrb[0].mxu0
    %2162 = vdwg.mxu0
    %v2163 = vld [vmem:[#allocation2 + $0x240] sm:$0x1]
    %v2164 = vlaneseq
    %v2165 = vshrl.u32 %v2164, 7
    %v2166 = vsub.s32 0, %v2165
    %v2167 = vrot.slane %v2163, %v2166
    %v2168 = vadd.f32 %v2160, %v2167
    %v2169 = vmax.f32 %v2168, 0.0
    %v2170 = vadd.f32 %v891, %v1938
    %v2171 = vadd.f32 %v300, %v1372
    %v2172 = vadd.f32 %v301, %v1373
    %v2173 = vadd.f32 %v1125, %v2169
    %v2174 = vld [vmem:[#allocation2 + $0x40] sm:$0x3]
    %2176 = vset.pattern.permute.xlu0 0
    %2177 = vperm.xlu0 %2176, %v2174
    %v2178 = vpop.permute.xlu0 %2177
    %v2180 = vlaneseq
    %v2181 = vshrl.u32 %v2180, 7
    %v2182 = vsub.s32 0, %v2181
    %v2183 = vrot.slane %v2173, %v2182
    %v2184 = vmul.f32 %v2178, %v2183
    %2185 = vset.pattern.permute.xlu0 1
    %2186 = vperm.xlu0 %2185, %v2174
    %v2187 = vpop.permute.xlu0 %2186
    %v2189 = vlaneseq
    %v2190 = vshrl.u32 %v2189, 7
    %v2191 = vsub.s32 1, %v2190
    %v2192 = vrot.slane %v2173, %v2191
    %v2193 = vmul.f32 %v2187, %v2192
    %v2194 = vadd.f32 %v2184, %v2193
    %v2195 = vld [vmem:[%s1 + $0x20] sm:$0x3]
    %v2196 = vld [vmem:[#allocation2 + $0x248] sm:$0xff]
    %v2197 = vld [vmem:[#allocation2 + $0x250] sm:$0xff]
    %v2198 = vld [vmem:[#allocation2 + $0x258] sm:$0xff]
    %v2199 = vld [vmem:[#allocation2 + $0x260] sm:$0xff]
    %v2200 = vld [vmem:[#allocation2 + $0x268] sm:$0x3]
    %2202 = vset.pattern.permute.xlu0 0
    %2203 = vperm.xlu0 %2202, %v2195
    %v2204 = vpop.permute.xlu0 %2203
    %v2206 = vlaneseq
    %v2207 = vshrl.u32 %v2206, 7
    %v2208 = vsub.s32 0, %v2207
    %v2209 = vrot.slane %v2200, %v2208
    %v2210 = vmul.f32 %v2204, %v2209
    %2211 = vset.pattern.permute.xlu0 1
    %2212 = vperm.xlu0 %2211, %v2195
    %v2213 = vpop.permute.xlu0 %2212
    %v2215 = vlaneseq
    %v2216 = vshrl.u32 %v2215, 7
    %v2217 = vsub.s32 1, %v2216
    %v2218 = vrot.slane %v2200, %v2217
    %v2219 = vmul.f32 %v2213, %v2218
    %v2220 = vadd.f32 %v2210, %v2219
    %v2222 = vsel %vm388, %v2194, 0
    %2224 = vmatprep.subr.mxu0 0.0
    %2225 = vmatpush1.msra.mxu0 %v2196
    %2226 = vmatprep.subr.mxu0 0.0
    %2227 = vmatpush1.msra.mxu0 %v2197
    %2228 = vmatprep.subr.mxu0 0.0
    %2229 = vmatpush1.msra.mxu0 %v2198
    %2230 = vmatprep.subr.mxu0 0.0
    %2231 = vmatpush1.msra.mxu0 %v2199
    %2232 = vmatprep.subr.mxu0 0.0
    %2233 = vmatpush1.msra.mxu0 0.0
    %2234 = vmatprep.subr.mxu0 0.0
    %2235 = vmatpush1.msra.mxu0 0.0
    %2236 = vmatprep.subr.mxu0 0.0
    %2237 = vmatpush1.msra.mxu0 0.0
    %2238 = vmatprep.subr.mxu0 0.0
    %2239 = vmatpush1.msra.mxu0 0.0
    %2240 = vmatprep.subr.mxu0 0.0
    %2241 = vmatpush1.msra.mxu0 0.0
    %2242 = vmatprep.subr.mxu0 0.0
    %2243 = vmatpush1.msra.mxu0 0.0
    %2244 = vmatprep.subr.mxu0 0.0
    %2245 = vmatpush1.msra.mxu0 0.0
    %2246 = vmatprep.subr.mxu0 0.0
    %2247 = vmatpush1.msra.mxu0 0.0
    %2248 = vmatprep.subr.mxu0 0.0
    %2249 = vmatpush1.msra.mxu0 0.0
    %2250 = vmatprep.subr.mxu0 0.0
    %2251 = vmatpush1.msra.mxu0 0.0
    %2252 = vmatprep.subr.mxu0 0.0
    %2253 = vmatpush1.msra.mxu0 0.0
    %2254 = vmatprep.subr.mxu0 0.0
    %2255 = vmatpush1.msra.mxu0 0.0
    %2256 = vmatprep.subr.mxu0 0.0
    %2257 = vmatpush1.msra.mxu0 0.0
    %2258 = vmatprep.subr.mxu0 0.0
    %2259 = vmatpush1.msra.mxu0 0.0
    %2260 = vmatprep.subr.mxu0 0.0
    %2261 = vmatpush1.msra.mxu0 0.0
    %2262 = vmatprep.subr.mxu0 0.0
    %2263 = vmatpush1.msra.mxu0 0.0
    %2264 = vmatprep.subr.mxu0 0.0
    %2265 = vmatpush1.msra.mxu0 0.0
    %2266 = vmatprep.subr.mxu0 0.0
    %2267 = vmatpush1.msra.mxu0 0.0
    %2268 = vmatprep.subr.mxu0 0.0
    %2269 = vmatpush1.msra.mxu0 0.0
    %2270 = vmatprep.subr.mxu0 0.0
    %2271 = vmatpush1.msra.mxu0 0.0
    %2272 = vmatprep.subr.mxu0 0.0
    %2273 = vmatpush1.msra.mxu0 0.0
    %2274 = vmatprep.subr.mxu0 0.0
    %2275 = vmatpush1.msra.mxu0 0.0
    %2276 = vmatprep.subr.mxu0 0.0
    %2277 = vmatpush1.msra.mxu0 0.0
    %2278 = vmatprep.subr.mxu0 0.0
    %2279 = vmatpush1.msra.mxu0 0.0
    %2280 = vmatprep.subr.mxu0 0.0
    %2281 = vmatpush1.msra.mxu0 0.0
    %2282 = vmatprep.subr.mxu0 0.0
    %2283 = vmatpush1.msra.mxu0 0.0
    %2284 = vmatprep.subr.mxu0 0.0
    %2285 = vmatpush1.msra.mxu0 0.0
    %2286 = vmatprep.subr.mxu0 0.0
    %2287 = vmatpush1.msra.mxu0 0.0
    %2288 = vmatprep.mubr.f32.mxu0 0.0
    %2289 = vmatmul.mubr.f32.gmra.mrb[0].mxu0 %v2222
    %v2290 = vpop.f32.mrb[0].mxu0
    %v2291 = vadd.f32 %v2220, %v2290
    %v2292 = vpop.f32.mrb[0].mxu0
    %2293 = vdwg.mxu0
    %v2294 = vld [vmem:[#allocation2 + $0x270] sm:$0x1]
    %v2295 = vlaneseq
    %v2296 = vshrl.u32 %v2295, 7
    %v2297 = vsub.s32 0, %v2296
    %v2298 = vrot.slane %v2294, %v2297
    %v2299 = vadd.f32 %v2291, %v2298
    %v2300 = vld [vmem:[#allocation2 + $0x48] sm:$0x3]
    %2302 = vset.pattern.permute.xlu0 0
    %2303 = vperm.xlu0 %2302, %v2300
    %v2304 = vpop.permute.xlu0 %2303
    %v2306 = vlaneseq
    %v2307 = vshrl.u32 %v2306, 7
    %v2308 = vsub.s32 0, %v2307
    %v2309 = vrot.slane %v2299, %v2308
    %v2310 = vmul.f32 %v2304, %v2309
    %2311 = vset.pattern.permute.xlu0 1
    %2312 = vperm.xlu0 %2311, %v2300
    %v2313 = vpop.permute.xlu0 %2312
    %v2315 = vlaneseq
    %v2316 = vshrl.u32 %v2315, 7
    %v2317 = vsub.s32 1, %v2316
    %v2318 = vrot.slane %v2299, %v2317
    %v2319 = vmul.f32 %v2313, %v2318
    %v2320 = vadd.f32 %v2310, %v2319
    %v2321 = vadd.f32 %v2320, 0.0
    %v2322 = vld [vmem:[#allocation2 + $0x50] sm:$0x3]
    %v2324 = vsel %vm37, %v2322, 0
    %2326 = vmatprep.subr.mxu0 0.0
    %2327 = vmatpush1.msra.mxu0 %v2170
    %2328 = vmatprep.subr.mxu0 0.0
    %2329 = vmatpush1.msra.mxu0 0.0
    %2330 = vmatprep.subr.mxu0 0.0
    %2331 = vmatpush1.msra.mxu0 0.0
    %2332 = vmatprep.subr.mxu0 0.0
    %2333 = vmatpush1.msra.mxu0 0.0
    %2334 = vmatprep.subr.mxu0 0.0
    %2335 = vmatpush1.msra.mxu0 0.0
    %2336 = vmatprep.subr.mxu0 0.0
    %2337 = vmatpush1.msra.mxu0 0.0
    %2338 = vmatprep.subr.mxu0 0.0
    %2339 = vmatpush1.msra.mxu0 0.0
    %2340 = vmatprep.subr.mxu0 0.0
    %2341 = vmatpush1.msra.mxu0 0.0
    %2342 = vmatprep.subr.mxu0 0.0
    %2343 = vmatpush1.msra.mxu0 0.0
    %2344 = vmatprep.subr.mxu0 0.0
    %2345 = vmatpush1.msra.mxu0 0.0
    %2346 = vmatprep.subr.mxu0 0.0
    %2347 = vmatpush1.msra.mxu0 0.0
    %2348 = vmatprep.subr.mxu0 0.0
    %2349 = vmatpush1.msra.mxu0 0.0
    %2350 = vmatprep.subr.mxu0 0.0
    %2351 = vmatpush1.msra.mxu0 0.0
    %2352 = vmatprep.subr.mxu0 0.0
    %2353 = vmatpush1.msra.mxu0 0.0
    %2354 = vmatprep.subr.mxu0 0.0
    %2355 = vmatpush1.msra.mxu0 0.0
    %2356 = vmatprep.subr.mxu0 0.0
    %2357 = vmatpush1.msra.mxu0 0.0
    %2358 = vmatprep.subr.mxu0 0.0
    %2359 = vmatpush1.msra.mxu0 0.0
    %2360 = vmatprep.subr.mxu0 0.0
    %2361 = vmatpush1.msra.mxu0 0.0
    %2362 = vmatprep.subr.mxu0 0.0
    %2363 = vmatpush1.msra.mxu0 0.0
    %2364 = vmatprep.subr.mxu0 0.0
    %2365 = vmatpush1.msra.mxu0 0.0
    %2366 = vmatprep.subr.mxu0 0.0
    %2367 = vmatpush1.msra.mxu0 0.0
    %2368 = vmatprep.subr.mxu0 0.0
    %2369 = vmatpush1.msra.mxu0 0.0
    %2370 = vmatprep.subr.mxu0 0.0
    %2371 = vmatpush1.msra.mxu0 0.0
    %2372 = vmatprep.subr.mxu0 0.0
    %2373 = vmatpush1.msra.mxu0 0.0
    %2374 = vmatprep.subr.mxu0 0.0
    %2375 = vmatpush1.msra.mxu0 0.0
    %2376 = vmatprep.subr.mxu0 0.0
    %2377 = vmatpush1.msra.mxu0 0.0
    %2378 = vmatprep.subr.mxu0 0.0
    %2379 = vmatpush1.msra.mxu0 0.0
    %2380 = vmatprep.subr.mxu0 0.0
    %2381 = vmatpush1.msra.mxu0 0.0
    %2382 = vmatprep.subr.mxu0 0.0
    %2383 = vmatpush1.msra.mxu0 0.0
    %2384 = vmatprep.subr.mxu0 0.0
    %2385 = vmatpush1.msra.mxu0 0.0
    %2386 = vmatprep.subr.mxu0 0.0
    %2387 = vmatpush1.msra.mxu0 0.0
    %2388 = vmatprep.subr.mxu0 0.0
    %2389 = vmatpush1.msra.mxu0 0.0
    %2390 = vmatprep.mubr.f32.mxu0 0.0
    %2391 = vmatmul.mubr.f32.gmra.mrb[0].mxu0 %v2324
    %v2392 = vpop.f32.mrb[0].mxu0
    %v2393 = vadd.f32 0.0, %v2392
    %v2394 = vpop.f32.mrb[0].mxu0
    %2395 = vdwg.mxu0
    %v2396 = vld [vmem:[%s1 + $0x28] sm:$0x3]
    %v2397 = vld [vmem:[#allocation2 + $0x278] sm:$0xff]
    %v2398 = vld [vmem:[#allocation2 + $0x280] sm:$0xff]
    %v2399 = vld [vmem:[#allocation2 + $0x288] sm:$0xff]
    %v2400 = vld [vmem:[#allocation2 + $0x290] sm:$0xff]
    %v2401 = vld [vmem:[#allocation2 + $0x298] sm:$0x3]
    %2403 = vset.pattern.permute.xlu0 0
    %2404 = vperm.xlu0 %2403, %v2396
    %v2405 = vpop.permute.xlu0 %2404
    %v2407 = vlaneseq
    %v2408 = vshrl.u32 %v2407, 7
    %v2409 = vsub.s32 0, %v2408
    %v2410 = vrot.slane %v2401, %v2409
    %v2411 = vmul.f32 %v2405, %v2410
    %2412 = vset.pattern.permute.xlu0 1
    %2413 = vperm.xlu0 %2412, %v2396
    %v2414 = vpop.permute.xlu0 %2413
    %v2416 = vlaneseq
    %v2417 = vshrl.u32 %v2416, 7
    %v2418 = vsub.s32 1, %v2417
    %v2419 = vrot.slane %v2401, %v2418
    %v2420 = vmul.f32 %v2414, %v2419
    %v2421 = vadd.f32 %v2411, %v2420
    %v2423 = vsel %vm388, %v2393, 0
    %2425 = vmatprep.subr.mxu0 0.0
    %2426 = vmatpush1.msra.mxu0 %v2397
    %2427 = vmatprep.subr.mxu0 0.0
    %2428 = vmatpush1.msra.mxu0 %v2398
    %2429 = vmatprep.subr.mxu0 0.0
    %2430 = vmatpush1.msra.mxu0 %v2399
    %2431 = vmatprep.subr.mxu0 0.0
    %2432 = vmatpush1.msra.mxu0 %v2400
    %2433 = vmatprep.subr.mxu0 0.0
    %2434 = vmatpush1.msra.mxu0 0.0
    %2435 = vmatprep.subr.mxu0 0.0
    %2436 = vmatpush1.msra.mxu0 0.0
    %2437 = vmatprep.subr.mxu0 0.0
    %2438 = vmatpush1.msra.mxu0 0.0
    %2439 = vmatprep.subr.mxu0 0.0
    %2440 = vmatpush1.msra.mxu0 0.0
    %2441 = vmatprep.subr.mxu0 0.0
    %2442 = vmatpush1.msra.mxu0 0.0
    %2443 = vmatprep.subr.mxu0 0.0
    %2444 = vmatpush1.msra.mxu0 0.0
    %2445 = vmatprep.subr.mxu0 0.0
    %2446 = vmatpush1.msra.mxu0 0.0
    %2447 = vmatprep.subr.mxu0 0.0
    %2448 = vmatpush1.msra.mxu0 0.0
    %2449 = vmatprep.subr.mxu0 0.0
    %2450 = vmatpush1.msra.mxu0 0.0
    %2451 = vmatprep.subr.mxu0 0.0
    %2452 = vmatpush1.msra.mxu0 0.0
    %2453 = vmatprep.subr.mxu0 0.0
    %2454 = vmatpush1.msra.mxu0 0.0
    %2455 = vmatprep.subr.mxu0 0.0
    %2456 = vmatpush1.msra.mxu0 0.0
    %2457 = vmatprep.subr.mxu0 0.0
    %2458 = vmatpush1.msra.mxu0 0.0
    %2459 = vmatprep.subr.mxu0 0.0
    %2460 = vmatpush1.msra.mxu0 0.0
    %2461 = vmatprep.subr.mxu0 0.0
    %2462 = vmatpush1.msra.mxu0 0.0
    %2463 = vmatprep.subr.mxu0 0.0
    %2464 = vmatpush1.msra.mxu0 0.0
    %2465 = vmatprep.subr.mxu0 0.0
    %2466 = vmatpush1.msra.mxu0 0.0
    %2467 = vmatprep.subr.mxu0 0.0
    %2468 = vmatpush1.msra.mxu0 0.0
    %2469 = vmatprep.subr.mxu0 0.0
    %2470 = vmatpush1.msra.mxu0 0.0
    %2471 = vmatprep.subr.mxu0 0.0
    %2472 = vmatpush1.msra.mxu0 0.0
    %2473 = vmatprep.subr.mxu0 0.0
    %2474 = vmatpush1.msra.mxu0 0.0
    %2475 = vmatprep.subr.mxu0 0.0
    %2476 = vmatpush1.msra.mxu0 0.0
    %2477 = vmatprep.subr.mxu0 0.0
    %2478 = vmatpush1.msra.mxu0 0.0
    %2479 = vmatprep.subr.mxu0 0.0
    %2480 = vmatpush1.msra.mxu0 0.0
    %2481 = vmatprep.subr.mxu0 0.0
    %2482 = vmatpush1.msra.mxu0 0.0
    %2483 = vmatprep.subr.mxu0 0.0
    %2484 = vmatpush1.msra.mxu0 0.0
    %2485 = vmatprep.subr.mxu0 0.0
    %2486 = vmatpush1.msra.mxu0 0.0
    %2487 = vmatprep.subr.mxu0 0.0
    %2488 = vmatpush1.msra.mxu0 0.0
    %2489 = vmatprep.mubr.f32.mxu0 0.0
    %2490 = vmatmul.mubr.f32.gmra.mrb[0].mxu0 %v2423
    %v2491 = vpop.f32.mrb[0].mxu0
    %v2492 = vadd.f32 %v2421, %v2491
    %v2493 = vpop.f32.mrb[0].mxu0
    %2494 = vdwg.mxu0
    %v2495 = vld [vmem:[#allocation2 + $0x2a0] sm:$0x1]
    %v2496 = vlaneseq
    %v2497 = vshrl.u32 %v2496, 7
    %v2498 = vsub.s32 0, %v2497
    %v2499 = vrot.slane %v2495, %v2498
    %v2500 = vadd.f32 %v2492, %v2499
    %v2501 = vld [vmem:[#allocation2 + $0x58] sm:$0x3]
    %2503 = vset.pattern.permute.xlu0 0
    %2504 = vperm.xlu0 %2503, %v2501
    %v2505 = vpop.permute.xlu0 %2504
    %v2507 = vlaneseq
    %v2508 = vshrl.u32 %v2507, 7
    %v2509 = vsub.s32 0, %v2508
    %v2510 = vrot.slane %v2500, %v2509
    %v2511 = vmul.f32 %v2505, %v2510
    %2512 = vset.pattern.permute.xlu0 1
    %2513 = vperm.xlu0 %2512, %v2501
    %v2514 = vpop.permute.xlu0 %2513
    %v2516 = vlaneseq
    %v2517 = vshrl.u32 %v2516, 7
    %v2518 = vsub.s32 1, %v2517
    %v2519 = vrot.slane %v2500, %v2518
    %v2520 = vmul.f32 %v2514, %v2519
    %v2521 = vadd.f32 %v2511, %v2520
    %v2522 = vadd.f32 %v2321, %v2521
    %v2523 = vld [vmem:[#allocation2 + $0x60] sm:$0x3]
    %v2525 = vsel %vm37, %v2523, 0
    %2527 = vmatprep.subr.mxu0 0.0
    %2528 = vmatpush1.msra.mxu0 %v2170
    %2529 = vmatprep.subr.mxu0 0.0
    %2530 = vmatpush1.msra.mxu0 0.0
    %2531 = vmatprep.subr.mxu0 0.0
    %2532 = vmatpush1.msra.mxu0 0.0
    %2533 = vmatprep.subr.mxu0 0.0
    %2534 = vmatpush1.msra.mxu0 0.0
    %2535 = vmatprep.subr.mxu0 0.0
    %2536 = vmatpush1.msra.mxu0 0.0
    %2537 = vmatprep.subr.mxu0 0.0
    %2538 = vmatpush1.msra.mxu0 0.0
    %2539 = vmatprep.subr.mxu0 0.0
    %2540 = vmatpush1.msra.mxu0 0.0
    %2541 = vmatprep.subr.mxu0 0.0
    %2542 = vmatpush1.msra.mxu0 0.0
    %2543 = vmatprep.subr.mxu0 0.0
    %2544 = vmatpush1.msra.mxu0 0.0
    %2545 = vmatprep.subr.mxu0 0.0
    %2546 = vmatpush1.msra.mxu0 0.0
    %2547 = vmatprep.subr.mxu0 0.0
    %2548 = vmatpush1.msra.mxu0 0.0
    %2549 = vmatprep.subr.mxu0 0.0
    %2550 = vmatpush1.msra.mxu0 0.0
    %2551 = vmatprep.subr.mxu0 0.0
    %2552 = vmatpush1.msra.mxu0 0.0
    %2553 = vmatprep.subr.mxu0 0.0
    %2554 = vmatpush1.msra.mxu0 0.0
    %2555 = vmatprep.subr.mxu0 0.0
    %2556 = vmatpush1.msra.mxu0 0.0
    %2557 = vmatprep.subr.mxu0 0.0
    %2558 = vmatpush1.msra.mxu0 0.0
    %2559 = vmatprep.subr.mxu0 0.0
    %2560 = vmatpush1.msra.mxu0 0.0
    %2561 = vmatprep.subr.mxu0 0.0
    %2562 = vmatpush1.msra.mxu0 0.0
    %2563 = vmatprep.subr.mxu0 0.0
    %2564 = vmatpush1.msra.mxu0 0.0
    %2565 = vmatprep.subr.mxu0 0.0
    %2566 = vmatpush1.msra.mxu0 0.0
    %2567 = vmatprep.subr.mxu0 0.0
    %2568 = vmatpush1.msra.mxu0 0.0
    %2569 = vmatprep.subr.mxu0 0.0
    %2570 = vmatpush1.msra.mxu0 0.0
    %2571 = vmatprep.subr.mxu0 0.0
    %2572 = vmatpush1.msra.mxu0 0.0
    %2573 = vmatprep.subr.mxu0 0.0
    %2574 = vmatpush1.msra.mxu0 0.0
    %2575 = vmatprep.subr.mxu0 0.0
    %2576 = vmatpush1.msra.mxu0 0.0
    %2577 = vmatprep.subr.mxu0 0.0
    %2578 = vmatpush1.msra.mxu0 0.0
    %2579 = vmatprep.subr.mxu0 0.0
    %2580 = vmatpush1.msra.mxu0 0.0
    %2581 = vmatprep.subr.mxu0 0.0
    %2582 = vmatpush1.msra.mxu0 0.0
    %2583 = vmatprep.subr.mxu0 0.0
    %2584 = vmatpush1.msra.mxu0 0.0
    %2585 = vmatprep.subr.mxu0 0.0
    %2586 = vmatpush1.msra.mxu0 0.0
    %2587 = vmatprep.subr.mxu0 0.0
    %2588 = vmatpush1.msra.mxu0 0.0
    %2589 = vmatprep.subr.mxu0 0.0
    %2590 = vmatpush1.msra.mxu0 0.0
    %2591 = vmatprep.mubr.f32.mxu0 0.0
    %2592 = vmatmul.mubr.f32.gmra.mrb[0].mxu0 %v2525
    %v2593 = vpop.f32.mrb[0].mxu0
    %v2594 = vadd.f32 0.0, %v2593
    %v2595 = vpop.f32.mrb[0].mxu0
    %2596 = vdwg.mxu0
    %v2597 = vld [vmem:[#allocation2 + $0x68] sm:$0x3]
    %v2599 = vsel %vm37, %v2597, 0
    %2601 = vmatprep.subr.mxu0 0.0
    %2602 = vmatpush1.msra.mxu0 %v2170
    %2603 = vmatprep.subr.mxu0 0.0
    %2604 = vmatpush1.msra.mxu0 0.0
    %2605 = vmatprep.subr.mxu0 0.0
    %2606 = vmatpush1.msra.mxu0 0.0
    %2607 = vmatprep.subr.mxu0 0.0
    %2608 = vmatpush1.msra.mxu0 0.0
    %2609 = vmatprep.subr.mxu0 0.0
    %2610 = vmatpush1.msra.mxu0 0.0
    %2611 = vmatprep.subr.mxu0 0.0
    %2612 = vmatpush1.msra.mxu0 0.0
    %2613 = vmatprep.subr.mxu0 0.0
    %2614 = vmatpush1.msra.mxu0 0.0
    %2615 = vmatprep.subr.mxu0 0.0
    %2616 = vmatpush1.msra.mxu0 0.0
    %2617 = vmatprep.subr.mxu0 0.0
    %2618 = vmatpush1.msra.mxu0 0.0
    %2619 = vmatprep.subr.mxu0 0.0
    %2620 = vmatpush1.msra.mxu0 0.0
    %2621 = vmatprep.subr.mxu0 0.0
    %2622 = vmatpush1.msra.mxu0 0.0
    %2623 = vmatprep.subr.mxu0 0.0
    %2624 = vmatpush1.msra.mxu0 0.0
    %2625 = vmatprep.subr.mxu0 0.0
    %2626 = vmatpush1.msra.mxu0 0.0
    %2627 = vmatprep.subr.mxu0 0.0
    %2628 = vmatpush1.msra.mxu0 0.0
    %2629 = vmatprep.subr.mxu0 0.0
    %2630 = vmatpush1.msra.mxu0 0.0
    %2631 = vmatprep.subr.mxu0 0.0
    %2632 = vmatpush1.msra.mxu0 0.0
    %2633 = vmatprep.subr.mxu0 0.0
    %2634 = vmatpush1.msra.mxu0 0.0
    %2635 = vmatprep.subr.mxu0 0.0
    %2636 = vmatpush1.msra.mxu0 0.0
    %2637 = vmatprep.subr.mxu0 0.0
    %2638 = vmatpush1.msra.mxu0 0.0
    %2639 = vmatprep.subr.mxu0 0.0
    %2640 = vmatpush1.msra.mxu0 0.0
    %2641 = vmatprep.subr.mxu0 0.0
    %2642 = vmatpush1.msra.mxu0 0.0
    %2643 = vmatprep.subr.mxu0 0.0
    %2644 = vmatpush1.msra.mxu0 0.0
    %2645 = vmatprep.subr.mxu0 0.0
    %2646 = vmatpush1.msra.mxu0 0.0
    %2647 = vmatprep.subr.mxu0 0.0
    %2648 = vmatpush1.msra.mxu0 0.0
    %2649 = vmatprep.subr.mxu0 0.0
    %2650 = vmatpush1.msra.mxu0 0.0
    %2651 = vmatprep.subr.mxu0 0.0
    %2652 = vmatpush1.msra.mxu0 0.0
    %2653 = vmatprep.subr.mxu0 0.0
    %2654 = vmatpush1.msra.mxu0 0.0
    %2655 = vmatprep.subr.mxu0 0.0
    %2656 = vmatpush1.msra.mxu0 0.0
    %2657 = vmatprep.subr.mxu0 0.0
    %2658 = vmatpush1.msra.mxu0 0.0
    %2659 = vmatprep.subr.mxu0 0.0
    %2660 = vmatpush1.msra.mxu0 0.0
    %2661 = vmatprep.subr.mxu0 0.0
    %2662 = vmatpush1.msra.mxu0 0.0
    %2663 = vmatprep.subr.mxu0 0.0
    %2664 = vmatpush1.msra.mxu0 0.0
    %2665 = vmatprep.mubr.f32.mxu0 0.0
    %2666 = vmatmul.mubr.f32.gmra.mrb[0].mxu0 %v2599
    %v2667 = vpop.f32.mrb[0].mxu0
    %v2668 = vadd.f32 0.0, %v2667
    %v2669 = vpop.f32.mrb[0].mxu0
    %2670 = vdwg.mxu0
    %v2671 = vld [vmem:[#allocation2 + $0x2a8] sm:$0xff]
    %v2672 = vld [vmem:[#allocation2 + $0x2b0] sm:$0xff]
    %v2673 = vld [vmem:[#allocation2 + $0x2b8] sm:$0xff]
    %v2674 = vld [vmem:[#allocation2 + $0x2c0] sm:$0xff]
    %v2675 = vld [vmem:[%s1 + $0x30] sm:$0x3]
    %v2676 = vld [vmem:[#allocation2 + $0x2c8] sm:$0x1]
    %2678 = vset.pattern.permute.xlu0 0
    %2679 = vperm.xlu0 %2678, %v2675
    %v2680 = vpop.permute.xlu0 %2679
    %v2682 = vlaneseq
    %v2683 = vshrl.u32 %v2682, 7
    %v2684 = vsub.s32 0, %v2683
    %v2685 = vrot.slane %v2676, %v2684
    %v2686 = vmul.f32 %v2680, %v2685
    %v2688 = vsel %vm388, %v2594, 0
    %2690 = vmatprep.subr.mxu0 0.0
    %2691 = vmatpush1.msra.mxu0 %v2671
    %2692 = vmatprep.subr.mxu0 0.0
    %2693 = vmatpush1.msra.mxu0 %v2672
    %2694 = vmatprep.subr.mxu0 0.0
    %2695 = vmatpush1.msra.mxu0 %v2673
    %2696 = vmatprep.subr.mxu0 0.0
    %2697 = vmatpush1.msra.mxu0 %v2674
    %2698 = vmatprep.subr.mxu0 0.0
    %2699 = vmatpush1.msra.mxu0 0.0
    %2700 = vmatprep.subr.mxu0 0.0
    %2701 = vmatpush1.msra.mxu0 0.0
    %2702 = vmatprep.subr.mxu0 0.0
    %2703 = vmatpush1.msra.mxu0 0.0
    %2704 = vmatprep.subr.mxu0 0.0
    %2705 = vmatpush1.msra.mxu0 0.0
    %2706 = vmatprep.subr.mxu0 0.0
    %2707 = vmatpush1.msra.mxu0 0.0
    %2708 = vmatprep.subr.mxu0 0.0
    %2709 = vmatpush1.msra.mxu0 0.0
    %2710 = vmatprep.subr.mxu0 0.0
    %2711 = vmatpush1.msra.mxu0 0.0
    %2712 = vmatprep.subr.mxu0 0.0
    %2713 = vmatpush1.msra.mxu0 0.0
    %2714 = vmatprep.subr.mxu0 0.0
    %2715 = vmatpush1.msra.mxu0 0.0
    %2716 = vmatprep.subr.mxu0 0.0
    %2717 = vmatpush1.msra.mxu0 0.0
    %2718 = vmatprep.subr.mxu0 0.0
    %2719 = vmatpush1.msra.mxu0 0.0
    %2720 = vmatprep.subr.mxu0 0.0
    %2721 = vmatpush1.msra.mxu0 0.0
    %2722 = vmatprep.subr.mxu0 0.0
    %2723 = vmatpush1.msra.mxu0 0.0
    %2724 = vmatprep.subr.mxu0 0.0
    %2725 = vmatpush1.msra.mxu0 0.0
    %2726 = vmatprep.subr.mxu0 0.0
    %2727 = vmatpush1.msra.mxu0 0.0
    %2728 = vmatprep.subr.mxu0 0.0
    %2729 = vmatpush1.msra.mxu0 0.0
    %2730 = vmatprep.subr.mxu0 0.0
    %2731 = vmatpush1.msra.mxu0 0.0
    %2732 = vmatprep.subr.mxu0 0.0
    %2733 = vmatpush1.msra.mxu0 0.0
    %2734 = vmatprep.subr.mxu0 0.0
    %2735 = vmatpush1.msra.mxu0 0.0
    %2736 = vmatprep.subr.mxu0 0.0
    %2737 = vmatpush1.msra.mxu0 0.0
    %2738 = vmatprep.subr.mxu0 0.0
    %2739 = vmatpush1.msra.mxu0 0.0
    %2740 = vmatprep.subr.mxu0 0.0
    %2741 = vmatpush1.msra.mxu0 0.0
    %2742 = vmatprep.subr.mxu0 0.0
    %2743 = vmatpush1.msra.mxu0 0.0
    %2744 = vmatprep.subr.mxu0 0.0
    %2745 = vmatpush1.msra.mxu0 0.0
    %2746 = vmatprep.subr.mxu0 0.0
    %2747 = vmatpush1.msra.mxu0 0.0
    %2748 = vmatprep.subr.mxu0 0.0
    %2749 = vmatpush1.msra.mxu0 0.0
    %2750 = vmatprep.subr.mxu0 0.0
    %2751 = vmatpush1.msra.mxu0 0.0
    %2752 = vmatprep.subr.mxu0 0.0
    %2753 = vmatpush1.msra.mxu0 0.0
    %2754 = vmatprep.mubr.f32.mxu0 0.0
    %2755 = vmatmul.mubr.f32.gmra.mrb[0].mxu0 %v2688
    %v2756 = vpop.f32.mrb[0].mxu0
    %v2757 = vadd.f32 %v2686, %v2756
    %v2758 = vpop.f32.mrb[0].mxu0
    %2759 = vdwg.mxu0
    %v2760 = vld [vmem:[#allocation2 + $0x2d0] sm:$0xff]
    %v2761 = vld [vmem:[#allocation2 + $0x2d8] sm:$0xff]
    %v2762 = vld [vmem:[#allocation2 + $0x2e0] sm:$0xff]
    %v2763 = vld [vmem:[#allocation2 + $0x2e8] sm:$0xff]
    %v2765 = vsel %vm388, %v2668, 0
    %2767 = vmatprep.subr.mxu0 0.0
    %2768 = vmatpush1.msra.mxu0 %v2760
    %2769 = vmatprep.subr.mxu0 0.0
    %2770 = vmatpush1.msra.mxu0 %v2761
    %2771 = vmatprep.subr.mxu0 0.0
    %2772 = vmatpush1.msra.mxu0 %v2762
    %2773 = vmatprep.subr.mxu0 0.0
    %2774 = vmatpush1.msra.mxu0 %v2763
    %2775 = vmatprep.subr.mxu0 0.0
    %2776 = vmatpush1.msra.mxu0 0.0
    %2777 = vmatprep.subr.mxu0 0.0
    %2778 = vmatpush1.msra.mxu0 0.0
    %2779 = vmatprep.subr.mxu0 0.0
    %2780 = vmatpush1.msra.mxu0 0.0
    %2781 = vmatprep.subr.mxu0 0.0
    %2782 = vmatpush1.msra.mxu0 0.0
    %2783 = vmatprep.subr.mxu0 0.0
    %2784 = vmatpush1.msra.mxu0 0.0
    %2785 = vmatprep.subr.mxu0 0.0
    %2786 = vmatpush1.msra.mxu0 0.0
    %2787 = vmatprep.subr.mxu0 0.0
    %2788 = vmatpush1.msra.mxu0 0.0
    %2789 = vmatprep.subr.mxu0 0.0
    %2790 = vmatpush1.msra.mxu0 0.0
    %2791 = vmatprep.subr.mxu0 0.0
    %2792 = vmatpush1.msra.mxu0 0.0
    %2793 = vmatprep.subr.mxu0 0.0
    %2794 = vmatpush1.msra.mxu0 0.0
    %2795 = vmatprep.subr.mxu0 0.0
    %2796 = vmatpush1.msra.mxu0 0.0
    %2797 = vmatprep.subr.mxu0 0.0
    %2798 = vmatpush1.msra.mxu0 0.0
    %2799 = vmatprep.subr.mxu0 0.0
    %2800 = vmatpush1.msra.mxu0 0.0
    %2801 = vmatprep.subr.mxu0 0.0
    %2802 = vmatpush1.msra.mxu0 0.0
    %2803 = vmatprep.subr.mxu0 0.0
    %2804 = vmatpush1.msra.mxu0 0.0
    %2805 = vmatprep.subr.mxu0 0.0
    %2806 = vmatpush1.msra.mxu0 0.0
    %2807 = vmatprep.subr.mxu0 0.0
    %2808 = vmatpush1.msra.mxu0 0.0
    %2809 = vmatprep.subr.mxu0 0.0
    %2810 = vmatpush1.msra.mxu0 0.0
    %2811 = vmatprep.subr.mxu0 0.0
    %2812 = vmatpush1.msra.mxu0 0.0
    %2813 = vmatprep.subr.mxu0 0.0
    %2814 = vmatpush1.msra.mxu0 0.0
    %2815 = vmatprep.subr.mxu0 0.0
    %2816 = vmatpush1.msra.mxu0 0.0
    %2817 = vmatprep.subr.mxu0 0.0
    %2818 = vmatpush1.msra.mxu0 0.0
    %2819 = vmatprep.subr.mxu0 0.0
    %2820 = vmatpush1.msra.mxu0 0.0
    %2821 = vmatprep.subr.mxu0 0.0
    %2822 = vmatpush1.msra.mxu0 0.0
    %2823 = vmatprep.subr.mxu0 0.0
    %2824 = vmatpush1.msra.mxu0 0.0
    %2825 = vmatprep.subr.mxu0 0.0
    %2826 = vmatpush1.msra.mxu0 0.0
    %2827 = vmatprep.subr.mxu0 0.0
    %2828 = vmatpush1.msra.mxu0 0.0
    %2829 = vmatprep.subr.mxu0 0.0
    %2830 = vmatpush1.msra.mxu0 0.0
    %2831 = vmatprep.mubr.f32.mxu0 0.0
    %2832 = vmatmul.mubr.f32.gmra.mrb[0].mxu0 %v2765
    %v2833 = vpop.f32.mrb[0].mxu0
    %v2834 = vadd.f32 0.0, %v2833
    %v2835 = vpop.f32.mrb[0].mxu0
    %2836 = vdwg.mxu0
    %v2837 = vadd.f32 %v2757, %v2834
    %v2838 = vld [vmem:[#allocation2 + $0x2f0] sm:$0x1]
    %v2839 = vlaneseq
    %v2840 = vshrl.u32 %v2839, 7
    %v2841 = vsub.s32 0, %v2840
    %v2842 = vrot.slane %v2838, %v2841
    %v2843 = vadd.f32 %v2837, %v2842
    %v2844 = vld [vmem:[#allocation2 + $0x70] sm:$0x3]
    %v2846 = vsel %vm561, %v2844, 0
    %2848 = vmatprep.subr.mxu0 0.0
    %2849 = vmatpush1.msra.mxu0 %v2171
    %2850 = vmatprep.subr.mxu0 0.0
    %2851 = vmatpush1.msra.mxu0 %v2172
    %2852 = vmatprep.subr.mxu0 0.0
    %2853 = vmatpush1.msra.mxu0 0.0
    %2854 = vmatprep.subr.mxu0 0.0
    %2855 = vmatpush1.msra.mxu0 0.0
    %2856 = vmatprep.subr.mxu0 0.0
    %2857 = vmatpush1.msra.mxu0 0.0
    %2858 = vmatprep.subr.mxu0 0.0
    %2859 = vmatpush1.msra.mxu0 0.0
    %2860 = vmatprep.subr.mxu0 0.0
    %2861 = vmatpush1.msra.mxu0 0.0
    %2862 = vmatprep.subr.mxu0 0.0
    %2863 = vmatpush1.msra.mxu0 0.0
    %2864 = vmatprep.subr.mxu0 0.0
    %2865 = vmatpush1.msra.mxu0 0.0
    %2866 = vmatprep.subr.mxu0 0.0
    %2867 = vmatpush1.msra.mxu0 0.0
    %2868 = vmatprep.subr.mxu0 0.0
    %2869 = vmatpush1.msra.mxu0 0.0
    %2870 = vmatprep.subr.mxu0 0.0
    %2871 = vmatpush1.msra.mxu0 0.0
    %2872 = vmatprep.subr.mxu0 0.0
    %2873 = vmatpush1.msra.mxu0 0.0
    %2874 = vmatprep.subr.mxu0 0.0
    %2875 = vmatpush1.msra.mxu0 0.0
    %2876 = vmatprep.subr.mxu0 0.0
    %2877 = vmatpush1.msra.mxu0 0.0
    %2878 = vmatprep.subr.mxu0 0.0
    %2879 = vmatpush1.msra.mxu0 0.0
    %2880 = vmatprep.subr.mxu0 0.0
    %2881 = vmatpush1.msra.mxu0 0.0
    %2882 = vmatprep.subr.mxu0 0.0
    %2883 = vmatpush1.msra.mxu0 0.0
    %2884 = vmatprep.subr.mxu0 0.0
    %2885 = vmatpush1.msra.mxu0 0.0
    %2886 = vmatprep.subr.mxu0 0.0
    %2887 = vmatpush1.msra.mxu0 0.0
    %2888 = vmatprep.subr.mxu0 0.0
    %2889 = vmatpush1.msra.mxu0 0.0
    %2890 = vmatprep.subr.mxu0 0.0
    %2891 = vmatpush1.msra.mxu0 0.0
    %2892 = vmatprep.subr.mxu0 0.0
    %2893 = vmatpush1.msra.mxu0 0.0
    %2894 = vmatprep.subr.mxu0 0.0
    %2895 = vmatpush1.msra.mxu0 0.0
    %2896 = vmatprep.subr.mxu0 0.0
    %2897 = vmatpush1.msra.mxu0 0.0
    %2898 = vmatprep.subr.mxu0 0.0
    %2899 = vmatpush1.msra.mxu0 0.0
    %2900 = vmatprep.subr.mxu0 0.0
    %2901 = vmatpush1.msra.mxu0 0.0
    %2902 = vmatprep.subr.mxu0 0.0
    %2903 = vmatpush1.msra.mxu0 0.0
    %2904 = vmatprep.subr.mxu0 0.0
    %2905 = vmatpush1.msra.mxu0 0.0
    %2906 = vmatprep.subr.mxu0 0.0
    %2907 = vmatpush1.msra.mxu0 0.0
    %2908 = vmatprep.subr.mxu0 0.0
    %2909 = vmatpush1.msra.mxu0 0.0
    %2910 = vmatprep.subr.mxu0 0.0
    %2911 = vmatpush1.msra.mxu0 0.0
    %2912 = vmatprep.mubr.f32.mxu0 0.0
    %2913 = vmatmul.mubr.f32.gmra.mrb[0].mxu0 %v2846
    %v2914 = vpop.f32.mrb[0].mxu0
    %v2915 = vadd.f32 0.0, %v2914
    %v2916 = vpop.f32.mrb[0].mxu0
    %2917 = vdwg.mxu0
    %v2918 = vld [vmem:[#allocation2 + $0x2f8] sm:$0xff]
    %v2919 = vld [vmem:[#allocation2 + $0x300] sm:$0xff]
    %v2920 = vld [vmem:[#allocation2 + $0x308] sm:$0xff]
    %v2921 = vld [vmem:[#allocation2 + $0x310] sm:$0xff]
    %v2922 = vld [vmem:[#allocation2 + $0x318] sm:$0xff]
    %v2923 = vld [vmem:[#allocation2 + $0x320] sm:$0xff]
    %v2924 = vld [vmem:[#allocation2 + $0x328] sm:$0xff]
    %v2925 = vld [vmem:[#allocation2 + $0x330] sm:$0xff]
    %v2927 = vsel %vm388, %v2843, 0
    %2929 = vmatprep.subr.mxu0 0.0
    %2930 = vmatpush1.msra.mxu0 %v2922
    %2931 = vmatprep.subr.mxu0 0.0
    %2932 = vmatpush1.msra.mxu0 %v2923
    %2933 = vmatprep.subr.mxu0 0.0
    %2934 = vmatpush1.msra.mxu0 %v2924
    %2935 = vmatprep.subr.mxu0 0.0
    %2936 = vmatpush1.msra.mxu0 %v2925
    %2937 = vmatprep.subr.mxu0 0.0
    %2938 = vmatpush1.msra.mxu0 0.0
    %2939 = vmatprep.subr.mxu0 0.0
    %2940 = vmatpush1.msra.mxu0 0.0
    %2941 = vmatprep.subr.mxu0 0.0
    %2942 = vmatpush1.msra.mxu0 0.0
    %2943 = vmatprep.subr.mxu0 0.0
    %2944 = vmatpush1.msra.mxu0 0.0
    %2945 = vmatprep.subr.mxu0 0.0
    %2946 = vmatpush1.msra.mxu0 0.0
    %2947 = vmatprep.subr.mxu0 0.0
    %2948 = vmatpush1.msra.mxu0 0.0
    %2949 = vmatprep.subr.mxu0 0.0
    %2950 = vmatpush1.msra.mxu0 0.0
    %2951 = vmatprep.subr.mxu0 0.0
    %2952 = vmatpush1.msra.mxu0 0.0
    %2953 = vmatprep.subr.mxu0 0.0
    %2954 = vmatpush1.msra.mxu0 0.0
    %2955 = vmatprep.subr.mxu0 0.0
    %2956 = vmatpush1.msra.mxu0 0.0
    %2957 = vmatprep.subr.mxu0 0.0
    %2958 = vmatpush1.msra.mxu0 0.0
    %2959 = vmatprep.subr.mxu0 0.0
    %2960 = vmatpush1.msra.mxu0 0.0
    %2961 = vmatprep.subr.mxu0 0.0
    %2962 = vmatpush1.msra.mxu0 0.0
    %2963 = vmatprep.subr.mxu0 0.0
    %2964 = vmatpush1.msra.mxu0 0.0
    %2965 = vmatprep.subr.mxu0 0.0
    %2966 = vmatpush1.msra.mxu0 0.0
    %2967 = vmatprep.subr.mxu0 0.0
    %2968 = vmatpush1.msra.mxu0 0.0
    %2969 = vmatprep.subr.mxu0 0.0
    %2970 = vmatpush1.msra.mxu0 0.0
    %2971 = vmatprep.subr.mxu0 0.0
    %2972 = vmatpush1.msra.mxu0 0.0
    %2973 = vmatprep.subr.mxu0 0.0
    %2974 = vmatpush1.msra.mxu0 0.0
    %2975 = vmatprep.subr.mxu0 0.0
    %2976 = vmatpush1.msra.mxu0 0.0
    %2977 = vmatprep.subr.mxu0 0.0
    %2978 = vmatpush1.msra.mxu0 0.0
    %2979 = vmatprep.subr.mxu0 0.0
    %2980 = vmatpush1.msra.mxu0 0.0
    %2981 = vmatprep.subr.mxu0 0.0
    %2982 = vmatpush1.msra.mxu0 0.0
    %2983 = vmatprep.subr.mxu0 0.0
    %2984 = vmatpush1.msra.mxu0 0.0
    %2985 = vmatprep.subr.mxu0 0.0
    %2986 = vmatpush1.msra.mxu0 0.0
    %2987 = vmatprep.subr.mxu0 0.0
    %2988 = vmatpush1.msra.mxu0 0.0
    %2989 = vmatprep.subr.mxu0 0.0
    %2990 = vmatpush1.msra.mxu0 0.0
    %2991 = vmatprep.subr.mxu0 0.0
    %2992 = vmatpush1.msra.mxu0 0.0
    %2993 = vmatprep.mubr.f32.mxu0 0.0
    %2994 = vmatmul.mubr.f32.gmra.mrb[0].mxu0 %v2927
    %v2995 = vpop.f32.mrb[0].mxu0
    %v2996 = vadd.f32 0.0, %v2995
    %v2997 = vpop.f32.mrb[0].mxu0
    %2998 = vdwg.mxu0
    %v3000 = vsel %vm388, %v2915, 0
    %3002 = vmatprep.subr.mxu0 0.0
    %3003 = vmatpush1.msra.mxu0 %v2918
    %3004 = vmatprep.subr.mxu0 0.0
    %3005 = vmatpush1.msra.mxu0 %v2919
    %3006 = vmatprep.subr.mxu0 0.0
    %3007 = vmatpush1.msra.mxu0 %v2920
    %3008 = vmatprep.subr.mxu0 0.0
    %3009 = vmatpush1.msra.mxu0 %v2921
    %3010 = vmatprep.subr.mxu0 0.0
    %3011 = vmatpush1.msra.mxu0 0.0
    %3012 = vmatprep.subr.mxu0 0.0
    %3013 = vmatpush1.msra.mxu0 0.0
    %3014 = vmatprep.subr.mxu0 0.0
    %3015 = vmatpush1.msra.mxu0 0.0
    %3016 = vmatprep.subr.mxu0 0.0
    %3017 = vmatpush1.msra.mxu0 0.0
    %3018 = vmatprep.subr.mxu0 0.0
    %3019 = vmatpush1.msra.mxu0 0.0
    %3020 = vmatprep.subr.mxu0 0.0
    %3021 = vmatpush1.msra.mxu0 0.0
    %3022 = vmatprep.subr.mxu0 0.0
    %3023 = vmatpush1.msra.mxu0 0.0
    %3024 = vmatprep.subr.mxu0 0.0
    %3025 = vmatpush1.msra.mxu0 0.0
    %3026 = vmatprep.subr.mxu0 0.0
    %3027 = vmatpush1.msra.mxu0 0.0
    %3028 = vmatprep.subr.mxu0 0.0
    %3029 = vmatpush1.msra.mxu0 0.0
    %3030 = vmatprep.subr.mxu0 0.0
    %3031 = vmatpush1.msra.mxu0 0.0
    %3032 = vmatprep.subr.mxu0 0.0
    %3033 = vmatpush1.msra.mxu0 0.0
    %3034 = vmatprep.subr.mxu0 0.0
    %3035 = vmatpush1.msra.mxu0 0.0
    %3036 = vmatprep.subr.mxu0 0.0
    %3037 = vmatpush1.msra.mxu0 0.0
    %3038 = vmatprep.subr.mxu0 0.0
    %3039 = vmatpush1.msra.mxu0 0.0
    %3040 = vmatprep.subr.mxu0 0.0
    %3041 = vmatpush1.msra.mxu0 0.0
    %3042 = vmatprep.subr.mxu0 0.0
    %3043 = vmatpush1.msra.mxu0 0.0
    %3044 = vmatprep.subr.mxu0 0.0
    %3045 = vmatpush1.msra.mxu0 0.0
    %3046 = vmatprep.subr.mxu0 0.0
    %3047 = vmatpush1.msra.mxu0 0.0
    %3048 = vmatprep.subr.mxu0 0.0
    %3049 = vmatpush1.msra.mxu0 0.0
    %3050 = vmatprep.subr.mxu0 0.0
    %3051 = vmatpush1.msra.mxu0 0.0
    %3052 = vmatprep.subr.mxu0 0.0
    %3053 = vmatpush1.msra.mxu0 0.0
    %3054 = vmatprep.subr.mxu0 0.0
    %3055 = vmatpush1.msra.mxu0 0.0
    %3056 = vmatprep.subr.mxu0 0.0
    %3057 = vmatpush1.msra.mxu0 0.0
    %3058 = vmatprep.subr.mxu0 0.0
    %3059 = vmatpush1.msra.mxu0 0.0
    %3060 = vmatprep.subr.mxu0 0.0
    %3061 = vmatpush1.msra.mxu0 0.0
    %3062 = vmatprep.subr.mxu0 0.0
    %3063 = vmatpush1.msra.mxu0 0.0
    %3064 = vmatprep.subr.mxu0 0.0
    %3065 = vmatpush1.msra.mxu0 0.0
    %3066 = vmatprep.mubr.f32.mxu0 0.0
    %3067 = vmatmul.mubr.f32.gmra.mrb[0].mxu0 %v3000
    %v3068 = vpop.f32.mrb[0].mxu0
    %v3069 = vadd.f32 %v2996, %v3068
    %v3070 = vpop.f32.mrb[0].mxu0
    %3071 = vdwg.mxu0
    %v3072 = vld [vmem:[#allocation2 + $0x338] sm:$0x1]
    %v3073 = vlaneseq
    %v3074 = vshrl.u32 %v3073, 7
    %v3075 = vsub.s32 0, %v3074
    %v3076 = vrot.slane %v3072, %v3075
    %v3077 = vadd.f32 %v3069, %v3076
    %v3078 = vld [vmem:[#allocation2 + $0x78] sm:$0x3]
    %3080 = vset.pattern.permute.xlu0 0
    %3081 = vperm.xlu0 %3080, %v3078
    %v3082 = vpop.permute.xlu0 %3081
    %v3084 = vlaneseq
    %v3085 = vshrl.u32 %v3084, 7
    %v3086 = vsub.s32 0, %v3085
    %v3087 = vrot.slane %v3077, %v3086
    %v3088 = vmul.f32 %v3082, %v3087
    %3089 = vset.pattern.permute.xlu0 1
    %3090 = vperm.xlu0 %3089, %v3078
    %v3091 = vpop.permute.xlu0 %3090
    %v3093 = vlaneseq
    %v3094 = vshrl.u32 %v3093, 7
    %v3095 = vsub.s32 1, %v3094
    %v3096 = vrot.slane %v3077, %v3095
    %v3097 = vmul.f32 %v3091, %v3096
    %v3098 = vadd.f32 %v3088, %v3097
    %v3099 = vadd.f32 %v2522, %v3098
    %v3100 = vld [vmem:[#allocation2 + $0x340] sm:$0x1]
    %v3101 = vlaneseq
    %v3102 = vshrl.u32 %v3101, 7
    %v3103 = vsub.s32 0, %v3102
    %v3104 = vrot.slane %v3100, %v3103
    %v3105 = vmul.f32 %v3099, %v3104
    %vm3106 = vcmask 254976
    %v3107 = vsel %vm3106, %v3105, 0.0
    %3108 = vadd.xlane.f32.xlu0 %v3107
    %v3109 = vpop.xlane.xlu0 %3108
    %v3110 = vld [vmem:[#allocation2 + $0x348] sm:$0x1]
    %v3111 = vlaneseq
    %v3112 = vshrl.u32 %v3111, 7
    %v3113 = vsub.s32 0, %v3112
    %v3114 = vrot.slane %v3110, %v3113
    %v3115 = vadd.f32 %v3109, %v3114
    %v3116 = vtanh.pop %v3115
    %v3117 = vmul.f32 %v3116, 10.0
    %v3118 = vld [vmem:[#allocation2 + $0x350] sm:$0xff]
    %v3119 = vld [vmem:[#allocation2 + $0x358] sm:$0xff]
    %v3120 = vld [vmem:[#allocation2 + $0x360] sm:$0xff]
    %v3121 = vld [vmem:[#allocation2 + $0x368] sm:$0xff]
    %v3122 = vld [vmem:[#allocation2 + $0x370] sm:$0x1]
    %v3123 = vlaneseq
    %v3124 = vshrl.u32 %v3123, 7
    %v3125 = vsub.s32 0, %v3124
    %v3126 = vrot.slane %v3122, %v3125
    %v3128 = vsel %vm388, %v2173, 0
    %3130 = vmatprep.subr.mxu0 0.0
    %3131 = vmatpush1.msra.mxu0 %v3118
    %3132 = vmatprep.subr.mxu0 0.0
    %3133 = vmatpush1.msra.mxu0 %v3119
    %3134 = vmatprep.subr.mxu0 0.0
    %3135 = vmatpush1.msra.mxu0 %v3120
    %3136 = vmatprep.subr.mxu0 0.0
    %3137 = vmatpush1.msra.mxu0 %v3121
    %3138 = vmatprep.subr.mxu0 0.0
    %3139 = vmatpush1.msra.mxu0 0.0
    %3140 = vmatprep.subr.mxu0 0.0
    %3141 = vmatpush1.msra.mxu0 0.0
    %3142 = vmatprep.subr.mxu0 0.0
    %3143 = vmatpush1.msra.mxu0 0.0
    %3144 = vmatprep.subr.mxu0 0.0
    %3145 = vmatpush1.msra.mxu0 0.0
    %3146 = vmatprep.subr.mxu0 0.0
    %3147 = vmatpush1.msra.mxu0 0.0
    %3148 = vmatprep.subr.mxu0 0.0
    %3149 = vmatpush1.msra.mxu0 0.0
    %3150 = vmatprep.subr.mxu0 0.0
    %3151 = vmatpush1.msra.mxu0 0.0
    %3152 = vmatprep.subr.mxu0 0.0
    %3153 = vmatpush1.msra.mxu0 0.0
    %3154 = vmatprep.subr.mxu0 0.0
    %3155 = vmatpush1.msra.mxu0 0.0
    %3156 = vmatprep.subr.mxu0 0.0
    %3157 = vmatpush1.msra.mxu0 0.0
    %3158 = vmatprep.subr.mxu0 0.0
    %3159 = vmatpush1.msra.mxu0 0.0
    %3160 = vmatprep.subr.mxu0 0.0
    %3161 = vmatpush1.msra.mxu0 0.0
    %3162 = vmatprep.subr.mxu0 0.0
    %3163 = vmatpush1.msra.mxu0 0.0
    %3164 = vmatprep.subr.mxu0 0.0
    %3165 = vmatpush1.msra.mxu0 0.0
    %3166 = vmatprep.subr.mxu0 0.0
    %3167 = vmatpush1.msra.mxu0 0.0
    %3168 = vmatprep.subr.mxu0 0.0
    %3169 = vmatpush1.msra.mxu0 0.0
    %3170 = vmatprep.subr.mxu0 0.0
    %3171 = vmatpush1.msra.mxu0 0.0
    %3172 = vmatprep.subr.mxu0 0.0
    %3173 = vmatpush1.msra.mxu0 0.0
    %3174 = vmatprep.subr.mxu0 0.0
    %3175 = vmatpush1.msra.mxu0 0.0
    %3176 = vmatprep.subr.mxu0 0.0
    %3177 = vmatpush1.msra.mxu0 0.0
    %3178 = vmatprep.subr.mxu0 0.0
    %3179 = vmatpush1.msra.mxu0 0.0
    %3180 = vmatprep.subr.mxu0 0.0
    %3181 = vmatpush1.msra.mxu0 0.0
    %3182 = vmatprep.subr.mxu0 0.0
    %3183 = vmatpush1.msra.mxu0 0.0
    %3184 = vmatprep.subr.mxu0 0.0
    %3185 = vmatpush1.msra.mxu0 0.0
    %3186 = vmatprep.subr.mxu0 0.0
    %3187 = vmatpush1.msra.mxu0 0.0
    %3188 = vmatprep.subr.mxu0 0.0
    %3189 = vmatpush1.msra.mxu0 0.0
    %3190 = vmatprep.subr.mxu0 0.0
    %3191 = vmatpush1.msra.mxu0 0.0
    %3192 = vmatprep.subr.mxu0 0.0
    %3193 = vmatpush1.msra.mxu0 0.0
    %3194 = vmatprep.mubr.f32.mxu0 0.0
    %3195 = vmatmul.mubr.f32.gmra.mrb[0].mxu0 %v3128
    %v3196 = vpop.f32.mrb[0].mxu0
    %v3197 = vadd.f32 %v3126, %v3196
    %v3198 = vpop.f32.mrb[0].mxu0
    %3199 = vdwg.mxu0
    %v3200 = vmax.f32 %v3197, 0.0
    %v3201 = vld [vmem:[#allocation2 + $0x378] sm:$0x1]
    %v3202 = vlaneseq
    %v3203 = vshrl.u32 %v3202, 7
    %v3204 = vsub.s32 0, %v3203
    %v3205 = vrot.slane %v3201, %v3204
    %v3206 = vmul.f32 %v3200, %v3205
    %v3207 = vsel %vm3106, %v3206, 0.0
    %3208 = vadd.xlane.f32.xlu0 %v3207
    %v3209 = vpop.xlane.xlu0 %3208
    %v3210 = vld [vmem:[#allocation2 + $0x380] sm:$0x1]
    %v3211 = vlaneseq
    %v3212 = vshrl.u32 %v3211, 7
    %v3213 = vsub.s32 0, %v3212
    %v3214 = vrot.slane %v3210, %v3213
    %v3215 = vadd.f32 %v3209, %v3214
    %v3216 = vxor.u32 %v3215, 2147483648
    %v3217 = vmul.f32 %v3216, 1.442695
    %v3218 = vpow.pop %v3217
    %v3219 = vadd.f32 %v3218, 1.0
    %v3220 = vrcp.pop %v3219
    %v3221 = vmul.f32 1.0, %v3220
    %3222 = vst [vmem:[%s2] sm:$0xff] 0.0
    %vm3223 = vcmask 1024
    %3224 = vst.msk [vmem:[%s2] sm:$0x3] %vm3223, %v3117
    %3226 = vrot.lane.b32.xlu0 %v3221, 1
    %v3227 = vpop.permute.xlu0 %3226
    %vm3229 = vcmask 9224
    %3230 = vst.msk [vmem:[%s2] sm:$0x3] %vm3229, %v3227
    // Predicated region
    $region14: #{fwd.1} parent=1 // pred_check
      _
    $region15: #{fwd.1} parent=1 // pred_check_branch
      %3232 = sbr.rel (0) target = $region17
    $region16: #{fwd.1} parent=1 // pred_region
      _
    $region17: #{fwd.1} parent=1 // pred_fallthru
      _
    // Predicated region
    $region18: #{fwd.1} parent=1 // pred_check
      _
    $region19: #{fwd.1} parent=1 // pred_check_branch
      %3234 = sbr.rel (0) target = $region21
    $region20: #{fwd.1} parent=1 // pred_region
      _
    $region21: #{fwd.1} parent=1 // pred_fallthru
      _
    %3235 = vsyncpa [#allocation3], 1

</llo_original>
